<compile_context>
chip_gen: v7x
topology: tpu7x:2x2x1
jax: 0.10.0
libtpu: 0.0.40
codegen_flags: <defaults>
</compile_context>

<pallas_src>
import jax
import jax.numpy as jnp
from jax import lax
from jax.experimental import pallas as pl
from jax.experimental.pallas import tpu as pltpu

EPS = 1e-5  # nn.InstanceNorm2d default eps


# ---------------- in-kernel helpers (traced inside the Pallas body) ----------

def _im2col_3x3(xp, H, W, C):
    # xp: (H+2, W+2, C) -> (H*W, 9*C), tap-major / cin-minor column order,
    # matching w.reshape(9*C, C) of HWIO weights.
    cols = [xp[dh:dh + H, dw:dw + W, :].reshape(H * W, C)
            for dh in range(3) for dw in range(3)]
    return jnp.concatenate(cols, axis=1)


def _instance_norm(y, inv_hw):
    # y: (HW, C); single-pass per-channel biased statistics.
    s = jnp.sum(y, axis=0, keepdims=True)
    ss = jnp.sum(y * y, axis=0, keepdims=True)
    mean = s * inv_hw
    var = jnp.maximum(ss * inv_hw - mean * mean, 0.0)
    return (y - mean) * lax.rsqrt(var + EPS)


# ---------------- Pallas kernel: one image per grid step ---------------------

def resnet_block_kernel(xp_ref, w1_ref, b1_ref, w2_ref, b2_ref, o_ref, hpad_ref):
    H, W, C = o_ref.shape[1], o_ref.shape[2], o_ref.shape[3]
    inv_hw = 1.0 / float(H * W)

    xp = xp_ref[0].astype(jnp.float32)                 # (H+2, W+2, C) padded input

    # --- conv1 (pad already applied) -> InstanceNorm -> ReLU ---------------
    h = jnp.dot(_im2col_3x3(xp, H, W, C), w1_ref[...],
                preferred_element_type=jnp.float32) + b1_ref[...]
    h = jnp.maximum(_instance_norm(h, inv_hw), 0.0)    # (H*W, C)
    # TODO(synk): Dropout branch omitted (use_dropout=False / eval-mode identity).

    # --- ReflectionPad2d(1) of h via VMEM scratch writes (no concatenates) --
    h_img = h.reshape(H, W, C)
    hpad_ref[1:H + 1, 1:W + 1, :] = h_img                       # interior
    hpad_ref[0:1, 1:W + 1, :] = h_img[1:2]                      # top row    <- row 1
    hpad_ref[H + 1:H + 2, 1:W + 1, :] = h_img[H - 2:H - 1]      # bottom row <- row H-2
    hpad_ref[:, 0:1, :] = hpad_ref[:, 2:3, :]                   # left col  (incl. corners)
    hpad_ref[:, W + 1:W + 2, :] = hpad_ref[:, W - 1:W, :]       # right col (incl. corners)

    # --- conv2 -> InstanceNorm ----------------------------------------------
    hp = hpad_ref[...]                                 # (H+2, W+2, C)
    y = jnp.dot(_im2col_3x3(hp, H, W, C), w2_ref[...],
                preferred_element_type=jnp.float32) + b2_ref[...]
    y = _instance_norm(y, inv_hw)                      # (H*W, C)

    # --- skip connection (interior of padded input == original x) -----------
    x_flat = xp[1:H + 1, 1:W + 1, :].reshape(H * W, C)
    o_ref[0] = (x_flat + y).reshape(H, W, C).astype(o_ref.dtype)


# ---------------- wrapper -----------------------------------------------------

def resnet_block(x_nchw, w1, b1, w2, b2):
    """x_nchw: (N, C, H, W) float32. Weights: (3,3,C,C) HWIO, biases: (C,)."""
    N, C, H, W = x_nchw.shape
    x = jnp.transpose(x_nchw, (0, 2, 3, 1))                        # NHWC
    xp = jnp.pad(x, ((0, 0), (1, 1), (1, 1), (0, 0)), mode="reflect")

    # Flatten HWIO weights to (9*C, C): row index = (kh, kw, cin) row-major,
    # matching the im2col column order built in the kernel.
    w1f = w1.reshape(9 * C, C)
    w2f = w2.reshape(9 * C, C)

    out = pl.pallas_call(
        resnet_block_kernel,
        out_shape=jax.ShapeDtypeStruct((N, H, W, C), x.dtype),
        grid_spec=pltpu.PrefetchScalarGridSpec(
            num_scalar_prefetch=0,
            grid=(N,),
            in_specs=[
                pl.BlockSpec((1, H + 2, W + 2, C), lambda b: (b, 0, 0, 0)),  # padded x
                pl.BlockSpec((9 * C, C), lambda b: (0, 0)),                  # w1 (im2col)
                pl.BlockSpec((1, C), lambda b: (0, 0)),                      # b1
                pl.BlockSpec((9 * C, C), lambda b: (0, 0)),                  # w2 (im2col)
                pl.BlockSpec((1, C), lambda b: (0, 0)),                      # b2
            ],
            out_specs=pl.BlockSpec((1, H, W, C), lambda b: (b, 0, 0, 0)),
            scratch_shapes=[pltpu.VMEM((H + 2, W + 2, C), jnp.float32)],
        ),
        compiler_params=pltpu.CompilerParams(
            dimension_semantics=("parallel",),
            vmem_limit_bytes=32 * 1024 * 1024,
        ),
    )(xp, w1f, b1.reshape(1, C), w2f, b2.reshape(1, C))

    return jnp.transpose(out, (0, 3, 1, 2))                        # back to NCHW


# ---------------- pure-JAX reference (for correctness check) -----------------

def ref_resnet_block(x_nchw, w1, b1, w2, b2):
    x = jnp.transpose(x_nchw, (0, 2, 3, 1))

    def conv(z, w, b):
        zp = jnp.pad(z, ((0, 0), (1, 1), (1, 1), (0, 0)), mode="reflect")
        y = lax.conv_general_dilated(
            zp, w, (1, 1), "VALID",
            dimension_numbers=("NHWC", "HWIO", "NHWC"))
        return y + b

    def inorm(z):
        m = jnp.mean(z, axis=(1, 2), keepdims=True)
        v = jnp.mean((z - m) ** 2, axis=(1, 2), keepdims=True)
        return (z - m) / jnp.sqrt(v + EPS)

    h = jnp.maximum(inorm(conv(x, w1, b1)), 0.0)
    y = inorm(conv(h, w2, b2))
    return jnp.transpose(x + y, (0, 3, 1, 2))


# ---------------- main --------------------------------------------------------

if __name__ == "__main__":
    N, C, H, W = 2, 4, 16, 16  # small shapes; dim = C = 4, use_dropout = False

    key = jax.random.PRNGKey(0)
    kx, kw1, kb1, kw2, kb2 = jax.random.split(key, 5)

    x = jax.random.normal(kx, (N, C, H, W), dtype=jnp.float32)

    # Deterministic synthetic parameters (Conv2d(dim, dim, 3) x 2, with bias).
    fan_in = C * 3 * 3
    bound = 1.0 / jnp.sqrt(fan_in)
    w1 = jax.random.uniform(kw1, (3, 3, C, C), jnp.float32, -bound, bound)
    b1 = jax.random.uniform(kb1, (C,), jnp.float32, -bound, bound)
    w2 = jax.random.uniform(kw2, (3, 3, C, C), jnp.float32, -bound, bound)
    b2 = jax.random.uniform(kb2, (C,), jnp.float32, -bound, bound)

    out = jax.block_until_ready(resnet_block(x, w1, b1, w2, b2))
    ref = jax.block_until_ready(ref_resnet_block(x, w1, b1, w2, b2))

    assert out.shape == x.shape and out.dtype == x.dtype
    assert jnp.max(jnp.abs(out - ref)) < 1e-4, "mismatch vs reference"

    print("KERNEL_OK")
</pallas_src>

<mosaic_0001>
module attributes {stable_mosaic.version = 11 : i64} {
  func.func @resnet_block_kernel(%arg0: i32, %arg1: memref<1x18x18x4xf32, #tpu.memory_space<vmem>>, %arg2: memref<36x4xf32, #tpu.memory_space<vmem>>, %arg3: memref<1x4xf32, #tpu.memory_space<vmem>>, %arg4: memref<36x4xf32, #tpu.memory_space<vmem>>, %arg5: memref<1x4xf32, #tpu.memory_space<vmem>>, %arg6: memref<1x16x16x4xf32, #tpu.memory_space<vmem>>, %arg7: memref<18x18x4xf32, #tpu.memory_space<vmem>>) attributes {dimension_semantics = [#tpu.dimension_semantics<parallel>], iteration_bounds = array<i64: 2>, scalar_prefetch = 0 : i64, scratch_operands = 1 : i64, tpu.core_type = #tpu.core_type<tc>, window_params = [{transform_indices = @transform_0, window_bounds = array<i64: 1, 18, 18, 4>}, {pipeline_mode = #tpu.pipeline_mode<synchronous>, transform_indices = @transform_1, window_bounds = array<i64: 36, 4>}, {pipeline_mode = #tpu.pipeline_mode<synchronous>, transform_indices = @transform_2, window_bounds = array<i64: 1, 4>}, {pipeline_mode = #tpu.pipeline_mode<synchronous>, transform_indices = @transform_3, window_bounds = array<i64: 36, 4>}, {pipeline_mode = #tpu.pipeline_mode<synchronous>, transform_indices = @transform_4, window_bounds = array<i64: 1, 4>}, {transform_indices = @transform_5, window_bounds = array<i64: 1, 16, 16, 4>}]} {
    %c0 = arith.constant 0 : index
    %c0_0 = arith.constant 0 : index
    %c0_1 = arith.constant 0 : index
    %c0_2 = arith.constant 0 : index
    %0 = vector.load %arg1[%c0, %c0_0, %c0_1, %c0_2] : memref<1x18x18x4xf32, #tpu.memory_space<vmem>>, vector<1x18x18x4xf32>
    %1 = vector.shape_cast %0 : vector<1x18x18x4xf32> to vector<18x18x4xf32>
    %2 = vector.extract_strided_slice %1 {offsets = [0, 0, 0], sizes = [16, 16, 4], strides = [1, 1, 1]} : vector<18x18x4xf32> to vector<16x16x4xf32>
    %3 = vector.shape_cast %2 : vector<16x16x4xf32> to vector<256x4xf32>
    %4 = vector.extract_strided_slice %1 {offsets = [0, 1, 0], sizes = [16, 16, 4], strides = [1, 1, 1]} : vector<18x18x4xf32> to vector<16x16x4xf32>
    %5 = vector.shape_cast %4 : vector<16x16x4xf32> to vector<256x4xf32>
    %6 = vector.extract_strided_slice %1 {offsets = [0, 2, 0], sizes = [16, 16, 4], strides = [1, 1, 1]} : vector<18x18x4xf32> to vector<16x16x4xf32>
    %7 = vector.shape_cast %6 : vector<16x16x4xf32> to vector<256x4xf32>
    %8 = vector.extract_strided_slice %1 {offsets = [1, 0, 0], sizes = [16, 16, 4], strides = [1, 1, 1]} : vector<18x18x4xf32> to vector<16x16x4xf32>
    %9 = vector.shape_cast %8 : vector<16x16x4xf32> to vector<256x4xf32>
    %10 = vector.extract_strided_slice %1 {offsets = [1, 1, 0], sizes = [16, 16, 4], strides = [1, 1, 1]} : vector<18x18x4xf32> to vector<16x16x4xf32>
    %11 = vector.shape_cast %10 : vector<16x16x4xf32> to vector<256x4xf32>
    %12 = vector.extract_strided_slice %1 {offsets = [1, 2, 0], sizes = [16, 16, 4], strides = [1, 1, 1]} : vector<18x18x4xf32> to vector<16x16x4xf32>
    %13 = vector.shape_cast %12 : vector<16x16x4xf32> to vector<256x4xf32>
    %14 = vector.extract_strided_slice %1 {offsets = [2, 0, 0], sizes = [16, 16, 4], strides = [1, 1, 1]} : vector<18x18x4xf32> to vector<16x16x4xf32>
    %15 = vector.shape_cast %14 : vector<16x16x4xf32> to vector<256x4xf32>
    %16 = vector.extract_strided_slice %1 {offsets = [2, 1, 0], sizes = [16, 16, 4], strides = [1, 1, 1]} : vector<18x18x4xf32> to vector<16x16x4xf32>
    %17 = vector.shape_cast %16 : vector<16x16x4xf32> to vector<256x4xf32>
    %18 = vector.extract_strided_slice %1 {offsets = [2, 2, 0], sizes = [16, 16, 4], strides = [1, 1, 1]} : vector<18x18x4xf32> to vector<16x16x4xf32>
    %19 = vector.shape_cast %18 : vector<16x16x4xf32> to vector<256x4xf32>
    %20 = tpu.concatenate %3, %5, %7, %9, %11, %13, %15, %17, %19 in 1 : vector<256x4xf32>, vector<256x4xf32>, vector<256x4xf32>, vector<256x4xf32>, vector<256x4xf32>, vector<256x4xf32>, vector<256x4xf32>, vector<256x4xf32>, vector<256x4xf32> -> vector<256x36xf32>
    %c0_3 = arith.constant 0 : index
    %c0_4 = arith.constant 0 : index
    %21 = vector.load %arg2[%c0_3, %c0_4] : memref<36x4xf32, #tpu.memory_space<vmem>>, vector<36x4xf32>
    %cst = arith.constant dense<0.000000e+00> : vector<256x4xf32>
    %22 = tpu.matmul %20, %21, %cst {dimension_numbers = #tpu.dot_dimension_numbers<[1], [0], [0], [1], [0, 0, 1, 1], [], []>} : vector<256x36xf32>, vector<36x4xf32>, vector<256x4xf32> -> vector<256x4xf32>
    %c0_5 = arith.constant 0 : index
    %c0_6 = arith.constant 0 : index
    %23 = vector.load %arg3[%c0_5, %c0_6] : memref<1x4xf32, #tpu.memory_space<vmem>>, vector<1x4xf32>
    %24 = vector.broadcast %23 : vector<1x4xf32> to vector<256x4xf32>
    %25 = arith.addf %22, %24 : vector<256x4xf32>
    %cst_7 = arith.constant dense<0.000000e+00> : vector<4xf32>
    %26 = vector.multi_reduction <add>, %25, %cst_7 [0] : vector<256x4xf32> to vector<4xf32>
    %27 = vector.shape_cast %26 : vector<4xf32> to vector<1x4xf32>
    %28 = arith.mulf %25, %25 : vector<256x4xf32>
    %cst_8 = arith.constant dense<0.000000e+00> : vector<4xf32>
    %29 = vector.multi_reduction <add>, %28, %cst_8 [0] : vector<256x4xf32> to vector<4xf32>
    %30 = vector.shape_cast %29 : vector<4xf32> to vector<1x4xf32>
    %cst_9 = arith.constant 3.906250e-03 : f32
    %31 = vector.broadcast %cst_9 : f32 to vector<1x4xf32>
    %32 = arith.mulf %27, %31 : vector<1x4xf32>
    %cst_10 = arith.constant 3.906250e-03 : f32
    %33 = vector.broadcast %cst_10 : f32 to vector<1x4xf32>
    %34 = arith.mulf %30, %33 : vector<1x4xf32>
    %35 = arith.mulf %32, %32 : vector<1x4xf32>
    %36 = arith.subf %34, %35 : vector<1x4xf32>
    %cst_11 = arith.constant 0.000000e+00 : f32
    %37 = vector.broadcast %cst_11 : f32 to vector<1x4xf32>
    %38 = arith.maximumf %36, %37 : vector<1x4xf32>
    %39 = vector.broadcast %32 : vector<1x4xf32> to vector<256x4xf32>
    %40 = arith.subf %25, %39 : vector<256x4xf32>
    %cst_12 = arith.constant 9.99999974E-6 : f32
    %41 = vector.broadcast %cst_12 : f32 to vector<1x4xf32>
    %42 = arith.addf %38, %41 : vector<1x4xf32>
    %43 = math.rsqrt %42 : vector<1x4xf32>
    %44 = vector.broadcast %43 : vector<1x4xf32> to vector<256x4xf32>
    %45 = arith.mulf %40, %44 : vector<256x4xf32>
    %cst_13 = arith.constant 0.000000e+00 : f32
    %46 = vector.broadcast %cst_13 : f32 to vector<256x4xf32>
    %47 = arith.maximumf %45, %46 : vector<256x4xf32>
    %48 = vector.shape_cast %47 : vector<256x4xf32> to vector<16x16x4xf32>
    %c1 = arith.constant 1 : index
    %c1_14 = arith.constant 1 : index
    %c0_15 = arith.constant 0 : index
    %49 = vector.load %arg7[%c1, %c1_14, %c0_15] : memref<18x18x4xf32, #tpu.memory_space<vmem>>, vector<16x16x4xf32>
    tpu.vector_store %arg7[%c1, %c1_14, %c0_15], %48 {strides = array<i32>} : memref<18x18x4xf32, #tpu.memory_space<vmem>>, vector<16x16x4xf32>,
    %50 = vector.extract_strided_slice %48 {offsets = [1, 0, 0], sizes = [1, 16, 4], strides = [1, 1, 1]} : vector<16x16x4xf32> to vector<1x16x4xf32>
    %c0_16 = arith.constant 0 : index
    %c1_17 = arith.constant 1 : index
    %c0_18 = arith.constant 0 : index
    %51 = vector.load %arg7[%c0_16, %c1_17, %c0_18] : memref<18x18x4xf32, #tpu.memory_space<vmem>>, vector<1x16x4xf32>
    tpu.vector_store %arg7[%c0_16, %c1_17, %c0_18], %50 {strides = array<i32>} : memref<18x18x4xf32, #tpu.memory_space<vmem>>, vector<1x16x4xf32>,
    %52 = vector.extract_strided_slice %48 {offsets = [14, 0, 0], sizes = [1, 16, 4], strides = [1, 1, 1]} : vector<16x16x4xf32> to vector<1x16x4xf32>
    %c17 = arith.constant 17 : index
    %c1_19 = arith.constant 1 : index
    %c0_20 = arith.constant 0 : index
    %53 = vector.load %arg7[%c17, %c1_19, %c0_20] : memref<18x18x4xf32, #tpu.memory_space<vmem>>, vector<1x16x4xf32>
    tpu.vector_store %arg7[%c17, %c1_19, %c0_20], %52 {strides = array<i32>} : memref<18x18x4xf32, #tpu.memory_space<vmem>>, vector<1x16x4xf32>,
    %c0_21 = arith.constant 0 : index
    %c2 = arith.constant 2 : index
    %c0_22 = arith.constant 0 : index
    %54 = vector.load %arg7[%c0_21, %c2, %c0_22] : memref<18x18x4xf32, #tpu.memory_space<vmem>>, vector<18x1x4xf32>
    %c0_23 = arith.constant 0 : index
    %c0_24 = arith.constant 0 : index
    %c0_25 = arith.constant 0 : index
    %55 = vector.load %arg7[%c0_23, %c0_24, %c0_25] : memref<18x18x4xf32, #tpu.memory_space<vmem>>, vector<18x1x4xf32>
    tpu.vector_store %arg7[%c0_23, %c0_24, %c0_25], %54 {strides = array<i32>} : memref<18x18x4xf32, #tpu.memory_space<vmem>>, vector<18x1x4xf32>,
    %c0_26 = arith.constant 0 : index
    %c15 = arith.constant 15 : index
    %c0_27 = arith.constant 0 : index
    %56 = vector.load %arg7[%c0_26, %c15, %c0_27] : memref<18x18x4xf32, #tpu.memory_space<vmem>>, vector<18x1x4xf32>
    %c0_28 = arith.constant 0 : index
    %c17_29 = arith.constant 17 : index
    %c0_30 = arith.constant 0 : index
    %57 = vector.load %arg7[%c0_28, %c17_29, %c0_30] : memref<18x18x4xf32, #tpu.memory_space<vmem>>, vector<18x1x4xf32>
    tpu.vector_store %arg7[%c0_28, %c17_29, %c0_30], %56 {strides = array<i32>} : memref<18x18x4xf32, #tpu.memory_space<vmem>>, vector<18x1x4xf32>,
    %c0_31 = arith.constant 0 : index
    %c0_32 = arith.constant 0 : index
    %c0_33 = arith.constant 0 : index
    %58 = vector.load %arg7[%c0_31, %c0_32, %c0_33] : memref<18x18x4xf32, #tpu.memory_space<vmem>>, vector<18x18x4xf32>
    %59 = vector.extract_strided_slice %58 {offsets = [0, 0, 0], sizes = [16, 16, 4], strides = [1, 1, 1]} : vector<18x18x4xf32> to vector<16x16x4xf32>
    %60 = vector.shape_cast %59 : vector<16x16x4xf32> to vector<256x4xf32>
    %61 = vector.extract_strided_slice %58 {offsets = [0, 1, 0], sizes = [16, 16, 4], strides = [1, 1, 1]} : vector<18x18x4xf32> to vector<16x16x4xf32>
    %62 = vector.shape_cast %61 : vector<16x16x4xf32> to vector<256x4xf32>
    %63 = vector.extract_strided_slice %58 {offsets = [0, 2, 0], sizes = [16, 16, 4], strides = [1, 1, 1]} : vector<18x18x4xf32> to vector<16x16x4xf32>
    %64 = vector.shape_cast %63 : vector<16x16x4xf32> to vector<256x4xf32>
    %65 = vector.extract_strided_slice %58 {offsets = [1, 0, 0], sizes = [16, 16, 4], strides = [1, 1, 1]} : vector<18x18x4xf32> to vector<16x16x4xf32>
    %66 = vector.shape_cast %65 : vector<16x16x4xf32> to vector<256x4xf32>
    %67 = vector.extract_strided_slice %58 {offsets = [1, 1, 0], sizes = [16, 16, 4], strides = [1, 1, 1]} : vector<18x18x4xf32> to vector<16x16x4xf32>
    %68 = vector.shape_cast %67 : vector<16x16x4xf32> to vector<256x4xf32>
    %69 = vector.extract_strided_slice %58 {offsets = [1, 2, 0], sizes = [16, 16, 4], strides = [1, 1, 1]} : vector<18x18x4xf32> to vector<16x16x4xf32>
    %70 = vector.shape_cast %69 : vector<16x16x4xf32> to vector<256x4xf32>
    %71 = vector.extract_strided_slice %58 {offsets = [2, 0, 0], sizes = [16, 16, 4], strides = [1, 1, 1]} : vector<18x18x4xf32> to vector<16x16x4xf32>
    %72 = vector.shape_cast %71 : vector<16x16x4xf32> to vector<256x4xf32>
    %73 = vector.extract_strided_slice %58 {offsets = [2, 1, 0], sizes = [16, 16, 4], strides = [1, 1, 1]} : vector<18x18x4xf32> to vector<16x16x4xf32>
    %74 = vector.shape_cast %73 : vector<16x16x4xf32> to vector<256x4xf32>
    %75 = vector.extract_strided_slice %58 {offsets = [2, 2, 0], sizes = [16, 16, 4], strides = [1, 1, 1]} : vector<18x18x4xf32> to vector<16x16x4xf32>
    %76 = vector.shape_cast %75 : vector<16x16x4xf32> to vector<256x4xf32>
    %77 = tpu.concatenate %60, %62, %64, %66, %68, %70, %72, %74, %76 in 1 : vector<256x4xf32>, vector<256x4xf32>, vector<256x4xf32>, vector<256x4xf32>, vector<256x4xf32>, vector<256x4xf32>, vector<256x4xf32>, vector<256x4xf32>, vector<256x4xf32> -> vector<256x36xf32>
    %c0_34 = arith.constant 0 : index
    %c0_35 = arith.constant 0 : index
    %78 = vector.load %arg4[%c0_34, %c0_35] : memref<36x4xf32, #tpu.memory_space<vmem>>, vector<36x4xf32>
    %cst_36 = arith.constant dense<0.000000e+00> : vector<256x4xf32>
    %79 = tpu.matmul %77, %78, %cst_36 {dimension_numbers = #tpu.dot_dimension_numbers<[1], [0], [0], [1], [0, 0, 1, 1], [], []>} : vector<256x36xf32>, vector<36x4xf32>, vector<256x4xf32> -> vector<256x4xf32>
    %c0_37 = arith.constant 0 : index
    %c0_38 = arith.constant 0 : index
    %80 = vector.load %arg5[%c0_37, %c0_38] : memref<1x4xf32, #tpu.memory_space<vmem>>, vector<1x4xf32>
    %81 = vector.broadcast %80 : vector<1x4xf32> to vector<256x4xf32>
    %82 = arith.addf %79, %81 : vector<256x4xf32>
    %cst_39 = arith.constant dense<0.000000e+00> : vector<4xf32>
    %83 = vector.multi_reduction <add>, %82, %cst_39 [0] : vector<256x4xf32> to vector<4xf32>
    %84 = vector.shape_cast %83 : vector<4xf32> to vector<1x4xf32>
    %85 = arith.mulf %82, %82 : vector<256x4xf32>
    %cst_40 = arith.constant dense<0.000000e+00> : vector<4xf32>
    %86 = vector.multi_reduction <add>, %85, %cst_40 [0] : vector<256x4xf32> to vector<4xf32>
    %87 = vector.shape_cast %86 : vector<4xf32> to vector<1x4xf32>
    %cst_41 = arith.constant 3.906250e-03 : f32
    %88 = vector.broadcast %cst_41 : f32 to vector<1x4xf32>
    %89 = arith.mulf %84, %88 : vector<1x4xf32>
    %cst_42 = arith.constant 3.906250e-03 : f32
    %90 = vector.broadcast %cst_42 : f32 to vector<1x4xf32>
    %91 = arith.mulf %87, %90 : vector<1x4xf32>
    %92 = arith.mulf %89, %89 : vector<1x4xf32>
    %93 = arith.subf %91, %92 : vector<1x4xf32>
    %cst_43 = arith.constant 0.000000e+00 : f32
    %94 = vector.broadcast %cst_43 : f32 to vector<1x4xf32>
    %95 = arith.maximumf %93, %94 : vector<1x4xf32>
    %96 = vector.broadcast %89 : vector<1x4xf32> to vector<256x4xf32>
    %97 = arith.subf %82, %96 : vector<256x4xf32>
    %cst_44 = arith.constant 9.99999974E-6 : f32
    %98 = vector.broadcast %cst_44 : f32 to vector<1x4xf32>
    %99 = arith.addf %95, %98 : vector<1x4xf32>
    %100 = math.rsqrt %99 : vector<1x4xf32>
    %101 = vector.broadcast %100 : vector<1x4xf32> to vector<256x4xf32>
    %102 = arith.mulf %97, %101 : vector<256x4xf32>
    %103 = vector.extract_strided_slice %1 {offsets = [1, 1, 0], sizes = [16, 16, 4], strides = [1, 1, 1]} : vector<18x18x4xf32> to vector<16x16x4xf32>
    %104 = vector.shape_cast %103 : vector<16x16x4xf32> to vector<256x4xf32>
    %105 = arith.addf %104, %102 : vector<256x4xf32>
    %106 = vector.shape_cast %105 : vector<256x4xf32> to vector<16x16x4xf32>
    %c0_45 = arith.constant 0 : index
    %c0_46 = arith.constant 0 : index
    %c0_47 = arith.constant 0 : index
    %c0_48 = arith.constant 0 : index
    %107 = vector.load %arg6[%c0_45, %c0_46, %c0_47, %c0_48] : memref<1x16x16x4xf32, #tpu.memory_space<vmem>>, vector<1x16x16x4xf32>
    %108 = vector.shape_cast %107 : vector<1x16x16x4xf32> to vector<16x16x4xf32>
    %109 = vector.shape_cast %106 : vector<16x16x4xf32> to vector<1x16x16x4xf32>
    tpu.vector_store %arg6[%c0_45, %c0_46, %c0_47, %c0_48], %109 {strides = array<i32>} : memref<1x16x16x4xf32, #tpu.memory_space<vmem>>, vector<1x16x16x4xf32>,
    return
  }
  func.func @transform_0(%arg0: i32) -> (i32, i32, i32, i32) {
    %c0_i32 = arith.constant 0 : i32
    %c0_i32_0 = arith.constant 0 : i32
    %c0_i32_1 = arith.constant 0 : i32
    %c0_i32_2 = arith.constant 0 : i32
    return %arg0, %c0_i32, %c0_i32_0, %c0_i32_1 : i32, i32, i32, i32
  }
  func.func @transform_1(%arg0: i32) -> (i32, i32) {
    %c0_i32 = arith.constant 0 : i32
    %c0_i32_0 = arith.constant 0 : i32
    %c0_i32_1 = arith.constant 0 : i32
    return %c0_i32, %c0_i32_0 : i32, i32
  }
  func.func @transform_2(%arg0: i32) -> (i32, i32) {
    %c0_i32 = arith.constant 0 : i32
    %c0_i32_0 = arith.constant 0 : i32
    %c0_i32_1 = arith.constant 0 : i32
    return %c0_i32, %c0_i32_0 : i32, i32
  }
  func.func @transform_3(%arg0: i32) -> (i32, i32) {
    %c0_i32 = arith.constant 0 : i32
    %c0_i32_0 = arith.constant 0 : i32
    %c0_i32_1 = arith.constant 0 : i32
    return %c0_i32, %c0_i32_0 : i32, i32
  }
  func.func @transform_4(%arg0: i32) -> (i32, i32) {
    %c0_i32 = arith.constant 0 : i32
    %c0_i32_0 = arith.constant 0 : i32
    %c0_i32_1 = arith.constant 0 : i32
    return %c0_i32, %c0_i32_0 : i32, i32
  }
  func.func @transform_5(%arg0: i32) -> (i32, i32, i32, i32) {
    %c0_i32 = arith.constant 0 : i32
    %c0_i32_0 = arith.constant 0 : i32
    %c0_i32_1 = arith.constant 0 : i32
    %c0_i32_2 = arith.constant 0 : i32
    return %arg0, %c0_i32, %c0_i32_0, %c0_i32_1 : i32, i32, i32, i32
  }
}

</mosaic_0001>

<llo_original>
// kernel: tpu_custom_call.1
$region0: #{tpu_custom_call.1}
  #allocation0 [shape = 'u32[]', space=smem, size = 0x4, offset = 0x4, fixed_abs, tag = 'smem constant byte address 0x4 - core index']
  #allocation1 [shape = 'u32[144,128]{1,0:T(1,128)}', space=vmem, size = 0x12000, scoped, tag = 'internal scratch']
  #allocation2 [shape = 'f32[18,18,4]{2,1,0:T(8,128)}', space=vmem, size = 0x36000, scoped, tag = 'scratch operand']
  %s0 = inlined_call_operand.vmem [shape: f32[2,18,18,4], index: 0, kind: input, shape index: {}]
  %s1 = inlined_call_operand.vmem [shape: f32[36,4], index: 1, kind: input, shape index: {}]
  %s2 = inlined_call_operand.vmem [shape: f32[1,4], index: 2, kind: input, shape index: {}]
  %s3 = inlined_call_operand.vmem [shape: f32[36,4], index: 3, kind: input, shape index: {}]
  %s4 = inlined_call_operand.vmem [shape: f32[1,4], index: 4, kind: input, shape index: {}]
  %s5 = inlined_call_operand.vmem [shape: f32[2,16,16,4], index: 5, kind: output, shape index: {}]
  %s6 = sld [smem:[#allocation0]]
  $region53: #{tpu_custom_call.1} parent=0
    _
  %s8 = ssub.s32 1, %s6
  %s9 = scalar_select 0, %s8, %s6
  loop: start=0, step=1, limit=4
  $region2: #{tpu_custom_call.1} parent=0 // loop_pre_header
    _
  $region3: #{tpu_custom_call.1} parent=0 // loop_header
    %s11 = sphi 0, %s15
    %p12 = scmp.ge.s32.totalorder %s11, 4
    %s21 = sphi 0, %s23
    %s24 = sphi 0, %s21
    %s25 = sphi 0, %s24
    %s41 = sphi 0, %s25
    %s45 = sphi 0, %s45
    %s47 = sphi 0, %s45
    %s48 = sphi 0, %s47
    %s62 = sphi 0, %s48
    %s66 = sphi 0, %s66
    %s68 = sphi 0, %s66
    %s69 = sphi 0, %s68
    %s83 = sphi 0, %s69
    %s87 = sphi 0, %s87
    %s89 = sphi 0, %s87
    %s90 = sphi 0, %s89
    %s104 = sphi 0, %s90
    %s108 = sphi 0, %s108
    %s110 = sphi 0, %s108
    %s111 = sphi 0, %s110
    %s125 = sphi 0, %s111
    %s131 = sphi 0, %s133
    %s134 = sphi 0, %s131
    %s135 = sphi 0, %s134
    %s151 = sphi 0, %s135
  $region4: #{tpu_custom_call.1} parent=0 // loop_header_branch
    %14 = sbr.rel (%p12) target = $region8
  $region5: #{tpu_custom_call.1} parent=0 // loop_body
    %s16 = ssub.s32 %s11, 1
    %s17 = ssub.s32 %s11, 2
    %s18 = sadd.s32 %s11, 1
    %s19 = ssub.s32 %s11, %s18
    %p20 = scmp.eq.s32.totalorder %s19, 0
    %s22 = sadd.s32 %s21, 1
    %s23 = scalar_select %p20, %s21, %s22
    %p26 = pneg %p20
    %p27 = scmp.eq.s32.totalorder %s11, 1
    %p28 = por %p26, %p27
    %p29 = scmp.ne.s32.totalorder %s21, %s24
    %p30 = scmp.eq.s32.totalorder %s11, 0
    %p31 = por %p29, %p30
    %p32 = scmp.ne.s32.totalorder %s21, %s24
    %p33 = scmp.eq.s32.totalorder %s16, 1
    %p34 = por %p32, %p33
    %p35 = scmp.ne.s32.totalorder %s24, %s25
    %p36 = scmp.eq.s32.totalorder %s16, 0
    %p37 = por %p35, %p36
    %p38 = scmp.ne.s32.totalorder %s24, %s25
    %p39 = scmp.eq.s32.totalorder %s17, 1
    %p40 = por %p38, %p39
    %p42 = scmp.ne.s32.totalorder %s25, %s41
    %p43 = scmp.eq.s32.totalorder %s17, 0
    %p44 = por %p42, %p43
    %s46 = sadd.s32 %s45, 1
    %p49 = scmp.eq.s32.totalorder %s11, 1
    %p50 = scmp.ne.s32.totalorder %s45, %s47
    %p51 = scmp.eq.s32.totalorder %s11, 0
    %p52 = por %p50, %p51
    %p53 = scmp.ne.s32.totalorder %s45, %s47
    %p54 = scmp.eq.s32.totalorder %s16, 1
    %p55 = por %p53, %p54
    %p56 = scmp.ne.s32.totalorder %s47, %s48
    %p57 = scmp.eq.s32.totalorder %s16, 0
    %p58 = por %p56, %p57
    %p59 = scmp.ne.s32.totalorder %s47, %s48
    %p60 = scmp.eq.s32.totalorder %s17, 1
    %p61 = por %p59, %p60
    %p63 = scmp.ne.s32.totalorder %s48, %s62
    %p64 = scmp.eq.s32.totalorder %s17, 0
    %p65 = por %p63, %p64
    %s67 = sadd.s32 %s66, 1
    %p70 = scmp.eq.s32.totalorder %s11, 1
    %p71 = scmp.ne.s32.totalorder %s66, %s68
    %p72 = scmp.eq.s32.totalorder %s11, 0
    %p73 = por %p71, %p72
    %p74 = scmp.ne.s32.totalorder %s66, %s68
    %p75 = scmp.eq.s32.totalorder %s16, 1
    %p76 = por %p74, %p75
    %p77 = scmp.ne.s32.totalorder %s68, %s69
    %p78 = scmp.eq.s32.totalorder %s16, 0
    %p79 = por %p77, %p78
    %p80 = scmp.ne.s32.totalorder %s68, %s69
    %p81 = scmp.eq.s32.totalorder %s17, 1
    %p82 = por %p80, %p81
    %p84 = scmp.ne.s32.totalorder %s69, %s83
    %p85 = scmp.eq.s32.totalorder %s17, 0
    %p86 = por %p84, %p85
    %s88 = sadd.s32 %s87, 1
    %p91 = scmp.eq.s32.totalorder %s11, 1
    %p92 = scmp.ne.s32.totalorder %s87, %s89
    %p93 = scmp.eq.s32.totalorder %s11, 0
    %p94 = por %p92, %p93
    %p95 = scmp.ne.s32.totalorder %s87, %s89
    %p96 = scmp.eq.s32.totalorder %s16, 1
    %p97 = por %p95, %p96
    %p98 = scmp.ne.s32.totalorder %s89, %s90
    %p99 = scmp.eq.s32.totalorder %s16, 0
    %p100 = por %p98, %p99
    %p101 = scmp.ne.s32.totalorder %s89, %s90
    %p102 = scmp.eq.s32.totalorder %s17, 1
    %p103 = por %p101, %p102
    %p105 = scmp.ne.s32.totalorder %s90, %s104
    %p106 = scmp.eq.s32.totalorder %s17, 0
    %p107 = por %p105, %p106
    %s109 = sadd.s32 %s108, 1
    %p112 = scmp.eq.s32.totalorder %s11, 1
    %p113 = scmp.ne.s32.totalorder %s108, %s110
    %p114 = scmp.eq.s32.totalorder %s11, 0
    %p115 = por %p113, %p114
    %p116 = scmp.ne.s32.totalorder %s108, %s110
    %p117 = scmp.eq.s32.totalorder %s16, 1
    %p118 = por %p116, %p117
    %p119 = scmp.ne.s32.totalorder %s110, %s111
    %p120 = scmp.eq.s32.totalorder %s16, 0
    %p121 = por %p119, %p120
    %p122 = scmp.ne.s32.totalorder %s110, %s111
    %p123 = scmp.eq.s32.totalorder %s17, 1
    %p124 = por %p122, %p123
    %p126 = scmp.ne.s32.totalorder %s111, %s125
    %p127 = scmp.eq.s32.totalorder %s17, 0
    %p128 = por %p126, %p127
    %s129 = ssub.s32 %s11, %s18
    %p130 = scmp.eq.s32.totalorder %s129, 0
    %s132 = sadd.s32 %s131, 1
    %s133 = scalar_select %p130, %s131, %s132
    %p136 = pneg %p130
    %p137 = scmp.eq.s32.totalorder %s11, 1
    %p138 = por %p136, %p137
    %p139 = scmp.ne.s32.totalorder %s131, %s134
    %p140 = scmp.eq.s32.totalorder %s11, 0
    %p141 = por %p139, %p140
    %p142 = scmp.ne.s32.totalorder %s131, %s134
    %p143 = scmp.eq.s32.totalorder %s16, 1
    %p144 = por %p142, %p143
    %p145 = scmp.ne.s32.totalorder %s134, %s135
    %p146 = scmp.eq.s32.totalorder %s16, 0
    %p147 = por %p145, %p146
    %p148 = scmp.ne.s32.totalorder %s134, %s135
    %p149 = scmp.eq.s32.totalorder %s17, 1
    %p150 = por %p148, %p149
    %p152 = scmp.ne.s32.totalorder %s135, %s151
    %p153 = scmp.eq.s32.totalorder %s17, 0
    %p154 = por %p152, %p153
    %p155 = scmp.le.s32.totalorder 1, %s11
    %p156 = scmp.lt.s32.totalorder %s11, 3
    %p157 = pnand %p155, %p156
    %p158 = pneg %p157
    // Predicated region
    $region9: #{tpu_custom_call.1} parent=5 // pred_check
      _
    $region10: #{tpu_custom_call.1} parent=5 // pred_check_branch
      %160 = sbr.rel (%p157) target = $region12
    $region11: #{tpu_custom_call.1} parent=5 // pred_region
      %s161 = ssub.s32 %s11, 1
      // Predicated region
      $region13: #{tpu_custom_call.1} parent=11 // pred_check
        %p162 = pneg %p58
      $region14: #{tpu_custom_call.1} parent=11 // pred_check_branch
        %164 = sbr.rel (%p162) target = $region16
      $region15: #{tpu_custom_call.1} parent=11 // pred_region
        _
      $region16: #{tpu_custom_call.1} parent=11 // pred_fallthru
        _
      // Predicated region
      $region17: #{tpu_custom_call.1} parent=11 // pred_check
        %p165 = pneg %p79
      $region18: #{tpu_custom_call.1} parent=11 // pred_check_branch
        %167 = sbr.rel (%p165) target = $region20
      $region19: #{tpu_custom_call.1} parent=11 // pred_region
        _
      $region20: #{tpu_custom_call.1} parent=11 // pred_fallthru
        _
      // Predicated region
      $region21: #{tpu_custom_call.1} parent=11 // pred_check
        %p168 = pneg %p100
      $region22: #{tpu_custom_call.1} parent=11 // pred_check_branch
        %170 = sbr.rel (%p168) target = $region24
      $region23: #{tpu_custom_call.1} parent=11 // pred_region
        _
      $region24: #{tpu_custom_call.1} parent=11 // pred_fallthru
        _
      // Predicated region
      $region25: #{tpu_custom_call.1} parent=11 // pred_check
        %p171 = pneg %p121
      $region26: #{tpu_custom_call.1} parent=11 // pred_check_branch
        %173 = sbr.rel (%p171) target = $region28
      $region27: #{tpu_custom_call.1} parent=11 // pred_region
        _
      $region28: #{tpu_custom_call.1} parent=11 // pred_fallthru
        _
    $region12: #{tpu_custom_call.1} parent=5 // pred_fallthru
      _
    %p174 = scmp.lt.s32.totalorder %s11, 2
    // Predicated region
    $region29: #{tpu_custom_call.1} parent=5 // pred_check
      %p175 = pneg %p174
    $region30: #{tpu_custom_call.1} parent=5 // pred_check_branch
      %177 = sbr.rel (%p175) target = $region32
    $region31: #{tpu_custom_call.1} parent=5 // pred_region
      // Predicated region
      $region33: #{tpu_custom_call.1} parent=31 // pred_check
        %p178 = pneg %p31
      $region34: #{tpu_custom_call.1} parent=31 // pred_check_branch
        %180 = sbr.rel (%p178) target = $region36
      $region35: #{tpu_custom_call.1} parent=31 // pred_region
        %p181 = scmp.lt.s32.totalorder %s11, 1
        %s182 = scalar_select %p181, %s11, 1
        %s183 = smul.addr %s182, 54
        %s184 = smul.addr %s183, 8
        %s185 = scalar_lea.vmem %s0, %s184
      $region36: #{tpu_custom_call.1} parent=31 // pred_fallthru
        _
    $region32: #{tpu_custom_call.1} parent=5 // pred_fallthru
      _
    %p186 = scmp.le.s32.totalorder 1, %s11
    %p187 = scmp.lt.s32.totalorder %s11, 3
    %p188 = pnand %p186, %p187
    %p189 = pneg %p188
    // Predicated region
    $region37: #{tpu_custom_call.1} parent=5 // pred_check
      _
    $region38: #{tpu_custom_call.1} parent=5 // pred_check_branch
      %191 = sbr.rel (%p188) target = $region40
    $region39: #{tpu_custom_call.1} parent=5 // pred_region
      %s192 = ssub.s32 %s11, 1
      %p193 = scmp.lt.s32.totalorder %s16, 1
      %s194 = scalar_select %p193, %s16, 1
      %s195 = smul.addr %s194, 54
      %s196 = smul.addr %s195, 8
      %s197 = scalar_lea.vmem %s0, %s196
      %p198 = pneg %p37
      %p199 = pneg %p34
      %p200 = pneg %p58
      %p201 = pneg %p55
      %p202 = pneg %p79
      %p203 = pneg %p76
      %p204 = pneg %p100
      %p205 = pneg %p97
      %p206 = pneg %p121
      %p207 = pneg %p118
      %p208 = pneg %p147
      %p209 = pneg %p144
      %p210 = scmp.lt.s32.totalorder %s16, 1
      %s211 = scalar_select %p210, %s16, 1
      %s212 = smul.addr %s211, 32
      %s213 = smul.addr %s212, 8
      %s214 = scalar_lea.vmem %s5, %s213
      %p215 = scmp.lt.s32.totalorder %s16, 1
      %s216 = scalar_select %p215, %s16, 1
      %s217 = smul.addr %s216, 54
      %s218 = smul.addr %s217, 8
      %s219 = scalar_lea.vmem %s0, %s218
      %p220 = scmp.lt.s32.totalorder %s16, 1
      %s221 = scalar_select %p220, %s16, 1
      %s222 = smul.addr %s221, 32
      %s223 = smul.addr %s222, 8
      %s224 = scalar_lea.vmem %s5, %s223
      %v225 = vld [vmem:[%s219] sm:$0xff]
      %v226 = vld [vmem:[%s219 + $0x8] sm:$0xff]
      %v227 = vld [vmem:[%s219 + $0x10] sm:$0x3]
      %v228 = vld [vmem:[%s219 + $0x18] sm:$0xff]
      %v229 = vld [vmem:[%s219 + $0x20] sm:$0xff]
      %v230 = vld [vmem:[%s219 + $0x28] sm:$0x3]
      %v231 = vld [vmem:[%s219 + $0x30] sm:$0xff]
      %v232 = vld [vmem:[%s219 + $0x38] sm:$0xff]
      %v233 = vld [vmem:[%s219 + $0x40] sm:$0x3]
      %v234 = vld [vmem:[%s219 + $0x48] sm:$0xff]
      %v235 = vld [vmem:[%s219 + $0x50] sm:$0xff]
      %v236 = vld [vmem:[%s219 + $0x58] sm:$0x3]
      %v237 = vld [vmem:[%s219 + $0x60] sm:$0xff]
      %v238 = vld [vmem:[%s219 + $0x68] sm:$0xff]
      %v239 = vld [vmem:[%s219 + $0x70] sm:$0x3]
      %v240 = vld [vmem:[%s219 + $0x78] sm:$0xff]
      %v241 = vld [vmem:[%s219 + $0x80] sm:$0xff]
      %v242 = vld [vmem:[%s219 + $0x88] sm:$0x3]
      %v243 = vld [vmem:[%s219 + $0x90] sm:$0xff]
      %v244 = vld [vmem:[%s219 + $0x98] sm:$0xff]
      %v245 = vld [vmem:[%s219 + $0xa0] sm:$0x3]
      %v246 = vld [vmem:[%s219 + $0xa8] sm:$0xff]
      %v247 = vld [vmem:[%s219 + $0xb0] sm:$0xff]
      %v248 = vld [vmem:[%s219 + $0xb8] sm:$0x3]
      %v249 = vld [vmem:[%s219 + $0xc0] sm:$0xff]
      %v250 = vld [vmem:[%s219 + $0xc8] sm:$0xff]
      %v251 = vld [vmem:[%s219 + $0xd0] sm:$0x3]
      %v252 = vld [vmem:[%s219 + $0xd8] sm:$0xff]
      %v253 = vld [vmem:[%s219 + $0xe0] sm:$0xff]
      %v254 = vld [vmem:[%s219 + $0xe8] sm:$0x3]
      %v255 = vld [vmem:[%s219 + $0xf0] sm:$0xff]
      %v256 = vld [vmem:[%s219 + $0xf8] sm:$0xff]
      %v257 = vld [vmem:[%s219 + $0x100] sm:$0x3]
      %v258 = vld [vmem:[%s219 + $0x108] sm:$0xff]
      %v259 = vld [vmem:[%s219 + $0x110] sm:$0xff]
      %v260 = vld [vmem:[%s219 + $0x118] sm:$0x3]
      %v261 = vld [vmem:[%s219 + $0x120] sm:$0xff]
      %v262 = vld [vmem:[%s219 + $0x128] sm:$0xff]
      %v263 = vld [vmem:[%s219 + $0x130] sm:$0x3]
      %v264 = vld [vmem:[%s219 + $0x138] sm:$0xff]
      %v265 = vld [vmem:[%s219 + $0x140] sm:$0xff]
      %v266 = vld [vmem:[%s219 + $0x148] sm:$0x3]
      %v267 = vld [vmem:[%s219 + $0x150] sm:$0xff]
      %v268 = vld [vmem:[%s219 + $0x158] sm:$0xff]
      %v269 = vld [vmem:[%s219 + $0x160] sm:$0x3]
      %v270 = vld [vmem:[%s219 + $0x168] sm:$0xff]
      %v271 = vld [vmem:[%s219 + $0x170] sm:$0xff]
      %v272 = vld [vmem:[%s219 + $0x178] sm:$0x3]
      %v273 = vld [vmem:[%s219 + $0x180] sm:$0xff]
      %v274 = vld [vmem:[%s219 + $0x188] sm:$0xff]
      %v275 = vld [vmem:[%s219 + $0x190] sm:$0x3]
      %v276 = vld [vmem:[%s219 + $0x198] sm:$0xff]
      %v277 = vld [vmem:[%s219 + $0x1a0] sm:$0xff]
      %v278 = vld [vmem:[%s219 + $0x1a8] sm:$0x3]
      %vm327 = vcmask 1046528
      %v328 = vrot.slane %v225, 1
      %v329 = vrot.slane %v226, 1
      %v330 = vsel %vm327, %v328, %v329
      %v331 = vrot.slane %v227, 1
      %v332 = vsel %vm327, %v329, %v331
      %v333 = vrot.slane %v228, 1
      %v334 = vrot.slane %v229, 1
      %v335 = vsel %vm327, %v333, %v334
      %v336 = vrot.slane %v230, 1
      %v337 = vsel %vm327, %v334, %v336
      %v338 = vrot.slane %v231, 1
      %v339 = vrot.slane %v232, 1
      %v340 = vsel %vm327, %v338, %v339
      %v341 = vrot.slane %v233, 1
      %v342 = vsel %vm327, %v339, %v341
      %v343 = vrot.slane %v234, 1
      %v344 = vrot.slane %v235, 1
      %v345 = vsel %vm327, %v343, %v344
      %v346 = vrot.slane %v236, 1
      %v347 = vsel %vm327, %v344, %v346
      %v348 = vrot.slane %v237, 1
      %v349 = vrot.slane %v238, 1
      %v350 = vsel %vm327, %v348, %v349
      %v351 = vrot.slane %v239, 1
      %v352 = vsel %vm327, %v349, %v351
      %v353 = vrot.slane %v240, 1
      %v354 = vrot.slane %v241, 1
      %v355 = vsel %vm327, %v353, %v354
      %v356 = vrot.slane %v242, 1
      %v357 = vsel %vm327, %v354, %v356
      %v358 = vrot.slane %v243, 1
      %v359 = vrot.slane %v244, 1
      %v360 = vsel %vm327, %v358, %v359
      %v361 = vrot.slane %v245, 1
      %v362 = vsel %vm327, %v359, %v361
      %v363 = vrot.slane %v246, 1
      %v364 = vrot.slane %v247, 1
      %v365 = vsel %vm327, %v363, %v364
      %v366 = vrot.slane %v248, 1
      %v367 = vsel %vm327, %v364, %v366
      %v368 = vrot.slane %v249, 1
      %v369 = vrot.slane %v250, 1
      %v370 = vsel %vm327, %v368, %v369
      %v371 = vrot.slane %v251, 1
      %v372 = vsel %vm327, %v369, %v371
      %v373 = vrot.slane %v252, 1
      %v374 = vrot.slane %v253, 1
      %v375 = vsel %vm327, %v373, %v374
      %v376 = vrot.slane %v254, 1
      %v377 = vsel %vm327, %v374, %v376
      %v378 = vrot.slane %v255, 1
      %v379 = vrot.slane %v256, 1
      %v380 = vsel %vm327, %v378, %v379
      %v381 = vrot.slane %v257, 1
      %v382 = vsel %vm327, %v379, %v381
      %v383 = vrot.slane %v258, 1
      %v384 = vrot.slane %v259, 1
      %v385 = vsel %vm327, %v383, %v384
      %v386 = vrot.slane %v260, 1
      %v387 = vsel %vm327, %v384, %v386
      %v388 = vrot.slane %v261, 1
      %v389 = vrot.slane %v262, 1
      %v390 = vsel %vm327, %v388, %v389
      %v391 = vrot.slane %v263, 1
      %v392 = vsel %vm327, %v389, %v391
      %v393 = vrot.slane %v264, 1
      %v394 = vrot.slane %v265, 1
      %v395 = vsel %vm327, %v393, %v394
      %v396 = vrot.slane %v266, 1
      %v397 = vsel %vm327, %v394, %v396
      %v398 = vrot.slane %v267, 1
      %v399 = vrot.slane %v268, 1
      %v400 = vsel %vm327, %v398, %v399
      %v401 = vrot.slane %v269, 1
      %v402 = vsel %vm327, %v399, %v401
      %v403 = vrot.slane %v270, 1
      %v404 = vrot.slane %v271, 1
      %v405 = vsel %vm327, %v403, %v404
      %v406 = vrot.slane %v272, 1
      %v407 = vsel %vm327, %v404, %v406
      %vm408 = vcmask 1045504
      %v409 = vrot.slane %v225, 2
      %v410 = vrot.slane %v226, 2
      %v411 = vsel %vm408, %v409, %v410
      %v412 = vrot.slane %v227, 2
      %v413 = vsel %vm408, %v410, %v412
      %v414 = vrot.slane %v228, 2
      %v415 = vrot.slane %v229, 2
      %v416 = vsel %vm408, %v414, %v415
      %v417 = vrot.slane %v230, 2
      %v418 = vsel %vm408, %v415, %v417
      %v419 = vrot.slane %v231, 2
      %v420 = vrot.slane %v232, 2
      %v421 = vsel %vm408, %v419, %v420
      %v422 = vrot.slane %v233, 2
      %v423 = vsel %vm408, %v420, %v422
      %v424 = vrot.slane %v234, 2
      %v425 = vrot.slane %v235, 2
      %v426 = vsel %vm408, %v424, %v425
      %v427 = vrot.slane %v236, 2
      %v428 = vsel %vm408, %v425, %v427
      %v429 = vrot.slane %v237, 2
      %v430 = vrot.slane %v238, 2
      %v431 = vsel %vm408, %v429, %v430
      %v432 = vrot.slane %v239, 2
      %v433 = vsel %vm408, %v430, %v432
      %v434 = vrot.slane %v240, 2
      %v435 = vrot.slane %v241, 2
      %v436 = vsel %vm408, %v434, %v435
      %v437 = vrot.slane %v242, 2
      %v438 = vsel %vm408, %v435, %v437
      %v439 = vrot.slane %v243, 2
      %v440 = vrot.slane %v244, 2
      %v441 = vsel %vm408, %v439, %v440
      %v442 = vrot.slane %v245, 2
      %v443 = vsel %vm408, %v440, %v442
      %v444 = vrot.slane %v246, 2
      %v445 = vrot.slane %v247, 2
      %v446 = vsel %vm408, %v444, %v445
      %v447 = vrot.slane %v248, 2
      %v448 = vsel %vm408, %v445, %v447
      %v449 = vrot.slane %v249, 2
      %v450 = vrot.slane %v250, 2
      %v451 = vsel %vm408, %v449, %v450
      %v452 = vrot.slane %v251, 2
      %v453 = vsel %vm408, %v450, %v452
      %v454 = vrot.slane %v252, 2
      %v455 = vrot.slane %v253, 2
      %v456 = vsel %vm408, %v454, %v455
      %v457 = vrot.slane %v254, 2
      %v458 = vsel %vm408, %v455, %v457
      %v459 = vrot.slane %v255, 2
      %v460 = vrot.slane %v256, 2
      %v461 = vsel %vm408, %v459, %v460
      %v462 = vrot.slane %v257, 2
      %v463 = vsel %vm408, %v460, %v462
      %v464 = vrot.slane %v258, 2
      %v465 = vrot.slane %v259, 2
      %v466 = vsel %vm408, %v464, %v465
      %v467 = vrot.slane %v260, 2
      %v468 = vsel %vm408, %v465, %v467
      %v469 = vrot.slane %v261, 2
      %v470 = vrot.slane %v262, 2
      %v471 = vsel %vm408, %v469, %v470
      %v472 = vrot.slane %v263, 2
      %v473 = vsel %vm408, %v470, %v472
      %v474 = vrot.slane %v264, 2
      %v475 = vrot.slane %v265, 2
      %v476 = vsel %vm408, %v474, %v475
      %v477 = vrot.slane %v266, 2
      %v478 = vsel %vm408, %v475, %v477
      %v479 = vrot.slane %v267, 2
      %v480 = vrot.slane %v268, 2
      %v481 = vsel %vm408, %v479, %v480
      %v482 = vrot.slane %v269, 2
      %v483 = vsel %vm408, %v480, %v482
      %v484 = vrot.slane %v270, 2
      %v485 = vrot.slane %v271, 2
      %v486 = vsel %vm408, %v484, %v485
      %v487 = vrot.slane %v272, 2
      %v488 = vsel %vm408, %v485, %v487
      %v492 = vrot.slane %v273, 1
      %v493 = vrot.slane %v274, 1
      %v494 = vsel %vm327, %v492, %v493
      %v495 = vrot.slane %v275, 1
      %v496 = vsel %vm327, %v493, %v495
      %v529 = vrot.slane %v273, 2
      %v530 = vrot.slane %v274, 2
      %v531 = vsel %vm408, %v529, %v530
      %v532 = vrot.slane %v275, 2
      %v533 = vsel %vm408, %v530, %v532
      %v537 = vrot.slane %v276, 1
      %v538 = vrot.slane %v277, 1
      %v539 = vsel %vm327, %v537, %v538
      %v540 = vrot.slane %v278, 1
      %v541 = vsel %vm327, %v538, %v540
      %v542 = vrot.slane %v276, 2
      %v543 = vrot.slane %v277, 2
      %v544 = vsel %vm408, %v542, %v543
      %v545 = vrot.slane %v278, 2
      %v546 = vsel %vm408, %v543, %v545
      %547 = vrot.lane.b32.xlu0 %v330, 4
      %v548 = vpop.permute.xlu0 %547
      %549 = vrot.lane.b32.xlu0 %v332, 4
      %v550 = vpop.permute.xlu0 %549
      %551 = vrot.lane.b32.xlu0 %v335, 4
      %v552 = vpop.permute.xlu0 %551
      %553 = vrot.lane.b32.xlu0 %v337, 4
      %v554 = vpop.permute.xlu0 %553
      %555 = vrot.lane.b32.xlu0 %v340, 4
      %v556 = vpop.permute.xlu0 %555
      %557 = vrot.lane.b32.xlu0 %v342, 4
      %v558 = vpop.permute.xlu0 %557
      %559 = vrot.lane.b32.xlu0 %v345, 4
      %v560 = vpop.permute.xlu0 %559
      %561 = vrot.lane.b32.xlu0 %v347, 4
      %v562 = vpop.permute.xlu0 %561
      %563 = vrot.lane.b32.xlu0 %v350, 4
      %v564 = vpop.permute.xlu0 %563
      %565 = vrot.lane.b32.xlu0 %v352, 4
      %v566 = vpop.permute.xlu0 %565
      %567 = vrot.lane.b32.xlu0 %v355, 4
      %v568 = vpop.permute.xlu0 %567
      %569 = vrot.lane.b32.xlu0 %v357, 4
      %v570 = vpop.permute.xlu0 %569
      %571 = vrot.lane.b32.xlu0 %v360, 4
      %v572 = vpop.permute.xlu0 %571
      %573 = vrot.lane.b32.xlu0 %v362, 4
      %v574 = vpop.permute.xlu0 %573
      %575 = vrot.lane.b32.xlu0 %v365, 4
      %v576 = vpop.permute.xlu0 %575
      %577 = vrot.lane.b32.xlu0 %v367, 4
      %v578 = vpop.permute.xlu0 %577
      %579 = vrot.lane.b32.xlu0 %v370, 4
      %v580 = vpop.permute.xlu0 %579
      %581 = vrot.lane.b32.xlu0 %v372, 4
      %v582 = vpop.permute.xlu0 %581
      %583 = vrot.lane.b32.xlu0 %v375, 4
      %v584 = vpop.permute.xlu0 %583
      %585 = vrot.lane.b32.xlu0 %v377, 4
      %v586 = vpop.permute.xlu0 %585
      %587 = vrot.lane.b32.xlu0 %v380, 4
      %v588 = vpop.permute.xlu0 %587
      %589 = vrot.lane.b32.xlu0 %v382, 4
      %v590 = vpop.permute.xlu0 %589
      %591 = vrot.lane.b32.xlu0 %v385, 4
      %v592 = vpop.permute.xlu0 %591
      %593 = vrot.lane.b32.xlu0 %v387, 4
      %v594 = vpop.permute.xlu0 %593
      %595 = vrot.lane.b32.xlu0 %v390, 4
      %v596 = vpop.permute.xlu0 %595
      %597 = vrot.lane.b32.xlu0 %v392, 4
      %v598 = vpop.permute.xlu0 %597
      %599 = vrot.lane.b32.xlu0 %v395, 4
      %v600 = vpop.permute.xlu0 %599
      %601 = vrot.lane.b32.xlu0 %v397, 4
      %v602 = vpop.permute.xlu0 %601
      %603 = vrot.lane.b32.xlu0 %v400, 4
      %v604 = vpop.permute.xlu0 %603
      %605 = vrot.lane.b32.xlu0 %v402, 4
      %v606 = vpop.permute.xlu0 %605
      %607 = vrot.lane.b32.xlu0 %v405, 4
      %v608 = vpop.permute.xlu0 %607
      %609 = vrot.lane.b32.xlu0 %v407, 4
      %v610 = vpop.permute.xlu0 %609
      %643 = vrot.lane.b32.xlu0 %v411, 8
      %v644 = vpop.permute.xlu0 %643
      %645 = vrot.lane.b32.xlu0 %v413, 8
      %v646 = vpop.permute.xlu0 %645
      %647 = vrot.lane.b32.xlu0 %v416, 8
      %v648 = vpop.permute.xlu0 %647
      %649 = vrot.lane.b32.xlu0 %v418, 8
      %v650 = vpop.permute.xlu0 %649
      %651 = vrot.lane.b32.xlu0 %v421, 8
      %v652 = vpop.permute.xlu0 %651
      %653 = vrot.lane.b32.xlu0 %v423, 8
      %v654 = vpop.permute.xlu0 %653
      %655 = vrot.lane.b32.xlu0 %v426, 8
      %v656 = vpop.permute.xlu0 %655
      %657 = vrot.lane.b32.xlu0 %v428, 8
      %v658 = vpop.permute.xlu0 %657
      %659 = vrot.lane.b32.xlu0 %v431, 8
      %v660 = vpop.permute.xlu0 %659
      %661 = vrot.lane.b32.xlu0 %v433, 8
      %v662 = vpop.permute.xlu0 %661
      %663 = vrot.lane.b32.xlu0 %v436, 8
      %v664 = vpop.permute.xlu0 %663
      %665 = vrot.lane.b32.xlu0 %v438, 8
      %v666 = vpop.permute.xlu0 %665
      %667 = vrot.lane.b32.xlu0 %v441, 8
      %v668 = vpop.permute.xlu0 %667
      %669 = vrot.lane.b32.xlu0 %v443, 8
      %v670 = vpop.permute.xlu0 %669
      %671 = vrot.lane.b32.xlu0 %v446, 8
      %v672 = vpop.permute.xlu0 %671
      %673 = vrot.lane.b32.xlu0 %v448, 8
      %v674 = vpop.permute.xlu0 %673
      %675 = vrot.lane.b32.xlu0 %v451, 8
      %v676 = vpop.permute.xlu0 %675
      %677 = vrot.lane.b32.xlu0 %v453, 8
      %v678 = vpop.permute.xlu0 %677
      %679 = vrot.lane.b32.xlu0 %v456, 8
      %v680 = vpop.permute.xlu0 %679
      %681 = vrot.lane.b32.xlu0 %v458, 8
      %v682 = vpop.permute.xlu0 %681
      %683 = vrot.lane.b32.xlu0 %v461, 8
      %v684 = vpop.permute.xlu0 %683
      %685 = vrot.lane.b32.xlu0 %v463, 8
      %v686 = vpop.permute.xlu0 %685
      %687 = vrot.lane.b32.xlu0 %v466, 8
      %v688 = vpop.permute.xlu0 %687
      %689 = vrot.lane.b32.xlu0 %v468, 8
      %v690 = vpop.permute.xlu0 %689
      %691 = vrot.lane.b32.xlu0 %v471, 8
      %v692 = vpop.permute.xlu0 %691
      %693 = vrot.lane.b32.xlu0 %v473, 8
      %v694 = vpop.permute.xlu0 %693
      %695 = vrot.lane.b32.xlu0 %v476, 8
      %v696 = vpop.permute.xlu0 %695
      %697 = vrot.lane.b32.xlu0 %v478, 8
      %v698 = vpop.permute.xlu0 %697
      %699 = vrot.lane.b32.xlu0 %v481, 8
      %v700 = vpop.permute.xlu0 %699
      %701 = vrot.lane.b32.xlu0 %v483, 8
      %v702 = vpop.permute.xlu0 %701
      %703 = vrot.lane.b32.xlu0 %v486, 8
      %v704 = vpop.permute.xlu0 %703
      %705 = vrot.lane.b32.xlu0 %v488, 8
      %v706 = vpop.permute.xlu0 %705
      %739 = vrot.lane.b32.xlu0 %v228, 12
      %v740 = vpop.permute.xlu0 %739
      %741 = vrot.lane.b32.xlu0 %v229, 12
      %v742 = vpop.permute.xlu0 %741
      %743 = vrot.lane.b32.xlu0 %v231, 12
      %v744 = vpop.permute.xlu0 %743
      %745 = vrot.lane.b32.xlu0 %v232, 12
      %v746 = vpop.permute.xlu0 %745
      %747 = vrot.lane.b32.xlu0 %v234, 12
      %v748 = vpop.permute.xlu0 %747
      %749 = vrot.lane.b32.xlu0 %v235, 12
      %v750 = vpop.permute.xlu0 %749
      %751 = vrot.lane.b32.xlu0 %v237, 12
      %v752 = vpop.permute.xlu0 %751
      %753 = vrot.lane.b32.xlu0 %v238, 12
      %v754 = vpop.permute.xlu0 %753
      %755 = vrot.lane.b32.xlu0 %v240, 12
      %v756 = vpop.permute.xlu0 %755
      %757 = vrot.lane.b32.xlu0 %v241, 12
      %v758 = vpop.permute.xlu0 %757
      %759 = vrot.lane.b32.xlu0 %v243, 12
      %v760 = vpop.permute.xlu0 %759
      %761 = vrot.lane.b32.xlu0 %v244, 12
      %v762 = vpop.permute.xlu0 %761
      %763 = vrot.lane.b32.xlu0 %v246, 12
      %v764 = vpop.permute.xlu0 %763
      %765 = vrot.lane.b32.xlu0 %v247, 12
      %v766 = vpop.permute.xlu0 %765
      %767 = vrot.lane.b32.xlu0 %v249, 12
      %v768 = vpop.permute.xlu0 %767
      %769 = vrot.lane.b32.xlu0 %v250, 12
      %v770 = vpop.permute.xlu0 %769
      %771 = vrot.lane.b32.xlu0 %v252, 12
      %v772 = vpop.permute.xlu0 %771
      %773 = vrot.lane.b32.xlu0 %v253, 12
      %v774 = vpop.permute.xlu0 %773
      %775 = vrot.lane.b32.xlu0 %v255, 12
      %v776 = vpop.permute.xlu0 %775
      %777 = vrot.lane.b32.xlu0 %v256, 12
      %v778 = vpop.permute.xlu0 %777
      %779 = vrot.lane.b32.xlu0 %v258, 12
      %v780 = vpop.permute.xlu0 %779
      %781 = vrot.lane.b32.xlu0 %v259, 12
      %v782 = vpop.permute.xlu0 %781
      %783 = vrot.lane.b32.xlu0 %v261, 12
      %v784 = vpop.permute.xlu0 %783
      %785 = vrot.lane.b32.xlu0 %v262, 12
      %v786 = vpop.permute.xlu0 %785
      %787 = vrot.lane.b32.xlu0 %v264, 12
      %v788 = vpop.permute.xlu0 %787
      %789 = vrot.lane.b32.xlu0 %v265, 12
      %v790 = vpop.permute.xlu0 %789
      %791 = vrot.lane.b32.xlu0 %v267, 12
      %v792 = vpop.permute.xlu0 %791
      %793 = vrot.lane.b32.xlu0 %v268, 12
      %v794 = vpop.permute.xlu0 %793
      %795 = vrot.lane.b32.xlu0 %v270, 12
      %v796 = vpop.permute.xlu0 %795
      %797 = vrot.lane.b32.xlu0 %v271, 12
      %v798 = vpop.permute.xlu0 %797
      %799 = vrot.lane.b32.xlu0 %v273, 12
      %v800 = vpop.permute.xlu0 %799
      %801 = vrot.lane.b32.xlu0 %v274, 12
      %v802 = vpop.permute.xlu0 %801
      %835 = vrot.lane.b32.xlu0 %v335, 16
      %v836 = vpop.permute.xlu0 %835
      %837 = vrot.lane.b32.xlu0 %v337, 16
      %v838 = vpop.permute.xlu0 %837
      %839 = vrot.lane.b32.xlu0 %v340, 16
      %v840 = vpop.permute.xlu0 %839
      %841 = vrot.lane.b32.xlu0 %v342, 16
      %v842 = vpop.permute.xlu0 %841
      %843 = vrot.lane.b32.xlu0 %v345, 16
      %v844 = vpop.permute.xlu0 %843
      %845 = vrot.lane.b32.xlu0 %v347, 16
      %v846 = vpop.permute.xlu0 %845
      %847 = vrot.lane.b32.xlu0 %v350, 16
      %v848 = vpop.permute.xlu0 %847
      %849 = vrot.lane.b32.xlu0 %v352, 16
      %v850 = vpop.permute.xlu0 %849
      %851 = vrot.lane.b32.xlu0 %v355, 16
      %v852 = vpop.permute.xlu0 %851
      %853 = vrot.lane.b32.xlu0 %v357, 16
      %v854 = vpop.permute.xlu0 %853
      %855 = vrot.lane.b32.xlu0 %v360, 16
      %v856 = vpop.permute.xlu0 %855
      %857 = vrot.lane.b32.xlu0 %v362, 16
      %v858 = vpop.permute.xlu0 %857
      %859 = vrot.lane.b32.xlu0 %v365, 16
      %v860 = vpop.permute.xlu0 %859
      %861 = vrot.lane.b32.xlu0 %v367, 16
      %v862 = vpop.permute.xlu0 %861
      %863 = vrot.lane.b32.xlu0 %v370, 16
      %v864 = vpop.permute.xlu0 %863
      %865 = vrot.lane.b32.xlu0 %v372, 16
      %v866 = vpop.permute.xlu0 %865
      %867 = vrot.lane.b32.xlu0 %v375, 16
      %v868 = vpop.permute.xlu0 %867
      %869 = vrot.lane.b32.xlu0 %v377, 16
      %v870 = vpop.permute.xlu0 %869
      %871 = vrot.lane.b32.xlu0 %v380, 16
      %v872 = vpop.permute.xlu0 %871
      %873 = vrot.lane.b32.xlu0 %v382, 16
      %v874 = vpop.permute.xlu0 %873
      %875 = vrot.lane.b32.xlu0 %v385, 16
      %v876 = vpop.permute.xlu0 %875
      %877 = vrot.lane.b32.xlu0 %v387, 16
      %v878 = vpop.permute.xlu0 %877
      %879 = vrot.lane.b32.xlu0 %v390, 16
      %v880 = vpop.permute.xlu0 %879
      %881 = vrot.lane.b32.xlu0 %v392, 16
      %v882 = vpop.permute.xlu0 %881
      %883 = vrot.lane.b32.xlu0 %v395, 16
      %v884 = vpop.permute.xlu0 %883
      %885 = vrot.lane.b32.xlu0 %v397, 16
      %v886 = vpop.permute.xlu0 %885
      %887 = vrot.lane.b32.xlu0 %v400, 16
      %v888 = vpop.permute.xlu0 %887
      %889 = vrot.lane.b32.xlu0 %v402, 16
      %v890 = vpop.permute.xlu0 %889
      %891 = vrot.lane.b32.xlu0 %v405, 16
      %v892 = vpop.permute.xlu0 %891
      %893 = vrot.lane.b32.xlu0 %v407, 16
      %v894 = vpop.permute.xlu0 %893
      %895 = vrot.lane.b32.xlu0 %v494, 16
      %v896 = vpop.permute.xlu0 %895
      %897 = vrot.lane.b32.xlu0 %v496, 16
      %v898 = vpop.permute.xlu0 %897
      %931 = vrot.lane.b32.xlu0 %v416, 20
      %v932 = vpop.permute.xlu0 %931
      %933 = vrot.lane.b32.xlu0 %v418, 20
      %v934 = vpop.permute.xlu0 %933
      %935 = vrot.lane.b32.xlu0 %v421, 20
      %v936 = vpop.permute.xlu0 %935
      %937 = vrot.lane.b32.xlu0 %v423, 20
      %v938 = vpop.permute.xlu0 %937
      %939 = vrot.lane.b32.xlu0 %v426, 20
      %v940 = vpop.permute.xlu0 %939
      %941 = vrot.lane.b32.xlu0 %v428, 20
      %v942 = vpop.permute.xlu0 %941
      %943 = vrot.lane.b32.xlu0 %v431, 20
      %v944 = vpop.permute.xlu0 %943
      %945 = vrot.lane.b32.xlu0 %v433, 20
      %v946 = vpop.permute.xlu0 %945
      %947 = vrot.lane.b32.xlu0 %v436, 20
      %v948 = vpop.permute.xlu0 %947
      %949 = vrot.lane.b32.xlu0 %v438, 20
      %v950 = vpop.permute.xlu0 %949
      %951 = vrot.lane.b32.xlu0 %v441, 20
      %v952 = vpop.permute.xlu0 %951
      %953 = vrot.lane.b32.xlu0 %v443, 20
      %v954 = vpop.permute.xlu0 %953
      %955 = vrot.lane.b32.xlu0 %v446, 20
      %v956 = vpop.permute.xlu0 %955
      %957 = vrot.lane.b32.xlu0 %v448, 20
      %v958 = vpop.permute.xlu0 %957
      %959 = vrot.lane.b32.xlu0 %v451, 20
      %v960 = vpop.permute.xlu0 %959
      %961 = vrot.lane.b32.xlu0 %v453, 20
      %v962 = vpop.permute.xlu0 %961
      %963 = vrot.lane.b32.xlu0 %v456, 20
      %v964 = vpop.permute.xlu0 %963
      %965 = vrot.lane.b32.xlu0 %v458, 20
      %v966 = vpop.permute.xlu0 %965
      %967 = vrot.lane.b32.xlu0 %v461, 20
      %v968 = vpop.permute.xlu0 %967
      %969 = vrot.lane.b32.xlu0 %v463, 20
      %v970 = vpop.permute.xlu0 %969
      %971 = vrot.lane.b32.xlu0 %v466, 20
      %v972 = vpop.permute.xlu0 %971
      %973 = vrot.lane.b32.xlu0 %v468, 20
      %v974 = vpop.permute.xlu0 %973
      %975 = vrot.lane.b32.xlu0 %v471, 20
      %v976 = vpop.permute.xlu0 %975
      %977 = vrot.lane.b32.xlu0 %v473, 20
      %v978 = vpop.permute.xlu0 %977
      %979 = vrot.lane.b32.xlu0 %v476, 20
      %v980 = vpop.permute.xlu0 %979
      %981 = vrot.lane.b32.xlu0 %v478, 20
      %v982 = vpop.permute.xlu0 %981
      %983 = vrot.lane.b32.xlu0 %v481, 20
      %v984 = vpop.permute.xlu0 %983
      %985 = vrot.lane.b32.xlu0 %v483, 20
      %v986 = vpop.permute.xlu0 %985
      %987 = vrot.lane.b32.xlu0 %v486, 20
      %v988 = vpop.permute.xlu0 %987
      %989 = vrot.lane.b32.xlu0 %v488, 20
      %v990 = vpop.permute.xlu0 %989
      %991 = vrot.lane.b32.xlu0 %v531, 20
      %v992 = vpop.permute.xlu0 %991
      %993 = vrot.lane.b32.xlu0 %v533, 20
      %v994 = vpop.permute.xlu0 %993
      %1027 = vrot.lane.b32.xlu0 %v231, 24
      %v1028 = vpop.permute.xlu0 %1027
      %1029 = vrot.lane.b32.xlu0 %v232, 24
      %v1030 = vpop.permute.xlu0 %1029
      %1031 = vrot.lane.b32.xlu0 %v234, 24
      %v1032 = vpop.permute.xlu0 %1031
      %1033 = vrot.lane.b32.xlu0 %v235, 24
      %v1034 = vpop.permute.xlu0 %1033
      %1035 = vrot.lane.b32.xlu0 %v237, 24
      %v1036 = vpop.permute.xlu0 %1035
      %1037 = vrot.lane.b32.xlu0 %v238, 24
      %v1038 = vpop.permute.xlu0 %1037
      %1039 = vrot.lane.b32.xlu0 %v240, 24
      %v1040 = vpop.permute.xlu0 %1039
      %1041 = vrot.lane.b32.xlu0 %v241, 24
      %v1042 = vpop.permute.xlu0 %1041
      %1043 = vrot.lane.b32.xlu0 %v243, 24
      %v1044 = vpop.permute.xlu0 %1043
      %1045 = vrot.lane.b32.xlu0 %v244, 24
      %v1046 = vpop.permute.xlu0 %1045
      %1047 = vrot.lane.b32.xlu0 %v246, 24
      %v1048 = vpop.permute.xlu0 %1047
      %1049 = vrot.lane.b32.xlu0 %v247, 24
      %v1050 = vpop.permute.xlu0 %1049
      %1051 = vrot.lane.b32.xlu0 %v249, 24
      %v1052 = vpop.permute.xlu0 %1051
      %1053 = vrot.lane.b32.xlu0 %v250, 24
      %v1054 = vpop.permute.xlu0 %1053
      %1055 = vrot.lane.b32.xlu0 %v252, 24
      %v1056 = vpop.permute.xlu0 %1055
      %1057 = vrot.lane.b32.xlu0 %v253, 24
      %v1058 = vpop.permute.xlu0 %1057
      %1059 = vrot.lane.b32.xlu0 %v255, 24
      %v1060 = vpop.permute.xlu0 %1059
      %1061 = vrot.lane.b32.xlu0 %v256, 24
      %v1062 = vpop.permute.xlu0 %1061
      %1063 = vrot.lane.b32.xlu0 %v258, 24
      %v1064 = vpop.permute.xlu0 %1063
      %1065 = vrot.lane.b32.xlu0 %v259, 24
      %v1066 = vpop.permute.xlu0 %1065
      %1067 = vrot.lane.b32.xlu0 %v261, 24
      %v1068 = vpop.permute.xlu0 %1067
      %1069 = vrot.lane.b32.xlu0 %v262, 24
      %v1070 = vpop.permute.xlu0 %1069
      %1071 = vrot.lane.b32.xlu0 %v264, 24
      %v1072 = vpop.permute.xlu0 %1071
      %1073 = vrot.lane.b32.xlu0 %v265, 24
      %v1074 = vpop.permute.xlu0 %1073
      %1075 = vrot.lane.b32.xlu0 %v267, 24
      %v1076 = vpop.permute.xlu0 %1075
      %1077 = vrot.lane.b32.xlu0 %v268, 24
      %v1078 = vpop.permute.xlu0 %1077
      %1079 = vrot.lane.b32.xlu0 %v270, 24
      %v1080 = vpop.permute.xlu0 %1079
      %1081 = vrot.lane.b32.xlu0 %v271, 24
      %v1082 = vpop.permute.xlu0 %1081
      %1083 = vrot.lane.b32.xlu0 %v273, 24
      %v1084 = vpop.permute.xlu0 %1083
      %1085 = vrot.lane.b32.xlu0 %v274, 24
      %v1086 = vpop.permute.xlu0 %1085
      %1087 = vrot.lane.b32.xlu0 %v276, 24
      %v1088 = vpop.permute.xlu0 %1087
      %1089 = vrot.lane.b32.xlu0 %v277, 24
      %v1090 = vpop.permute.xlu0 %1089
      %1123 = vrot.lane.b32.xlu0 %v340, 28
      %v1124 = vpop.permute.xlu0 %1123
      %1125 = vrot.lane.b32.xlu0 %v342, 28
      %v1126 = vpop.permute.xlu0 %1125
      %1127 = vrot.lane.b32.xlu0 %v345, 28
      %v1128 = vpop.permute.xlu0 %1127
      %1129 = vrot.lane.b32.xlu0 %v347, 28
      %v1130 = vpop.permute.xlu0 %1129
      %1131 = vrot.lane.b32.xlu0 %v350, 28
      %v1132 = vpop.permute.xlu0 %1131
      %1133 = vrot.lane.b32.xlu0 %v352, 28
      %v1134 = vpop.permute.xlu0 %1133
      %1135 = vrot.lane.b32.xlu0 %v355, 28
      %v1136 = vpop.permute.xlu0 %1135
      %1137 = vrot.lane.b32.xlu0 %v357, 28
      %v1138 = vpop.permute.xlu0 %1137
      %1139 = vrot.lane.b32.xlu0 %v360, 28
      %v1140 = vpop.permute.xlu0 %1139
      %1141 = vrot.lane.b32.xlu0 %v362, 28
      %v1142 = vpop.permute.xlu0 %1141
      %1143 = vrot.lane.b32.xlu0 %v365, 28
      %v1144 = vpop.permute.xlu0 %1143
      %1145 = vrot.lane.b32.xlu0 %v367, 28
      %v1146 = vpop.permute.xlu0 %1145
      %1147 = vrot.lane.b32.xlu0 %v370, 28
      %v1148 = vpop.permute.xlu0 %1147
      %1149 = vrot.lane.b32.xlu0 %v372, 28
      %v1150 = vpop.permute.xlu0 %1149
      %1151 = vrot.lane.b32.xlu0 %v375, 28
      %v1152 = vpop.permute.xlu0 %1151
      %1153 = vrot.lane.b32.xlu0 %v377, 28
      %v1154 = vpop.permute.xlu0 %1153
      %1155 = vrot.lane.b32.xlu0 %v380, 28
      %v1156 = vpop.permute.xlu0 %1155
      %1157 = vrot.lane.b32.xlu0 %v382, 28
      %v1158 = vpop.permute.xlu0 %1157
      %1159 = vrot.lane.b32.xlu0 %v385, 28
      %v1160 = vpop.permute.xlu0 %1159
      %1161 = vrot.lane.b32.xlu0 %v387, 28
      %v1162 = vpop.permute.xlu0 %1161
      %1163 = vrot.lane.b32.xlu0 %v390, 28
      %v1164 = vpop.permute.xlu0 %1163
      %1165 = vrot.lane.b32.xlu0 %v392, 28
      %v1166 = vpop.permute.xlu0 %1165
      %1167 = vrot.lane.b32.xlu0 %v395, 28
      %v1168 = vpop.permute.xlu0 %1167
      %1169 = vrot.lane.b32.xlu0 %v397, 28
      %v1170 = vpop.permute.xlu0 %1169
      %1171 = vrot.lane.b32.xlu0 %v400, 28
      %v1172 = vpop.permute.xlu0 %1171
      %1173 = vrot.lane.b32.xlu0 %v402, 28
      %v1174 = vpop.permute.xlu0 %1173
      %1175 = vrot.lane.b32.xlu0 %v405, 28
      %v1176 = vpop.permute.xlu0 %1175
      %1177 = vrot.lane.b32.xlu0 %v407, 28
      %v1178 = vpop.permute.xlu0 %1177
      %1179 = vrot.lane.b32.xlu0 %v494, 28
      %v1180 = vpop.permute.xlu0 %1179
      %1181 = vrot.lane.b32.xlu0 %v496, 28
      %v1182 = vpop.permute.xlu0 %1181
      %1183 = vrot.lane.b32.xlu0 %v539, 28
      %v1184 = vpop.permute.xlu0 %1183
      %1185 = vrot.lane.b32.xlu0 %v541, 28
      %v1186 = vpop.permute.xlu0 %1185
      %1219 = vrot.lane.b32.xlu0 %v421, 32
      %v1220 = vpop.permute.xlu0 %1219
      %1221 = vrot.lane.b32.xlu0 %v423, 32
      %v1222 = vpop.permute.xlu0 %1221
      %1223 = vrot.lane.b32.xlu0 %v426, 32
      %v1224 = vpop.permute.xlu0 %1223
      %1225 = vrot.lane.b32.xlu0 %v428, 32
      %v1226 = vpop.permute.xlu0 %1225
      %1227 = vrot.lane.b32.xlu0 %v431, 32
      %v1228 = vpop.permute.xlu0 %1227
      %1229 = vrot.lane.b32.xlu0 %v433, 32
      %v1230 = vpop.permute.xlu0 %1229
      %1231 = vrot.lane.b32.xlu0 %v436, 32
      %v1232 = vpop.permute.xlu0 %1231
      %1233 = vrot.lane.b32.xlu0 %v438, 32
      %v1234 = vpop.permute.xlu0 %1233
      %1235 = vrot.lane.b32.xlu0 %v441, 32
      %v1236 = vpop.permute.xlu0 %1235
      %1237 = vrot.lane.b32.xlu0 %v443, 32
      %v1238 = vpop.permute.xlu0 %1237
      %1239 = vrot.lane.b32.xlu0 %v446, 32
      %v1240 = vpop.permute.xlu0 %1239
      %1241 = vrot.lane.b32.xlu0 %v448, 32
      %v1242 = vpop.permute.xlu0 %1241
      %1243 = vrot.lane.b32.xlu0 %v451, 32
      %v1244 = vpop.permute.xlu0 %1243
      %1245 = vrot.lane.b32.xlu0 %v453, 32
      %v1246 = vpop.permute.xlu0 %1245
      %1247 = vrot.lane.b32.xlu0 %v456, 32
      %v1248 = vpop.permute.xlu0 %1247
      %1249 = vrot.lane.b32.xlu0 %v458, 32
      %v1250 = vpop.permute.xlu0 %1249
      %1251 = vrot.lane.b32.xlu0 %v461, 32
      %v1252 = vpop.permute.xlu0 %1251
      %1253 = vrot.lane.b32.xlu0 %v463, 32
      %v1254 = vpop.permute.xlu0 %1253
      %1255 = vrot.lane.b32.xlu0 %v466, 32
      %v1256 = vpop.permute.xlu0 %1255
      %1257 = vrot.lane.b32.xlu0 %v468, 32
      %v1258 = vpop.permute.xlu0 %1257
      %1259 = vrot.lane.b32.xlu0 %v471, 32
      %v1260 = vpop.permute.xlu0 %1259
      %1261 = vrot.lane.b32.xlu0 %v473, 32
      %v1262 = vpop.permute.xlu0 %1261
      %1263 = vrot.lane.b32.xlu0 %v476, 32
      %v1264 = vpop.permute.xlu0 %1263
      %1265 = vrot.lane.b32.xlu0 %v478, 32
      %v1266 = vpop.permute.xlu0 %1265
      %1267 = vrot.lane.b32.xlu0 %v481, 32
      %v1268 = vpop.permute.xlu0 %1267
      %1269 = vrot.lane.b32.xlu0 %v483, 32
      %v1270 = vpop.permute.xlu0 %1269
      %1271 = vrot.lane.b32.xlu0 %v486, 32
      %v1272 = vpop.permute.xlu0 %1271
      %1273 = vrot.lane.b32.xlu0 %v488, 32
      %v1274 = vpop.permute.xlu0 %1273
      %1275 = vrot.lane.b32.xlu0 %v531, 32
      %v1276 = vpop.permute.xlu0 %1275
      %1277 = vrot.lane.b32.xlu0 %v533, 32
      %v1278 = vpop.permute.xlu0 %1277
      %1279 = vrot.lane.b32.xlu0 %v544, 32
      %v1280 = vpop.permute.xlu0 %1279
      %1281 = vrot.lane.b32.xlu0 %v546, 32
      %v1282 = vpop.permute.xlu0 %1281
      %vm1315 = vcmask 31744
      %v1316 = vsel %vm1315, %v225, %v548
      %v1317 = vsel %vm1315, %v226, %v550
      %v1318 = vsel %vm1315, %v228, %v552
      %v1319 = vsel %vm1315, %v229, %v554
      %v1320 = vsel %vm1315, %v231, %v556
      %v1321 = vsel %vm1315, %v232, %v558
      %v1322 = vsel %vm1315, %v234, %v560
      %v1323 = vsel %vm1315, %v235, %v562
      %v1324 = vsel %vm1315, %v237, %v564
      %v1325 = vsel %vm1315, %v238, %v566
      %v1326 = vsel %vm1315, %v240, %v568
      %v1327 = vsel %vm1315, %v241, %v570
      %v1328 = vsel %vm1315, %v243, %v572
      %v1329 = vsel %vm1315, %v244, %v574
      %v1330 = vsel %vm1315, %v246, %v576
      %v1331 = vsel %vm1315, %v247, %v578
      %v1332 = vsel %vm1315, %v249, %v580
      %v1333 = vsel %vm1315, %v250, %v582
      %v1334 = vsel %vm1315, %v252, %v584
      %v1335 = vsel %vm1315, %v253, %v586
      %v1336 = vsel %vm1315, %v255, %v588
      %v1337 = vsel %vm1315, %v256, %v590
      %v1338 = vsel %vm1315, %v258, %v592
      %v1339 = vsel %vm1315, %v259, %v594
      %v1340 = vsel %vm1315, %v261, %v596
      %v1341 = vsel %vm1315, %v262, %v598
      %v1342 = vsel %vm1315, %v264, %v600
      %v1343 = vsel %vm1315, %v265, %v602
      %v1344 = vsel %vm1315, %v267, %v604
      %v1345 = vsel %vm1315, %v268, %v606
      %v1346 = vsel %vm1315, %v270, %v608
      %v1347 = vsel %vm1315, %v271, %v610
      %vm1348 = vcmask 64512
      %v1349 = vsel %vm1348, %v1316, %v644
      %v1350 = vsel %vm1348, %v1317, %v646
      %v1351 = vsel %vm1348, %v1318, %v648
      %v1352 = vsel %vm1348, %v1319, %v650
      %v1353 = vsel %vm1348, %v1320, %v652
      %v1354 = vsel %vm1348, %v1321, %v654
      %v1355 = vsel %vm1348, %v1322, %v656
      %v1356 = vsel %vm1348, %v1323, %v658
      %v1357 = vsel %vm1348, %v1324, %v660
      %v1358 = vsel %vm1348, %v1325, %v662
      %v1359 = vsel %vm1348, %v1326, %v664
      %v1360 = vsel %vm1348, %v1327, %v666
      %v1361 = vsel %vm1348, %v1328, %v668
      %v1362 = vsel %vm1348, %v1329, %v670
      %v1363 = vsel %vm1348, %v1330, %v672
      %v1364 = vsel %vm1348, %v1331, %v674
      %v1365 = vsel %vm1348, %v1332, %v676
      %v1366 = vsel %vm1348, %v1333, %v678
      %v1367 = vsel %vm1348, %v1334, %v680
      %v1368 = vsel %vm1348, %v1335, %v682
      %v1369 = vsel %vm1348, %v1336, %v684
      %v1370 = vsel %vm1348, %v1337, %v686
      %v1371 = vsel %vm1348, %v1338, %v688
      %v1372 = vsel %vm1348, %v1339, %v690
      %v1373 = vsel %vm1348, %v1340, %v692
      %v1374 = vsel %vm1348, %v1341, %v694
      %v1375 = vsel %vm1348, %v1342, %v696
      %v1376 = vsel %vm1348, %v1343, %v698
      %v1377 = vsel %vm1348, %v1344, %v700
      %v1378 = vsel %vm1348, %v1345, %v702
      %v1379 = vsel %vm1348, %v1346, %v704
      %v1380 = vsel %vm1348, %v1347, %v706
      %vm1381 = vcmask 97280
      %v1382 = vsel %vm1381, %v1349, %v740
      %v1383 = vsel %vm1381, %v1350, %v742
      %v1384 = vsel %vm1381, %v1351, %v744
      %v1385 = vsel %vm1381, %v1352, %v746
      %v1386 = vsel %vm1381, %v1353, %v748
      %v1387 = vsel %vm1381, %v1354, %v750
      %v1388 = vsel %vm1381, %v1355, %v752
      %v1389 = vsel %vm1381, %v1356, %v754
      %v1390 = vsel %vm1381, %v1357, %v756
      %v1391 = vsel %vm1381, %v1358, %v758
      %v1392 = vsel %vm1381, %v1359, %v760
      %v1393 = vsel %vm1381, %v1360, %v762
      %v1394 = vsel %vm1381, %v1361, %v764
      %v1395 = vsel %vm1381, %v1362, %v766
      %v1396 = vsel %vm1381, %v1363, %v768
      %v1397 = vsel %vm1381, %v1364, %v770
      %v1398 = vsel %vm1381, %v1365, %v772
      %v1399 = vsel %vm1381, %v1366, %v774
      %v1400 = vsel %vm1381, %v1367, %v776
      %v1401 = vsel %vm1381, %v1368, %v778
      %v1402 = vsel %vm1381, %v1369, %v780
      %v1403 = vsel %vm1381, %v1370, %v782
      %v1404 = vsel %vm1381, %v1371, %v784
      %v1405 = vsel %vm1381, %v1372, %v786
      %v1406 = vsel %vm1381, %v1373, %v788
      %v1407 = vsel %vm1381, %v1374, %v790
      %v1408 = vsel %vm1381, %v1375, %v792
      %v1409 = vsel %vm1381, %v1376, %v794
      %v1410 = vsel %vm1381, %v1377, %v796
      %v1411 = vsel %vm1381, %v1378, %v798
      %v1412 = vsel %vm1381, %v1379, %v800
      %v1413 = vsel %vm1381, %v1380, %v802
      %vm1414 = vcmask 130048
      %v1415 = vsel %vm1414, %v1382, %v836
      %v1416 = vsel %vm1414, %v1383, %v838
      %v1417 = vsel %vm1414, %v1384, %v840
      %v1418 = vsel %vm1414, %v1385, %v842
      %v1419 = vsel %vm1414, %v1386, %v844
      %v1420 = vsel %vm1414, %v1387, %v846
      %v1421 = vsel %vm1414, %v1388, %v848
      %v1422 = vsel %vm1414, %v1389, %v850
      %v1423 = vsel %vm1414, %v1390, %v852
      %v1424 = vsel %vm1414, %v1391, %v854
      %v1425 = vsel %vm1414, %v1392, %v856
      %v1426 = vsel %vm1414, %v1393, %v858
      %v1427 = vsel %vm1414, %v1394, %v860
      %v1428 = vsel %vm1414, %v1395, %v862
      %v1429 = vsel %vm1414, %v1396, %v864
      %v1430 = vsel %vm1414, %v1397, %v866
      %v1431 = vsel %vm1414, %v1398, %v868
      %v1432 = vsel %vm1414, %v1399, %v870
      %v1433 = vsel %vm1414, %v1400, %v872
      %v1434 = vsel %vm1414, %v1401, %v874
      %v1435 = vsel %vm1414, %v1402, %v876
      %v1436 = vsel %vm1414, %v1403, %v878
      %v1437 = vsel %vm1414, %v1404, %v880
      %v1438 = vsel %vm1414, %v1405, %v882
      %v1439 = vsel %vm1414, %v1406, %v884
      %v1440 = vsel %vm1414, %v1407, %v886
      %v1441 = vsel %vm1414, %v1408, %v888
      %v1442 = vsel %vm1414, %v1409, %v890
      %v1443 = vsel %vm1414, %v1410, %v892
      %v1444 = vsel %vm1414, %v1411, %v894
      %v1445 = vsel %vm1414, %v1412, %v896
      %v1446 = vsel %vm1414, %v1413, %v898
      %vm1447 = vcmask 162816
      %v1448 = vsel %vm1447, %v1415, %v932
      %v1449 = vsel %vm1447, %v1416, %v934
      %v1450 = vsel %vm1447, %v1417, %v936
      %v1451 = vsel %vm1447, %v1418, %v938
      %v1452 = vsel %vm1447, %v1419, %v940
      %v1453 = vsel %vm1447, %v1420, %v942
      %v1454 = vsel %vm1447, %v1421, %v944
      %v1455 = vsel %vm1447, %v1422, %v946
      %v1456 = vsel %vm1447, %v1423, %v948
      %v1457 = vsel %vm1447, %v1424, %v950
      %v1458 = vsel %vm1447, %v1425, %v952
      %v1459 = vsel %vm1447, %v1426, %v954
      %v1460 = vsel %vm1447, %v1427, %v956
      %v1461 = vsel %vm1447, %v1428, %v958
      %v1462 = vsel %vm1447, %v1429, %v960
      %v1463 = vsel %vm1447, %v1430, %v962
      %v1464 = vsel %vm1447, %v1431, %v964
      %v1465 = vsel %vm1447, %v1432, %v966
      %v1466 = vsel %vm1447, %v1433, %v968
      %v1467 = vsel %vm1447, %v1434, %v970
      %v1468 = vsel %vm1447, %v1435, %v972
      %v1469 = vsel %vm1447, %v1436, %v974
      %v1470 = vsel %vm1447, %v1437, %v976
      %v1471 = vsel %vm1447, %v1438, %v978
      %v1472 = vsel %vm1447, %v1439, %v980
      %v1473 = vsel %vm1447, %v1440, %v982
      %v1474 = vsel %vm1447, %v1441, %v984
      %v1475 = vsel %vm1447, %v1442, %v986
      %v1476 = vsel %vm1447, %v1443, %v988
      %v1477 = vsel %vm1447, %v1444, %v990
      %v1478 = vsel %vm1447, %v1445, %v992
      %v1479 = vsel %vm1447, %v1446, %v994
      %vm1480 = vcmask 195584
      %v1481 = vsel %vm1480, %v1448, %v1028
      %v1482 = vsel %vm1480, %v1449, %v1030
      %v1483 = vsel %vm1480, %v1450, %v1032
      %v1484 = vsel %vm1480, %v1451, %v1034
      %v1485 = vsel %vm1480, %v1452, %v1036
      %v1486 = vsel %vm1480, %v1453, %v1038
      %v1487 = vsel %vm1480, %v1454, %v1040
      %v1488 = vsel %vm1480, %v1455, %v1042
      %v1489 = vsel %vm1480, %v1456, %v1044
      %v1490 = vsel %vm1480, %v1457, %v1046
      %v1491 = vsel %vm1480, %v1458, %v1048
      %v1492 = vsel %vm1480, %v1459, %v1050
      %v1493 = vsel %vm1480, %v1460, %v1052
      %v1494 = vsel %vm1480, %v1461, %v1054
      %v1495 = vsel %vm1480, %v1462, %v1056
      %v1496 = vsel %vm1480, %v1463, %v1058
      %v1497 = vsel %vm1480, %v1464, %v1060
      %v1498 = vsel %vm1480, %v1465, %v1062
      %v1499 = vsel %vm1480, %v1466, %v1064
      %v1500 = vsel %vm1480, %v1467, %v1066
      %v1501 = vsel %vm1480, %v1468, %v1068
      %v1502 = vsel %vm1480, %v1469, %v1070
      %v1503 = vsel %vm1480, %v1470, %v1072
      %v1504 = vsel %vm1480, %v1471, %v1074
      %v1505 = vsel %vm1480, %v1472, %v1076
      %v1506 = vsel %vm1480, %v1473, %v1078
      %v1507 = vsel %vm1480, %v1474, %v1080
      %v1508 = vsel %vm1480, %v1475, %v1082
      %v1509 = vsel %vm1480, %v1476, %v1084
      %v1510 = vsel %vm1480, %v1477, %v1086
      %v1511 = vsel %vm1480, %v1478, %v1088
      %v1512 = vsel %vm1480, %v1479, %v1090
      %vm1513 = vcmask 228352
      %v1514 = vsel %vm1513, %v1481, %v1124
      %v1515 = vsel %vm1513, %v1482, %v1126
      %v1516 = vsel %vm1513, %v1483, %v1128
      %v1517 = vsel %vm1513, %v1484, %v1130
      %v1518 = vsel %vm1513, %v1485, %v1132
      %v1519 = vsel %vm1513, %v1486, %v1134
      %v1520 = vsel %vm1513, %v1487, %v1136
      %v1521 = vsel %vm1513, %v1488, %v1138
      %v1522 = vsel %vm1513, %v1489, %v1140
      %v1523 = vsel %vm1513, %v1490, %v1142
      %v1524 = vsel %vm1513, %v1491, %v1144
      %v1525 = vsel %vm1513, %v1492, %v1146
      %v1526 = vsel %vm1513, %v1493, %v1148
      %v1527 = vsel %vm1513, %v1494, %v1150
      %v1528 = vsel %vm1513, %v1495, %v1152
      %v1529 = vsel %vm1513, %v1496, %v1154
      %v1530 = vsel %vm1513, %v1497, %v1156
      %v1531 = vsel %vm1513, %v1498, %v1158
      %v1532 = vsel %vm1513, %v1499, %v1160
      %v1533 = vsel %vm1513, %v1500, %v1162
      %v1534 = vsel %vm1513, %v1501, %v1164
      %v1535 = vsel %vm1513, %v1502, %v1166
      %v1536 = vsel %vm1513, %v1503, %v1168
      %v1537 = vsel %vm1513, %v1504, %v1170
      %v1538 = vsel %vm1513, %v1505, %v1172
      %v1539 = vsel %vm1513, %v1506, %v1174
      %v1540 = vsel %vm1513, %v1507, %v1176
      %v1541 = vsel %vm1513, %v1508, %v1178
      %v1542 = vsel %vm1513, %v1509, %v1180
      %v1543 = vsel %vm1513, %v1510, %v1182
      %v1544 = vsel %vm1513, %v1511, %v1184
      %v1545 = vsel %vm1513, %v1512, %v1186
      %vm1546 = vcmask 261120
      %v1547 = vsel %vm1546, %v1514, %v1220
      %v1548 = vsel %vm1546, %v1515, %v1222
      %v1549 = vsel %vm1546, %v1516, %v1224
      %v1550 = vsel %vm1546, %v1517, %v1226
      %v1551 = vsel %vm1546, %v1518, %v1228
      %v1552 = vsel %vm1546, %v1519, %v1230
      %v1553 = vsel %vm1546, %v1520, %v1232
      %v1554 = vsel %vm1546, %v1521, %v1234
      %v1555 = vsel %vm1546, %v1522, %v1236
      %v1556 = vsel %vm1546, %v1523, %v1238
      %v1557 = vsel %vm1546, %v1524, %v1240
      %v1558 = vsel %vm1546, %v1525, %v1242
      %v1559 = vsel %vm1546, %v1526, %v1244
      %v1560 = vsel %vm1546, %v1527, %v1246
      %v1561 = vsel %vm1546, %v1528, %v1248
      %v1562 = vsel %vm1546, %v1529, %v1250
      %v1563 = vsel %vm1546, %v1530, %v1252
      %v1564 = vsel %vm1546, %v1531, %v1254
      %v1565 = vsel %vm1546, %v1532, %v1256
      %v1566 = vsel %vm1546, %v1533, %v1258
      %v1567 = vsel %vm1546, %v1534, %v1260
      %v1568 = vsel %vm1546, %v1535, %v1262
      %v1569 = vsel %vm1546, %v1536, %v1264
      %v1570 = vsel %vm1546, %v1537, %v1266
      %v1571 = vsel %vm1546, %v1538, %v1268
      %v1572 = vsel %vm1546, %v1539, %v1270
      %v1573 = vsel %vm1546, %v1540, %v1272
      %v1574 = vsel %vm1546, %v1541, %v1274
      %v1575 = vsel %vm1546, %v1542, %v1276
      %v1576 = vsel %vm1546, %v1543, %v1278
      %v1577 = vsel %vm1546, %v1544, %v1280
      %v1578 = vsel %vm1546, %v1545, %v1282
      %v1579 = vld [vmem:[%s1] sm:$0xff]
      %v1580 = vld [vmem:[%s1 + $0x8] sm:$0xff]
      %v1581 = vld [vmem:[%s1 + $0x10] sm:$0xff]
      %v1582 = vld [vmem:[%s1 + $0x18] sm:$0xff]
      %v1583 = vld [vmem:[%s1 + $0x20] sm:$0xf]
      %v1584 = vld [vmem:[%s2] sm:$0x1]
      %v1586 = vlaneseq
      %v1587 = vshrl.u32 %v1586, 7
      %v1588 = vsub.s32 0, %v1587
      %v1589 = vrot.slane %v1584, %v1588
      %vm1591 = vcmask 293888
      %v1593 = vsel %vm1591, %v1547, 0
      %v1596 = vsel %vm1591, %v1548, 0
      %v1599 = vsel %vm1591, %v1549, 0
      %v1602 = vsel %vm1591, %v1550, 0
      %v1605 = vsel %vm1591, %v1551, 0
      %v1608 = vsel %vm1591, %v1552, 0
      %v1611 = vsel %vm1591, %v1553, 0
      %v1614 = vsel %vm1591, %v1554, 0
      %v1617 = vsel %vm1591, %v1555, 0
      %v1620 = vsel %vm1591, %v1556, 0
      %v1623 = vsel %vm1591, %v1557, 0
      %v1626 = vsel %vm1591, %v1558, 0
      %v1629 = vsel %vm1591, %v1559, 0
      %v1632 = vsel %vm1591, %v1560, 0
      %v1635 = vsel %vm1591, %v1561, 0
      %v1638 = vsel %vm1591, %v1562, 0
      %v1641 = vsel %vm1591, %v1563, 0
      %v1644 = vsel %vm1591, %v1564, 0
      %v1647 = vsel %vm1591, %v1565, 0
      %v1650 = vsel %vm1591, %v1566, 0
      %v1653 = vsel %vm1591, %v1567, 0
      %v1656 = vsel %vm1591, %v1568, 0
      %v1659 = vsel %vm1591, %v1569, 0
      %v1662 = vsel %vm1591, %v1570, 0
      %v1665 = vsel %vm1591, %v1571, 0
      %v1668 = vsel %vm1591, %v1572, 0
      %v1671 = vsel %vm1591, %v1573, 0
      %v1674 = vsel %vm1591, %v1574, 0
      %v1677 = vsel %vm1591, %v1575, 0
      %v1680 = vsel %vm1591, %v1576, 0
      %v1683 = vsel %vm1591, %v1577, 0
      %v1686 = vsel %vm1591, %v1578, 0
      %vm1688 = vcmask 1043456
      %v1690 = vsel %vm1688, %v1583, 0
      %1692 = vmatprep.subr.mxu0 0.0
      %1693 = vmatpush1.msra.mxu0 %v1579
      %1694 = vmatprep.subr.mxu0 0.0
      %1695 = vmatpush1.msra.mxu0 %v1580
      %1696 = vmatprep.subr.mxu0 0.0
      %1697 = vmatpush1.msra.mxu0 %v1581
      %1698 = vmatprep.subr.mxu0 0.0
      %1699 = vmatpush1.msra.mxu0 %v1582
      %1700 = vmatprep.subr.mxu0 0.0
      %1701 = vmatpush1.msra.mxu0 %v1690
      %1702 = vmatprep.subr.mxu0 0.0
      %1703 = vmatpush1.msra.mxu0 0.0
      %1704 = vmatprep.subr.mxu0 0.0
      %1705 = vmatpush1.msra.mxu0 0.0
      %1706 = vmatprep.subr.mxu0 0.0
      %1707 = vmatpush1.msra.mxu0 0.0
      %1708 = vmatprep.subr.mxu0 0.0
      %1709 = vmatpush1.msra.mxu0 0.0
      %1710 = vmatprep.subr.mxu0 0.0
      %1711 = vmatpush1.msra.mxu0 0.0
      %1712 = vmatprep.subr.mxu0 0.0
      %1713 = vmatpush1.msra.mxu0 0.0
      %1714 = vmatprep.subr.mxu0 0.0
      %1715 = vmatpush1.msra.mxu0 0.0
      %1716 = vmatprep.subr.mxu0 0.0
      %1717 = vmatpush1.msra.mxu0 0.0
      %1718 = vmatprep.subr.mxu0 0.0
      %1719 = vmatpush1.msra.mxu0 0.0
      %1720 = vmatprep.subr.mxu0 0.0
      %1721 = vmatpush1.msra.mxu0 0.0
      %1722 = vmatprep.subr.mxu0 0.0
      %1723 = vmatpush1.msra.mxu0 0.0
      %1724 = vmatprep.subr.mxu0 0.0
      %1725 = vmatpush1.msra.mxu0 0.0
      %1726 = vmatprep.subr.mxu0 0.0
      %1727 = vmatpush1.msra.mxu0 0.0
      %1728 = vmatprep.subr.mxu0 0.0
      %1729 = vmatpush1.msra.mxu0 0.0
      %1730 = vmatprep.subr.mxu0 0.0
      %1731 = vmatpush1.msra.mxu0 0.0
      %1732 = vmatprep.subr.mxu0 0.0
      %1733 = vmatpush1.msra.mxu0 0.0
      %1734 = vmatprep.subr.mxu0 0.0
      %1735 = vmatpush1.msra.mxu0 0.0
      %1736 = vmatprep.subr.mxu0 0.0
      %1737 = vmatpush1.msra.mxu0 0.0
      %1738 = vmatprep.subr.mxu0 0.0
      %1739 = vmatpush1.msra.mxu0 0.0
      %1740 = vmatprep.subr.mxu0 0.0
      %1741 = vmatpush1.msra.mxu0 0.0
      %1742 = vmatprep.subr.mxu0 0.0
      %1743 = vmatpush1.msra.mxu0 0.0
      %1744 = vmatprep.subr.mxu0 0.0
      %1745 = vmatpush1.msra.mxu0 0.0
      %1746 = vmatprep.subr.mxu0 0.0
      %1747 = vmatpush1.msra.mxu0 0.0
      %1748 = vmatprep.subr.mxu0 0.0
      %1749 = vmatpush1.msra.mxu0 0.0
      %1750 = vmatprep.subr.mxu0 0.0
      %1751 = vmatpush1.msra.mxu0 0.0
      %1752 = vmatprep.subr.mxu0 0.0
      %1753 = vmatpush1.msra.mxu0 0.0
      %1754 = vmatprep.subr.mxu0 0.0
      %1755 = vmatpush1.msra.mxu0 0.0
      %1756 = vmatprep.mubr.f32.mxu0 0.0
      %1757 = vmatmul.mubr.f32.gmra.mrb[0].mxu0 %v1593
      %v1758 = vpop.f32.mrb[0].mxu0
      %v1759 = vadd.f32 %v1589, %v1758
      %v1760 = vpop.f32.mrb[0].mxu0
      %1761 = vmatprep.mubr.f32.mxu0 0.0
      %1762 = vmatmul.mubr.f32.gmra.mrb[0].mxu0 %v1596
      %v1763 = vpop.f32.mrb[0].mxu0
      %v1764 = vadd.f32 %v1589, %v1763
      %v1765 = vpop.f32.mrb[0].mxu0
      %1766 = vmatprep.mubr.f32.mxu0 0.0
      %1767 = vmatmul.mubr.f32.gmra.mrb[0].mxu0 %v1599
      %v1768 = vpop.f32.mrb[0].mxu0
      %v1769 = vadd.f32 %v1589, %v1768
      %v1770 = vpop.f32.mrb[0].mxu0
      %1771 = vmatprep.mubr.f32.mxu0 0.0
      %1772 = vmatmul.mubr.f32.gmra.mrb[0].mxu0 %v1602
      %v1773 = vpop.f32.mrb[0].mxu0
      %v1774 = vadd.f32 %v1589, %v1773
      %v1775 = vpop.f32.mrb[0].mxu0
      %1776 = vmatprep.mubr.f32.mxu0 0.0
      %1777 = vmatmul.mubr.f32.gmra.mrb[0].mxu0 %v1605
      %v1778 = vpop.f32.mrb[0].mxu0
      %v1779 = vadd.f32 %v1589, %v1778
      %v1780 = vpop.f32.mrb[0].mxu0
      %1781 = vmatprep.mubr.f32.mxu0 0.0
      %1782 = vmatmul.mubr.f32.gmra.mrb[0].mxu0 %v1608
      %v1783 = vpop.f32.mrb[0].mxu0
      %v1784 = vadd.f32 %v1589, %v1783
      %v1785 = vpop.f32.mrb[0].mxu0
      %1786 = vmatprep.mubr.f32.mxu0 0.0
      %1787 = vmatmul.mubr.f32.gmra.mrb[0].mxu0 %v1611
      %v1788 = vpop.f32.mrb[0].mxu0
      %v1789 = vadd.f32 %v1589, %v1788
      %v1790 = vpop.f32.mrb[0].mxu0
      %1791 = vmatprep.mubr.f32.mxu0 0.0
      %1792 = vmatmul.mubr.f32.gmra.mrb[0].mxu0 %v1614
      %v1793 = vpop.f32.mrb[0].mxu0
      %v1794 = vadd.f32 %v1589, %v1793
      %v1795 = vpop.f32.mrb[0].mxu0
      %1796 = vmatprep.mubr.f32.mxu0 0.0
      %1797 = vmatmul.mubr.f32.gmra.mrb[0].mxu0 %v1617
      %v1798 = vpop.f32.mrb[0].mxu0
      %v1799 = vadd.f32 %v1589, %v1798
      %v1800 = vpop.f32.mrb[0].mxu0
      %1801 = vmatprep.mubr.f32.mxu0 0.0
      %1802 = vmatmul.mubr.f32.gmra.mrb[0].mxu0 %v1620
      %v1803 = vpop.f32.mrb[0].mxu0
      %v1804 = vadd.f32 %v1589, %v1803
      %v1805 = vpop.f32.mrb[0].mxu0
      %1806 = vmatprep.mubr.f32.mxu0 0.0
      %1807 = vmatmul.mubr.f32.gmra.mrb[0].mxu0 %v1623
      %v1808 = vpop.f32.mrb[0].mxu0
      %v1809 = vadd.f32 %v1589, %v1808
      %v1810 = vpop.f32.mrb[0].mxu0
      %1811 = vmatprep.mubr.f32.mxu0 0.0
      %1812 = vmatmul.mubr.f32.gmra.mrb[0].mxu0 %v1626
      %v1813 = vpop.f32.mrb[0].mxu0
      %v1814 = vadd.f32 %v1589, %v1813
      %v1815 = vpop.f32.mrb[0].mxu0
      %1816 = vmatprep.mubr.f32.mxu0 0.0
      %1817 = vmatmul.mubr.f32.gmra.mrb[0].mxu0 %v1629
      %v1818 = vpop.f32.mrb[0].mxu0
      %v1819 = vadd.f32 %v1589, %v1818
      %v1820 = vpop.f32.mrb[0].mxu0
      %1821 = vmatprep.mubr.f32.mxu0 0.0
      %1822 = vmatmul.mubr.f32.gmra.mrb[0].mxu0 %v1632
      %v1823 = vpop.f32.mrb[0].mxu0
      %v1824 = vadd.f32 %v1589, %v1823
      %v1825 = vpop.f32.mrb[0].mxu0
      %1826 = vmatprep.mubr.f32.mxu0 0.0
      %1827 = vmatmul.mubr.f32.gmra.mrb[0].mxu0 %v1635
      %v1828 = vpop.f32.mrb[0].mxu0
      %v1829 = vadd.f32 %v1589, %v1828
      %v1830 = vpop.f32.mrb[0].mxu0
      %1831 = vmatprep.mubr.f32.mxu0 0.0
      %1832 = vmatmul.mubr.f32.gmra.mrb[0].mxu0 %v1638
      %v1833 = vpop.f32.mrb[0].mxu0
      %v1834 = vadd.f32 %v1589, %v1833
      %v1835 = vpop.f32.mrb[0].mxu0
      %1836 = vmatprep.mubr.f32.mxu0 0.0
      %1837 = vmatmul.mubr.f32.gmra.mrb[0].mxu0 %v1641
      %v1838 = vpop.f32.mrb[0].mxu0
      %v1839 = vadd.f32 %v1589, %v1838
      %v1840 = vpop.f32.mrb[0].mxu0
      %1841 = vmatprep.mubr.f32.mxu0 0.0
      %1842 = vmatmul.mubr.f32.gmra.mrb[0].mxu0 %v1644
      %v1843 = vpop.f32.mrb[0].mxu0
      %v1844 = vadd.f32 %v1589, %v1843
      %v1845 = vpop.f32.mrb[0].mxu0
      %1846 = vmatprep.mubr.f32.mxu0 0.0
      %1847 = vmatmul.mubr.f32.gmra.mrb[0].mxu0 %v1647
      %v1848 = vpop.f32.mrb[0].mxu0
      %v1849 = vadd.f32 %v1589, %v1848
      %v1850 = vpop.f32.mrb[0].mxu0
      %1851 = vmatprep.mubr.f32.mxu0 0.0
      %1852 = vmatmul.mubr.f32.gmra.mrb[0].mxu0 %v1650
      %v1853 = vpop.f32.mrb[0].mxu0
      %v1854 = vadd.f32 %v1589, %v1853
      %v1855 = vpop.f32.mrb[0].mxu0
      %1856 = vmatprep.mubr.f32.mxu0 0.0
      %1857 = vmatmul.mubr.f32.gmra.mrb[0].mxu0 %v1653
      %v1858 = vpop.f32.mrb[0].mxu0
      %v1859 = vadd.f32 %v1589, %v1858
      %v1860 = vpop.f32.mrb[0].mxu0
      %1861 = vmatprep.mubr.f32.mxu0 0.0
      %1862 = vmatmul.mubr.f32.gmra.mrb[0].mxu0 %v1656
      %v1863 = vpop.f32.mrb[0].mxu0
      %v1864 = vadd.f32 %v1589, %v1863
      %v1865 = vpop.f32.mrb[0].mxu0
      %1866 = vmatprep.mubr.f32.mxu0 0.0
      %1867 = vmatmul.mubr.f32.gmra.mrb[0].mxu0 %v1659
      %v1868 = vpop.f32.mrb[0].mxu0
      %v1869 = vadd.f32 %v1589, %v1868
      %v1870 = vpop.f32.mrb[0].mxu0
      %1871 = vmatprep.mubr.f32.mxu0 0.0
      %1872 = vmatmul.mubr.f32.gmra.mrb[0].mxu0 %v1662
      %v1873 = vpop.f32.mrb[0].mxu0
      %v1874 = vadd.f32 %v1589, %v1873
      %v1875 = vpop.f32.mrb[0].mxu0
      %1876 = vmatprep.mubr.f32.mxu0 0.0
      %1877 = vmatmul.mubr.f32.gmra.mrb[0].mxu0 %v1665
      %v1878 = vpop.f32.mrb[0].mxu0
      %v1879 = vadd.f32 %v1589, %v1878
      %v1880 = vpop.f32.mrb[0].mxu0
      %1881 = vmatprep.mubr.f32.mxu0 0.0
      %1882 = vmatmul.mubr.f32.gmra.mrb[0].mxu0 %v1668
      %v1883 = vpop.f32.mrb[0].mxu0
      %v1884 = vadd.f32 %v1589, %v1883
      %v1885 = vpop.f32.mrb[0].mxu0
      %1886 = vmatprep.mubr.f32.mxu0 0.0
      %1887 = vmatmul.mubr.f32.gmra.mrb[0].mxu0 %v1671
      %v1888 = vpop.f32.mrb[0].mxu0
      %v1889 = vadd.f32 %v1589, %v1888
      %v1890 = vpop.f32.mrb[0].mxu0
      %1891 = vmatprep.mubr.f32.mxu0 0.0
      %1892 = vmatmul.mubr.f32.gmra.mrb[0].mxu0 %v1674
      %v1893 = vpop.f32.mrb[0].mxu0
      %v1894 = vadd.f32 %v1589, %v1893
      %v1895 = vpop.f32.mrb[0].mxu0
      %1896 = vmatprep.mubr.f32.mxu0 0.0
      %1897 = vmatmul.mubr.f32.gmra.mrb[0].mxu0 %v1677
      %v1898 = vpop.f32.mrb[0].mxu0
      %v1899 = vadd.f32 %v1589, %v1898
      %v1900 = vpop.f32.mrb[0].mxu0
      %1901 = vmatprep.mubr.f32.mxu0 0.0
      %1902 = vmatmul.mubr.f32.gmra.mrb[0].mxu0 %v1680
      %v1903 = vpop.f32.mrb[0].mxu0
      %v1904 = vadd.f32 %v1589, %v1903
      %v1905 = vpop.f32.mrb[0].mxu0
      %1906 = vmatprep.mubr.f32.mxu0 0.0
      %1907 = vmatmul.mubr.f32.gmra.mrb[0].mxu0 %v1683
      %v1908 = vpop.f32.mrb[0].mxu0
      %v1909 = vadd.f32 %v1589, %v1908
      %v1910 = vpop.f32.mrb[0].mxu0
      %1911 = vmatprep.mubr.f32.mxu0 0.0
      %1912 = vmatmul.mubr.f32.gmra.mrb[0].mxu0 %v1686
      %v1913 = vpop.f32.mrb[0].mxu0
      %v1914 = vadd.f32 %v1589, %v1913
      %v1915 = vpop.f32.mrb[0].mxu0
      %1916 = vdwg.mxu0
      %v1917 = vsel %vm1315, %v1759, 0.0
      %v1918 = vsel %vm1315, %v1764, 0.0
      %v1919 = vadd.f32 %v1917, %v1918
      %v1920 = vsel %vm1315, %v1769, 0.0
      %v1921 = vadd.f32 %v1919, %v1920
      %v1922 = vsel %vm1315, %v1774, 0.0
      %v1923 = vadd.f32 %v1921, %v1922
      %v1924 = vsel %vm1315, %v1779, 0.0
      %v1925 = vadd.f32 %v1923, %v1924
      %v1926 = vsel %vm1315, %v1784, 0.0
      %v1927 = vadd.f32 %v1925, %v1926
      %v1928 = vsel %vm1315, %v1789, 0.0
      %v1929 = vadd.f32 %v1927, %v1928
      %v1930 = vsel %vm1315, %v1794, 0.0
      %v1931 = vadd.f32 %v1929, %v1930
      %v1932 = vsel %vm1315, %v1799, 0.0
      %v1933 = vadd.f32 %v1931, %v1932
      %v1934 = vsel %vm1315, %v1804, 0.0
      %v1935 = vadd.f32 %v1933, %v1934
      %v1936 = vsel %vm1315, %v1809, 0.0
      %v1937 = vadd.f32 %v1935, %v1936
      %v1938 = vsel %vm1315, %v1814, 0.0
      %v1939 = vadd.f32 %v1937, %v1938
      %v1940 = vsel %vm1315, %v1819, 0.0
      %v1941 = vadd.f32 %v1939, %v1940
      %v1942 = vsel %vm1315, %v1824, 0.0
      %v1943 = vadd.f32 %v1941, %v1942
      %v1944 = vsel %vm1315, %v1829, 0.0
      %v1945 = vadd.f32 %v1943, %v1944
      %v1946 = vsel %vm1315, %v1834, 0.0
      %v1947 = vadd.f32 %v1945, %v1946
      %v1948 = vsel %vm1315, %v1839, 0.0
      %v1949 = vadd.f32 %v1947, %v1948
      %v1950 = vsel %vm1315, %v1844, 0.0
      %v1951 = vadd.f32 %v1949, %v1950
      %v1952 = vsel %vm1315, %v1849, 0.0
      %v1953 = vadd.f32 %v1951, %v1952
      %v1954 = vsel %vm1315, %v1854, 0.0
      %v1955 = vadd.f32 %v1953, %v1954
      %v1956 = vsel %vm1315, %v1859, 0.0
      %v1957 = vadd.f32 %v1955, %v1956
      %v1958 = vsel %vm1315, %v1864, 0.0
      %v1959 = vadd.f32 %v1957, %v1958
      %v1960 = vsel %vm1315, %v1869, 0.0
      %v1961 = vadd.f32 %v1959, %v1960
      %v1962 = vsel %vm1315, %v1874, 0.0
      %v1963 = vadd.f32 %v1961, %v1962
      %v1964 = vsel %vm1315, %v1879, 0.0
      %v1965 = vadd.f32 %v1963, %v1964
      %v1966 = vsel %vm1315, %v1884, 0.0
      %v1967 = vadd.f32 %v1965, %v1966
      %v1968 = vsel %vm1315, %v1889, 0.0
      %v1969 = vadd.f32 %v1967, %v1968
      %v1970 = vsel %vm1315, %v1894, 0.0
      %v1971 = vadd.f32 %v1969, %v1970
      %v1972 = vsel %vm1315, %v1899, 0.0
      %v1973 = vadd.f32 %v1971, %v1972
      %v1974 = vsel %vm1315, %v1904, 0.0
      %v1975 = vadd.f32 %v1973, %v1974
      %v1976 = vsel %vm1315, %v1909, 0.0
      %v1977 = vadd.f32 %v1975, %v1976
      %v1978 = vsel %vm1315, %v1914, 0.0
      %v1979 = vadd.f32 %v1977, %v1978
      %v1980 = vrot.slane %v1979, 4
      %v1981 = vadd.f32 %v1979, %v1980
      %v1982 = vrot.slane %v1981, 2
      %v1983 = vadd.f32 %v1981, %v1982
      %v1984 = vrot.slane %v1983, 1
      %v1985 = vadd.f32 %v1983, %v1984
      %v1986 = vmul.f32 %v1759, %v1759
      %v1987 = vmul.f32 %v1764, %v1764
      %v1988 = vmul.f32 %v1769, %v1769
      %v1989 = vmul.f32 %v1774, %v1774
      %v1990 = vmul.f32 %v1779, %v1779
      %v1991 = vmul.f32 %v1784, %v1784
      %v1992 = vmul.f32 %v1789, %v1789
      %v1993 = vmul.f32 %v1794, %v1794
      %v1994 = vmul.f32 %v1799, %v1799
      %v1995 = vmul.f32 %v1804, %v1804
      %v1996 = vmul.f32 %v1809, %v1809
      %v1997 = vmul.f32 %v1814, %v1814
      %v1998 = vmul.f32 %v1819, %v1819
      %v1999 = vmul.f32 %v1824, %v1824
      %v2000 = vmul.f32 %v1829, %v1829
      %v2001 = vmul.f32 %v1834, %v1834
      %v2002 = vmul.f32 %v1839, %v1839
      %v2003 = vmul.f32 %v1844, %v1844
      %v2004 = vmul.f32 %v1849, %v1849
      %v2005 = vmul.f32 %v1854, %v1854
      %v2006 = vmul.f32 %v1859, %v1859
      %v2007 = vmul.f32 %v1864, %v1864
      %v2008 = vmul.f32 %v1869, %v1869
      %v2009 = vmul.f32 %v1874, %v1874
      %v2010 = vmul.f32 %v1879, %v1879
      %v2011 = vmul.f32 %v1884, %v1884
      %v2012 = vmul.f32 %v1889, %v1889
      %v2013 = vmul.f32 %v1894, %v1894
      %v2014 = vmul.f32 %v1899, %v1899
      %v2015 = vmul.f32 %v1904, %v1904
      %v2016 = vmul.f32 %v1909, %v1909
      %v2017 = vmul.f32 %v1914, %v1914
      %v2018 = vsel %vm1315, %v1986, 0.0
      %v2019 = vsel %vm1315, %v1987, 0.0
      %v2020 = vadd.f32 %v2018, %v2019
      %v2021 = vsel %vm1315, %v1988, 0.0
      %v2022 = vadd.f32 %v2020, %v2021
      %v2023 = vsel %vm1315, %v1989, 0.0
      %v2024 = vadd.f32 %v2022, %v2023
      %v2025 = vsel %vm1315, %v1990, 0.0
      %v2026 = vadd.f32 %v2024, %v2025
      %v2027 = vsel %vm1315, %v1991, 0.0
      %v2028 = vadd.f32 %v2026, %v2027
      %v2029 = vsel %vm1315, %v1992, 0.0
      %v2030 = vadd.f32 %v2028, %v2029
      %v2031 = vsel %vm1315, %v1993, 0.0
      %v2032 = vadd.f32 %v2030, %v2031
      %v2033 = vsel %vm1315, %v1994, 0.0
      %v2034 = vadd.f32 %v2032, %v2033
      %v2035 = vsel %vm1315, %v1995, 0.0
      %v2036 = vadd.f32 %v2034, %v2035
      %v2037 = vsel %vm1315, %v1996, 0.0
      %v2038 = vadd.f32 %v2036, %v2037
      %v2039 = vsel %vm1315, %v1997, 0.0
      %v2040 = vadd.f32 %v2038, %v2039
      %v2041 = vsel %vm1315, %v1998, 0.0
      %v2042 = vadd.f32 %v2040, %v2041
      %v2043 = vsel %vm1315, %v1999, 0.0
      %v2044 = vadd.f32 %v2042, %v2043
      %v2045 = vsel %vm1315, %v2000, 0.0
      %v2046 = vadd.f32 %v2044, %v2045
      %v2047 = vsel %vm1315, %v2001, 0.0
      %v2048 = vadd.f32 %v2046, %v2047
      %v2049 = vsel %vm1315, %v2002, 0.0
      %v2050 = vadd.f32 %v2048, %v2049
      %v2051 = vsel %vm1315, %v2003, 0.0
      %v2052 = vadd.f32 %v2050, %v2051
      %v2053 = vsel %vm1315, %v2004, 0.0
      %v2054 = vadd.f32 %v2052, %v2053
      %v2055 = vsel %vm1315, %v2005, 0.0
      %v2056 = vadd.f32 %v2054, %v2055
      %v2057 = vsel %vm1315, %v2006, 0.0
      %v2058 = vadd.f32 %v2056, %v2057
      %v2059 = vsel %vm1315, %v2007, 0.0
      %v2060 = vadd.f32 %v2058, %v2059
      %v2061 = vsel %vm1315, %v2008, 0.0
      %v2062 = vadd.f32 %v2060, %v2061
      %v2063 = vsel %vm1315, %v2009, 0.0
      %v2064 = vadd.f32 %v2062, %v2063
      %v2065 = vsel %vm1315, %v2010, 0.0
      %v2066 = vadd.f32 %v2064, %v2065
      %v2067 = vsel %vm1315, %v2011, 0.0
      %v2068 = vadd.f32 %v2066, %v2067
      %v2069 = vsel %vm1315, %v2012, 0.0
      %v2070 = vadd.f32 %v2068, %v2069
      %v2071 = vsel %vm1315, %v2013, 0.0
      %v2072 = vadd.f32 %v2070, %v2071
      %v2073 = vsel %vm1315, %v2014, 0.0
      %v2074 = vadd.f32 %v2072, %v2073
      %v2075 = vsel %vm1315, %v2015, 0.0
      %v2076 = vadd.f32 %v2074, %v2075
      %v2077 = vsel %vm1315, %v2016, 0.0
      %v2078 = vadd.f32 %v2076, %v2077
      %v2079 = vsel %vm1315, %v2017, 0.0
      %v2080 = vadd.f32 %v2078, %v2079
      %v2081 = vrot.slane %v2080, 4
      %v2082 = vadd.f32 %v2080, %v2081
      %v2083 = vrot.slane %v2082, 2
      %v2084 = vadd.f32 %v2082, %v2083
      %v2085 = vrot.slane %v2084, 1
      %v2086 = vadd.f32 %v2084, %v2085
      %v2087 = vmul.f32 %v1985, 0.00390625
      %v2088 = vmul.f32 %v2086, 0.00390625
      %v2089 = vmul.f32 %v2087, %v2087
      %v2090 = vsub.f32 %v2088, %v2089
      %v2091 = vmax.f32 %v2090, 0.0
      %v2092 = vsub.f32 %v1759, %v2087
      %v2093 = vsub.f32 %v1764, %v2087
      %v2094 = vsub.f32 %v1769, %v2087
      %v2095 = vsub.f32 %v1774, %v2087
      %v2096 = vsub.f32 %v1779, %v2087
      %v2097 = vsub.f32 %v1784, %v2087
      %v2098 = vsub.f32 %v1789, %v2087
      %v2099 = vsub.f32 %v1794, %v2087
      %v2100 = vsub.f32 %v1799, %v2087
      %v2101 = vsub.f32 %v1804, %v2087
      %v2102 = vsub.f32 %v1809, %v2087
      %v2103 = vsub.f32 %v1814, %v2087
      %v2104 = vsub.f32 %v1819, %v2087
      %v2105 = vsub.f32 %v1824, %v2087
      %v2106 = vsub.f32 %v1829, %v2087
      %v2107 = vsub.f32 %v1834, %v2087
      %v2108 = vsub.f32 %v1839, %v2087
      %v2109 = vsub.f32 %v1844, %v2087
      %v2110 = vsub.f32 %v1849, %v2087
      %v2111 = vsub.f32 %v1854, %v2087
      %v2112 = vsub.f32 %v1859, %v2087
      %v2113 = vsub.f32 %v1864, %v2087
      %v2114 = vsub.f32 %v1869, %v2087
      %v2115 = vsub.f32 %v1874, %v2087
      %v2116 = vsub.f32 %v1879, %v2087
      %v2117 = vsub.f32 %v1884, %v2087
      %v2118 = vsub.f32 %v1889, %v2087
      %v2119 = vsub.f32 %v1894, %v2087
      %v2120 = vsub.f32 %v1899, %v2087
      %v2121 = vsub.f32 %v1904, %v2087
      %v2122 = vsub.f32 %v1909, %v2087
      %v2123 = vsub.f32 %v1914, %v2087
      %v2124 = vadd.f32 %v2091, 1e-05
      %v2125 = vrsqrt.pop %v2124
      %v2126 = vmul.f32 %v2092, %v2125
      %v2127 = vmul.f32 %v2093, %v2125
      %v2128 = vmul.f32 %v2094, %v2125
      %v2129 = vmul.f32 %v2095, %v2125
      %v2130 = vmul.f32 %v2096, %v2125
      %v2131 = vmul.f32 %v2097, %v2125
      %v2132 = vmul.f32 %v2098, %v2125
      %v2133 = vmul.f32 %v2099, %v2125
      %v2134 = vmul.f32 %v2100, %v2125
      %v2135 = vmul.f32 %v2101, %v2125
      %v2136 = vmul.f32 %v2102, %v2125
      %v2137 = vmul.f32 %v2103, %v2125
      %v2138 = vmul.f32 %v2104, %v2125
      %v2139 = vmul.f32 %v2105, %v2125
      %v2140 = vmul.f32 %v2106, %v2125
      %v2141 = vmul.f32 %v2107, %v2125
      %v2142 = vmul.f32 %v2108, %v2125
      %v2143 = vmul.f32 %v2109, %v2125
      %v2144 = vmul.f32 %v2110, %v2125
      %v2145 = vmul.f32 %v2111, %v2125
      %v2146 = vmul.f32 %v2112, %v2125
      %v2147 = vmul.f32 %v2113, %v2125
      %v2148 = vmul.f32 %v2114, %v2125
      %v2149 = vmul.f32 %v2115, %v2125
      %v2150 = vmul.f32 %v2116, %v2125
      %v2151 = vmul.f32 %v2117, %v2125
      %v2152 = vmul.f32 %v2118, %v2125
      %v2153 = vmul.f32 %v2119, %v2125
      %v2154 = vmul.f32 %v2120, %v2125
      %v2155 = vmul.f32 %v2121, %v2125
      %v2156 = vmul.f32 %v2122, %v2125
      %v2157 = vmul.f32 %v2123, %v2125
      %v2158 = vmax.f32 %v2126, 0.0
      %v2159 = vmax.f32 %v2127, 0.0
      %v2160 = vmax.f32 %v2128, 0.0
      %v2161 = vmax.f32 %v2129, 0.0
      %v2162 = vmax.f32 %v2130, 0.0
      %v2163 = vmax.f32 %v2131, 0.0
      %v2164 = vmax.f32 %v2132, 0.0
      %v2165 = vmax.f32 %v2133, 0.0
      %v2166 = vmax.f32 %v2134, 0.0
      %v2167 = vmax.f32 %v2135, 0.0
      %v2168 = vmax.f32 %v2136, 0.0
      %v2169 = vmax.f32 %v2137, 0.0
      %v2170 = vmax.f32 %v2138, 0.0
      %v2171 = vmax.f32 %v2139, 0.0
      %v2172 = vmax.f32 %v2140, 0.0
      %v2173 = vmax.f32 %v2141, 0.0
      %v2174 = vmax.f32 %v2142, 0.0
      %v2175 = vmax.f32 %v2143, 0.0
      %v2176 = vmax.f32 %v2144, 0.0
      %v2177 = vmax.f32 %v2145, 0.0
      %v2178 = vmax.f32 %v2146, 0.0
      %v2179 = vmax.f32 %v2147, 0.0
      %v2180 = vmax.f32 %v2148, 0.0
      %v2181 = vmax.f32 %v2149, 0.0
      %v2182 = vmax.f32 %v2150, 0.0
      %v2183 = vmax.f32 %v2151, 0.0
      %v2184 = vmax.f32 %v2152, 0.0
      %v2185 = vmax.f32 %v2153, 0.0
      %v2186 = vmax.f32 %v2154, 0.0
      %v2187 = vmax.f32 %v2155, 0.0
      %v2188 = vmax.f32 %v2156, 0.0
      %v2189 = vmax.f32 %v2157, 0.0
      %s2190 = scalar_lea.vmem [#allocation2], 24
      %2191 = vst.msk [vmem:[%s2190 + $0x1] sm:$0xff] %vm1315, %v2158
      %2192 = vst.msk [vmem:[%s2190 + $0x9] sm:$0xff] %vm1315, %v2159
      %2193 = vst.msk [vmem:[%s2190 + $0x19] sm:$0xff] %vm1315, %v2160
      %2194 = vst.msk [vmem:[%s2190 + $0x21] sm:$0xff] %vm1315, %v2161
      %2195 = vst.msk [vmem:[%s2190 + $0x31] sm:$0xff] %vm1315, %v2162
      %2196 = vst.msk [vmem:[%s2190 + $0x39] sm:$0xff] %vm1315, %v2163
      %2197 = vst.msk [vmem:[%s2190 + $0x49] sm:$0xff] %vm1315, %v2164
      %2198 = vst.msk [vmem:[%s2190 + $0x51] sm:$0xff] %vm1315, %v2165
      %2199 = vst.msk [vmem:[%s2190 + $0x61] sm:$0xff] %vm1315, %v2166
      %2200 = vst.msk [vmem:[%s2190 + $0x69] sm:$0xff] %vm1315, %v2167
      %2201 = vst.msk [vmem:[%s2190 + $0x79] sm:$0xff] %vm1315, %v2168
      %2202 = vst.msk [vmem:[%s2190 + $0x81] sm:$0xff] %vm1315, %v2169
      %2203 = vst.msk [vmem:[%s2190 + $0x91] sm:$0xff] %vm1315, %v2170
      %2204 = vst.msk [vmem:[%s2190 + $0x99] sm:$0xff] %vm1315, %v2171
      %2205 = vst.msk [vmem:[%s2190 + $0xa9] sm:$0xff] %vm1315, %v2172
      %2206 = vst.msk [vmem:[%s2190 + $0xb1] sm:$0xff] %vm1315, %v2173
      %2207 = vst.msk [vmem:[%s2190 + $0xc1] sm:$0xff] %vm1315, %v2174
      %2208 = vst.msk [vmem:[%s2190 + $0xc9] sm:$0xff] %vm1315, %v2175
      %2209 = vst.msk [vmem:[%s2190 + $0xd9] sm:$0xff] %vm1315, %v2176
      %2210 = vst.msk [vmem:[%s2190 + $0xe1] sm:$0xff] %vm1315, %v2177
      %2211 = vst.msk [vmem:[%s2190 + $0xf1] sm:$0xff] %vm1315, %v2178
      %2212 = vst.msk [vmem:[%s2190 + $0xf9] sm:$0xff] %vm1315, %v2179
      %2213 = vst.msk [vmem:[%s2190 + $0x109] sm:$0xff] %vm1315, %v2180
      %2214 = vst.msk [vmem:[%s2190 + $0x111] sm:$0xff] %vm1315, %v2181
      %2215 = vst.msk [vmem:[%s2190 + $0x121] sm:$0xff] %vm1315, %v2182
      %2216 = vst.msk [vmem:[%s2190 + $0x129] sm:$0xff] %vm1315, %v2183
      %2217 = vst.msk [vmem:[%s2190 + $0x139] sm:$0xff] %vm1315, %v2184
      %2218 = vst.msk [vmem:[%s2190 + $0x141] sm:$0xff] %vm1315, %v2185
      %2219 = vst.msk [vmem:[%s2190 + $0x151] sm:$0xff] %vm1315, %v2186
      %2220 = vst.msk [vmem:[%s2190 + $0x159] sm:$0xff] %vm1315, %v2187
      %2221 = vst.msk [vmem:[%s2190 + $0x169] sm:$0xff] %vm1315, %v2188
      %2222 = vst.msk [vmem:[%s2190 + $0x171] sm:$0xff] %vm1315, %v2189
      %2223 = vst.msk [vmem:[#allocation2 + $0x1] sm:$0xff] %vm1315, %v2160
      %2224 = vst.msk [vmem:[#allocation2 + $0x9] sm:$0xff] %vm1315, %v2161
      %s2225 = scalar_lea.vmem [#allocation2], 408
      %2226 = vst.msk [vmem:[%s2225 + $0x1] sm:$0xff] %vm1315, %v2186
      %2227 = vst.msk [vmem:[%s2225 + $0x9] sm:$0xff] %vm1315, %v2187
      %v2228 = vld [vmem:[#allocation2 + $0x2] sm:$0x1]
      %v2229 = vld [vmem:[#allocation2 + $0x1a] sm:$0x1]
      %v2230 = vld [vmem:[#allocation2 + $0x32] sm:$0x1]
      %v2231 = vld [vmem:[#allocation2 + $0x4a] sm:$0x1]
      %v2232 = vld [vmem:[#allocation2 + $0x62] sm:$0x1]
      %v2233 = vld [vmem:[#allocation2 + $0x7a] sm:$0x1]
      %v2234 = vld [vmem:[#allocation2 + $0x92] sm:$0x1]
      %v2235 = vld [vmem:[#allocation2 + $0xaa] sm:$0x1]
      %v2236 = vld [vmem:[#allocation2 + $0xc2] sm:$0x1]
      %v2237 = vld [vmem:[#allocation2 + $0xda] sm:$0x1]
      %v2238 = vld [vmem:[#allocation2 + $0xf2] sm:$0x1]
      %v2239 = vld [vmem:[#allocation2 + $0x10a] sm:$0x1]
      %v2240 = vld [vmem:[#allocation2 + $0x122] sm:$0x1]
      %v2241 = vld [vmem:[#allocation2 + $0x13a] sm:$0x1]
      %v2242 = vld [vmem:[#allocation2 + $0x152] sm:$0x1]
      %v2243 = vld [vmem:[#allocation2 + $0x16a] sm:$0x1]
      %v2244 = vld [vmem:[#allocation2 + $0x182] sm:$0x1]
      %v2245 = vld [vmem:[#allocation2 + $0x19a] sm:$0x1]
      %vm2246 = vcmask 24576
      %2247 = vst.msk [vmem:[#allocation2] sm:$0x1] %vm2246, %v2228
      %2248 = vst.msk [vmem:[#allocation2 + $0x18] sm:$0x1] %vm2246, %v2229
      %2249 = vst.msk [vmem:[#allocation2 + $0x30] sm:$0x1] %vm2246, %v2230
      %2250 = vst.msk [vmem:[#allocation2 + $0x48] sm:$0x1] %vm2246, %v2231
      %2251 = vst.msk [vmem:[#allocation2 + $0x60] sm:$0x1] %vm2246, %v2232
      %2252 = vst.msk [vmem:[#allocation2 + $0x78] sm:$0x1] %vm2246, %v2233
      %2253 = vst.msk [vmem:[#allocation2 + $0x90] sm:$0x1] %vm2246, %v2234
      %2254 = vst.msk [vmem:[#allocation2 + $0xa8] sm:$0x1] %vm2246, %v2235
      %2255 = vst.msk [vmem:[#allocation2 + $0xc0] sm:$0x1] %vm2246, %v2236
      %2256 = vst.msk [vmem:[#allocation2 + $0xd8] sm:$0x1] %vm2246, %v2237
      %2257 = vst.msk [vmem:[#allocation2 + $0xf0] sm:$0x1] %vm2246, %v2238
      %2258 = vst.msk [vmem:[#allocation2 + $0x108] sm:$0x1] %vm2246, %v2239
      %2259 = vst.msk [vmem:[#allocation2 + $0x120] sm:$0x1] %vm2246, %v2240
      %2260 = vst.msk [vmem:[#allocation2 + $0x138] sm:$0x1] %vm2246, %v2241
      %2261 = vst.msk [vmem:[#allocation2 + $0x150] sm:$0x1] %vm2246, %v2242
      %2262 = vst.msk [vmem:[#allocation2 + $0x168] sm:$0x1] %vm2246, %v2243
      %2263 = vst.msk [vmem:[#allocation2 + $0x180] sm:$0x1] %vm2246, %v2244
      %2264 = vst.msk [vmem:[#allocation2 + $0x198] sm:$0x1] %vm2246, %v2245
      %v2265 = vld [vmem:[#allocation2 + $0xf] sm:$0x1]
      %v2266 = vld [vmem:[#allocation2 + $0x27] sm:$0x1]
      %v2267 = vld [vmem:[#allocation2 + $0x3f] sm:$0x1]
      %v2268 = vld [vmem:[#allocation2 + $0x57] sm:$0x1]
      %v2269 = vld [vmem:[#allocation2 + $0x6f] sm:$0x1]
      %v2270 = vld [vmem:[#allocation2 + $0x87] sm:$0x1]
      %v2271 = vld [vmem:[#allocation2 + $0x9f] sm:$0x1]
      %v2272 = vld [vmem:[#allocation2 + $0xb7] sm:$0x1]
      %v2273 = vld [vmem:[#allocation2 + $0xcf] sm:$0x1]
      %v2274 = vld [vmem:[#allocation2 + $0xe7] sm:$0x1]
      %v2275 = vld [vmem:[#allocation2 + $0xff] sm:$0x1]
      %v2276 = vld [vmem:[#allocation2 + $0x117] sm:$0x1]
      %v2277 = vld [vmem:[#allocation2 + $0x12f] sm:$0x1]
      %v2278 = vld [vmem:[#allocation2 + $0x147] sm:$0x1]
      %v2279 = vld [vmem:[#allocation2 + $0x15f] sm:$0x1]
      %v2280 = vld [vmem:[#allocation2 + $0x177] sm:$0x1]
      %v2281 = vld [vmem:[#allocation2 + $0x18f] sm:$0x1]
      %v2282 = vld [vmem:[#allocation2 + $0x1a7] sm:$0x1]
      %2283 = vst.msk [vmem:[#allocation2 + $0x11] sm:$0x1] %vm2246, %v2265
      %2284 = vst.msk [vmem:[#allocation2 + $0x29] sm:$0x1] %vm2246, %v2266
      %2285 = vst.msk [vmem:[#allocation2 + $0x41] sm:$0x1] %vm2246, %v2267
      %2286 = vst.msk [vmem:[#allocation2 + $0x59] sm:$0x1] %vm2246, %v2268
      %2287 = vst.msk [vmem:[#allocation2 + $0x71] sm:$0x1] %vm2246, %v2269
      %2288 = vst.msk [vmem:[#allocation2 + $0x89] sm:$0x1] %vm2246, %v2270
      %2289 = vst.msk [vmem:[#allocation2 + $0xa1] sm:$0x1] %vm2246, %v2271
      %2290 = vst.msk [vmem:[#allocation2 + $0xb9] sm:$0x1] %vm2246, %v2272
      %2291 = vst.msk [vmem:[#allocation2 + $0xd1] sm:$0x1] %vm2246, %v2273
      %2292 = vst.msk [vmem:[#allocation2 + $0xe9] sm:$0x1] %vm2246, %v2274
      %2293 = vst.msk [vmem:[#allocation2 + $0x101] sm:$0x1] %vm2246, %v2275
      %2294 = vst.msk [vmem:[#allocation2 + $0x119] sm:$0x1] %vm2246, %v2276
      %2295 = vst.msk [vmem:[#allocation2 + $0x131] sm:$0x1] %vm2246, %v2277
      %2296 = vst.msk [vmem:[#allocation2 + $0x149] sm:$0x1] %vm2246, %v2278
      %2297 = vst.msk [vmem:[#allocation2 + $0x161] sm:$0x1] %vm2246, %v2279
      %2298 = vst.msk [vmem:[#allocation2 + $0x179] sm:$0x1] %vm2246, %v2280
      %2299 = vst.msk [vmem:[#allocation2 + $0x191] sm:$0x1] %vm2246, %v2281
      %2300 = vst.msk [vmem:[#allocation2 + $0x1a9] sm:$0x1] %vm2246, %v2282
      %v2301 = vld [vmem:[#allocation2] sm:$0xff]
      %v2302 = vld [vmem:[#allocation2 + $0x8] sm:$0xff]
      %v2303 = vld [vmem:[#allocation2 + $0x10] sm:$0x3]
      %v2304 = vld [vmem:[#allocation2 + $0x18] sm:$0xff]
      %v2305 = vld [vmem:[#allocation2 + $0x20] sm:$0xff]
      %v2306 = vld [vmem:[#allocation2 + $0x28] sm:$0x3]
      %v2307 = vld [vmem:[#allocation2 + $0x30] sm:$0xff]
      %v2308 = vld [vmem:[#allocation2 + $0x38] sm:$0xff]
      %v2309 = vld [vmem:[#allocation2 + $0x40] sm:$0x3]
      %v2310 = vld [vmem:[#allocation2 + $0x48] sm:$0xff]
      %v2311 = vld [vmem:[#allocation2 + $0x50] sm:$0xff]
      %v2312 = vld [vmem:[#allocation2 + $0x58] sm:$0x3]
      %v2313 = vld [vmem:[#allocation2 + $0x60] sm:$0xff]
      %v2314 = vld [vmem:[#allocation2 + $0x68] sm:$0xff]
      %v2315 = vld [vmem:[#allocation2 + $0x70] sm:$0x3]
      %v2316 = vld [vmem:[#allocation2 + $0x78] sm:$0xff]
      %v2317 = vld [vmem:[#allocation2 + $0x80] sm:$0xff]
      %v2318 = vld [vmem:[#allocation2 + $0x88] sm:$0x3]
      %v2319 = vld [vmem:[#allocation2 + $0x90] sm:$0xff]
      %v2320 = vld [vmem:[#allocation2 + $0x98] sm:$0xff]
      %v2321 = vld [vmem:[#allocation2 + $0xa0] sm:$0x3]
      %v2322 = vld [vmem:[#allocation2 + $0xa8] sm:$0xff]
      %v2323 = vld [vmem:[#allocation2 + $0xb0] sm:$0xff]
      %v2324 = vld [vmem:[#allocation2 + $0xb8] sm:$0x3]
      %v2325 = vld [vmem:[#allocation2 + $0xc0] sm:$0xff]
      %v2326 = vld [vmem:[#allocation2 + $0xc8] sm:$0xff]
      %v2327 = vld [vmem:[#allocation2 + $0xd0] sm:$0x3]
      %v2328 = vld [vmem:[#allocation2 + $0xd8] sm:$0xff]
      %v2329 = vld [vmem:[#allocation2 + $0xe0] sm:$0xff]
      %v2330 = vld [vmem:[#allocation2 + $0xe8] sm:$0x3]
      %v2331 = vld [vmem:[#allocation2 + $0xf0] sm:$0xff]
      %v2332 = vld [vmem:[#allocation2 + $0xf8] sm:$0xff]
      %v2333 = vld [vmem:[#allocation2 + $0x100] sm:$0x3]
      %v2334 = vld [vmem:[#allocation2 + $0x108] sm:$0xff]
      %v2335 = vld [vmem:[#allocation2 + $0x110] sm:$0xff]
      %v2336 = vld [vmem:[#allocation2 + $0x118] sm:$0x3]
      %v2337 = vld [vmem:[#allocation2 + $0x120] sm:$0xff]
      %v2338 = vld [vmem:[#allocation2 + $0x128] sm:$0xff]
      %v2339 = vld [vmem:[#allocation2 + $0x130] sm:$0x3]
      %v2340 = vld [vmem:[#allocation2 + $0x138] sm:$0xff]
      %v2341 = vld [vmem:[#allocation2 + $0x140] sm:$0xff]
      %v2342 = vld [vmem:[#allocation2 + $0x148] sm:$0x3]
      %v2343 = vld [vmem:[#allocation2 + $0x150] sm:$0xff]
      %v2344 = vld [vmem:[#allocation2 + $0x158] sm:$0xff]
      %v2345 = vld [vmem:[#allocation2 + $0x160] sm:$0x3]
      %v2346 = vld [vmem:[#allocation2 + $0x168] sm:$0xff]
      %v2347 = vld [vmem:[#allocation2 + $0x170] sm:$0xff]
      %v2348 = vld [vmem:[#allocation2 + $0x178] sm:$0x3]
      %v2349 = vld [vmem:[#allocation2 + $0x180] sm:$0xff]
      %v2350 = vld [vmem:[#allocation2 + $0x188] sm:$0xff]
      %v2351 = vld [vmem:[#allocation2 + $0x190] sm:$0x3]
      %v2352 = vld [vmem:[#allocation2 + $0x198] sm:$0xff]
      %v2353 = vld [vmem:[#allocation2 + $0x1a0] sm:$0xff]
      %v2354 = vld [vmem:[#allocation2 + $0x1a8] sm:$0x3]
      %v2403 = vrot.slane %v2301, 1
      %v2404 = vrot.slane %v2302, 1
      %v2405 = vsel %vm327, %v2403, %v2404
      %v2406 = vrot.slane %v2303, 1
      %v2407 = vsel %vm327, %v2404, %v2406
      %v2408 = vrot.slane %v2304, 1
      %v2409 = vrot.slane %v2305, 1
      %v2410 = vsel %vm327, %v2408, %v2409
      %v2411 = vrot.slane %v2306, 1
      %v2412 = vsel %vm327, %v2409, %v2411
      %v2413 = vrot.slane %v2307, 1
      %v2414 = vrot.slane %v2308, 1
      %v2415 = vsel %vm327, %v2413, %v2414
      %v2416 = vrot.slane %v2309, 1
      %v2417 = vsel %vm327, %v2414, %v2416
      %v2418 = vrot.slane %v2310, 1
      %v2419 = vrot.slane %v2311, 1
      %v2420 = vsel %vm327, %v2418, %v2419
      %v2421 = vrot.slane %v2312, 1
      %v2422 = vsel %vm327, %v2419, %v2421
      %v2423 = vrot.slane %v2313, 1
      %v2424 = vrot.slane %v2314, 1
      %v2425 = vsel %vm327, %v2423, %v2424
      %v2426 = vrot.slane %v2315, 1
      %v2427 = vsel %vm327, %v2424, %v2426
      %v2428 = vrot.slane %v2316, 1
      %v2429 = vrot.slane %v2317, 1
      %v2430 = vsel %vm327, %v2428, %v2429
      %v2431 = vrot.slane %v2318, 1
      %v2432 = vsel %vm327, %v2429, %v2431
      %v2433 = vrot.slane %v2319, 1
      %v2434 = vrot.slane %v2320, 1
      %v2435 = vsel %vm327, %v2433, %v2434
      %v2436 = vrot.slane %v2321, 1
      %v2437 = vsel %vm327, %v2434, %v2436
      %v2438 = vrot.slane %v2322, 1
      %v2439 = vrot.slane %v2323, 1
      %v2440 = vsel %vm327, %v2438, %v2439
      %v2441 = vrot.slane %v2324, 1
      %v2442 = vsel %vm327, %v2439, %v2441
      %v2443 = vrot.slane %v2325, 1
      %v2444 = vrot.slane %v2326, 1
      %v2445 = vsel %vm327, %v2443, %v2444
      %v2446 = vrot.slane %v2327, 1
      %v2447 = vsel %vm327, %v2444, %v2446
      %v2448 = vrot.slane %v2328, 1
      %v2449 = vrot.slane %v2329, 1
      %v2450 = vsel %vm327, %v2448, %v2449
      %v2451 = vrot.slane %v2330, 1
      %v2452 = vsel %vm327, %v2449, %v2451
      %v2453 = vrot.slane %v2331, 1
      %v2454 = vrot.slane %v2332, 1
      %v2455 = vsel %vm327, %v2453, %v2454
      %v2456 = vrot.slane %v2333, 1
      %v2457 = vsel %vm327, %v2454, %v2456
      %v2458 = vrot.slane %v2334, 1
      %v2459 = vrot.slane %v2335, 1
      %v2460 = vsel %vm327, %v2458, %v2459
      %v2461 = vrot.slane %v2336, 1
      %v2462 = vsel %vm327, %v2459, %v2461
      %v2463 = vrot.slane %v2337, 1
      %v2464 = vrot.slane %v2338, 1
      %v2465 = vsel %vm327, %v2463, %v2464
      %v2466 = vrot.slane %v2339, 1
      %v2467 = vsel %vm327, %v2464, %v2466
      %v2468 = vrot.slane %v2340, 1
      %v2469 = vrot.slane %v2341, 1
      %v2470 = vsel %vm327, %v2468, %v2469
      %v2471 = vrot.slane %v2342, 1
      %v2472 = vsel %vm327, %v2469, %v2471
      %v2473 = vrot.slane %v2343, 1
      %v2474 = vrot.slane %v2344, 1
      %v2475 = vsel %vm327, %v2473, %v2474
      %v2476 = vrot.slane %v2345, 1
      %v2477 = vsel %vm327, %v2474, %v2476
      %v2478 = vrot.slane %v2346, 1
      %v2479 = vrot.slane %v2347, 1
      %v2480 = vsel %vm327, %v2478, %v2479
      %v2481 = vrot.slane %v2348, 1
      %v2482 = vsel %vm327, %v2479, %v2481
      %v2483 = vrot.slane %v2301, 2
      %v2484 = vrot.slane %v2302, 2
      %v2485 = vsel %vm408, %v2483, %v2484
      %v2486 = vrot.slane %v2303, 2
      %v2487 = vsel %vm408, %v2484, %v2486
      %v2488 = vrot.slane %v2304, 2
      %v2489 = vrot.slane %v2305, 2
      %v2490 = vsel %vm408, %v2488, %v2489
      %v2491 = vrot.slane %v2306, 2
      %v2492 = vsel %vm408, %v2489, %v2491
      %v2493 = vrot.slane %v2307, 2
      %v2494 = vrot.slane %v2308, 2
      %v2495 = vsel %vm408, %v2493, %v2494
      %v2496 = vrot.slane %v2309, 2
      %v2497 = vsel %vm408, %v2494, %v2496
      %v2498 = vrot.slane %v2310, 2
      %v2499 = vrot.slane %v2311, 2
      %v2500 = vsel %vm408, %v2498, %v2499
      %v2501 = vrot.slane %v2312, 2
      %v2502 = vsel %vm408, %v2499, %v2501
      %v2503 = vrot.slane %v2313, 2
      %v2504 = vrot.slane %v2314, 2
      %v2505 = vsel %vm408, %v2503, %v2504
      %v2506 = vrot.slane %v2315, 2
      %v2507 = vsel %vm408, %v2504, %v2506
      %v2508 = vrot.slane %v2316, 2
      %v2509 = vrot.slane %v2317, 2
      %v2510 = vsel %vm408, %v2508, %v2509
      %v2511 = vrot.slane %v2318, 2
      %v2512 = vsel %vm408, %v2509, %v2511
      %v2513 = vrot.slane %v2319, 2
      %v2514 = vrot.slane %v2320, 2
      %v2515 = vsel %vm408, %v2513, %v2514
      %v2516 = vrot.slane %v2321, 2
      %v2517 = vsel %vm408, %v2514, %v2516
      %v2518 = vrot.slane %v2322, 2
      %v2519 = vrot.slane %v2323, 2
      %v2520 = vsel %vm408, %v2518, %v2519
      %v2521 = vrot.slane %v2324, 2
      %v2522 = vsel %vm408, %v2519, %v2521
      %v2523 = vrot.slane %v2325, 2
      %v2524 = vrot.slane %v2326, 2
      %v2525 = vsel %vm408, %v2523, %v2524
      %v2526 = vrot.slane %v2327, 2
      %v2527 = vsel %vm408, %v2524, %v2526
      %v2528 = vrot.slane %v2328, 2
      %v2529 = vrot.slane %v2329, 2
      %v2530 = vsel %vm408, %v2528, %v2529
      %v2531 = vrot.slane %v2330, 2
      %v2532 = vsel %vm408, %v2529, %v2531
      %v2533 = vrot.slane %v2331, 2
      %v2534 = vrot.slane %v2332, 2
      %v2535 = vsel %vm408, %v2533, %v2534
      %v2536 = vrot.slane %v2333, 2
      %v2537 = vsel %vm408, %v2534, %v2536
      %v2538 = vrot.slane %v2334, 2
      %v2539 = vrot.slane %v2335, 2
      %v2540 = vsel %vm408, %v2538, %v2539
      %v2541 = vrot.slane %v2336, 2
      %v2542 = vsel %vm408, %v2539, %v2541
      %v2543 = vrot.slane %v2337, 2
      %v2544 = vrot.slane %v2338, 2
      %v2545 = vsel %vm408, %v2543, %v2544
      %v2546 = vrot.slane %v2339, 2
      %v2547 = vsel %vm408, %v2544, %v2546
      %v2548 = vrot.slane %v2340, 2
      %v2549 = vrot.slane %v2341, 2
      %v2550 = vsel %vm408, %v2548, %v2549
      %v2551 = vrot.slane %v2342, 2
      %v2552 = vsel %vm408, %v2549, %v2551
      %v2553 = vrot.slane %v2343, 2
      %v2554 = vrot.slane %v2344, 2
      %v2555 = vsel %vm408, %v2553, %v2554
      %v2556 = vrot.slane %v2345, 2
      %v2557 = vsel %vm408, %v2554, %v2556
      %v2558 = vrot.slane %v2346, 2
      %v2559 = vrot.slane %v2347, 2
      %v2560 = vsel %vm408, %v2558, %v2559
      %v2561 = vrot.slane %v2348, 2
      %v2562 = vsel %vm408, %v2559, %v2561
      %v2566 = vrot.slane %v2349, 1
      %v2567 = vrot.slane %v2350, 1
      %v2568 = vsel %vm327, %v2566, %v2567
      %v2569 = vrot.slane %v2351, 1
      %v2570 = vsel %vm327, %v2567, %v2569
      %v2571 = vrot.slane %v2349, 2
      %v2572 = vrot.slane %v2350, 2
      %v2573 = vsel %vm408, %v2571, %v2572
      %v2574 = vrot.slane %v2351, 2
      %v2575 = vsel %vm408, %v2572, %v2574
      %v2579 = vrot.slane %v2352, 1
      %v2580 = vrot.slane %v2353, 1
      %v2581 = vsel %vm327, %v2579, %v2580
      %v2582 = vrot.slane %v2354, 1
      %v2583 = vsel %vm327, %v2580, %v2582
      %v2584 = vrot.slane %v2352, 2
      %v2585 = vrot.slane %v2353, 2
      %v2586 = vsel %vm408, %v2584, %v2585
      %v2587 = vrot.slane %v2354, 2
      %v2588 = vsel %vm408, %v2585, %v2587
      %2589 = vrot.lane.b32.xlu0 %v2405, 4
      %v2590 = vpop.permute.xlu0 %2589
      %2591 = vrot.lane.b32.xlu0 %v2407, 4
      %v2592 = vpop.permute.xlu0 %2591
      %2593 = vrot.lane.b32.xlu0 %v2410, 4
      %v2594 = vpop.permute.xlu0 %2593
      %2595 = vrot.lane.b32.xlu0 %v2412, 4
      %v2596 = vpop.permute.xlu0 %2595
      %2597 = vrot.lane.b32.xlu0 %v2415, 4
      %v2598 = vpop.permute.xlu0 %2597
      %2599 = vrot.lane.b32.xlu0 %v2417, 4
      %v2600 = vpop.permute.xlu0 %2599
      %2601 = vrot.lane.b32.xlu0 %v2420, 4
      %v2602 = vpop.permute.xlu0 %2601
      %2603 = vrot.lane.b32.xlu0 %v2422, 4
      %v2604 = vpop.permute.xlu0 %2603
      %2605 = vrot.lane.b32.xlu0 %v2425, 4
      %v2606 = vpop.permute.xlu0 %2605
      %2607 = vrot.lane.b32.xlu0 %v2427, 4
      %v2608 = vpop.permute.xlu0 %2607
      %2609 = vrot.lane.b32.xlu0 %v2430, 4
      %v2610 = vpop.permute.xlu0 %2609
      %2611 = vrot.lane.b32.xlu0 %v2432, 4
      %v2612 = vpop.permute.xlu0 %2611
      %2613 = vrot.lane.b32.xlu0 %v2435, 4
      %v2614 = vpop.permute.xlu0 %2613
      %2615 = vrot.lane.b32.xlu0 %v2437, 4
      %v2616 = vpop.permute.xlu0 %2615
      %2617 = vrot.lane.b32.xlu0 %v2440, 4
      %v2618 = vpop.permute.xlu0 %2617
      %2619 = vrot.lane.b32.xlu0 %v2442, 4
      %v2620 = vpop.permute.xlu0 %2619
      %2621 = vrot.lane.b32.xlu0 %v2445, 4
      %v2622 = vpop.permute.xlu0 %2621
      %2623 = vrot.lane.b32.xlu0 %v2447, 4
      %v2624 = vpop.permute.xlu0 %2623
      %2625 = vrot.lane.b32.xlu0 %v2450, 4
      %v2626 = vpop.permute.xlu0 %2625
      %2627 = vrot.lane.b32.xlu0 %v2452, 4
      %v2628 = vpop.permute.xlu0 %2627
      %2629 = vrot.lane.b32.xlu0 %v2455, 4
      %v2630 = vpop.permute.xlu0 %2629
      %2631 = vrot.lane.b32.xlu0 %v2457, 4
      %v2632 = vpop.permute.xlu0 %2631
      %2633 = vrot.lane.b32.xlu0 %v2460, 4
      %v2634 = vpop.permute.xlu0 %2633
      %2635 = vrot.lane.b32.xlu0 %v2462, 4
      %v2636 = vpop.permute.xlu0 %2635
      %2637 = vrot.lane.b32.xlu0 %v2465, 4
      %v2638 = vpop.permute.xlu0 %2637
      %2639 = vrot.lane.b32.xlu0 %v2467, 4
      %v2640 = vpop.permute.xlu0 %2639
      %2641 = vrot.lane.b32.xlu0 %v2470, 4
      %v2642 = vpop.permute.xlu0 %2641
      %2643 = vrot.lane.b32.xlu0 %v2472, 4
      %v2644 = vpop.permute.xlu0 %2643
      %2645 = vrot.lane.b32.xlu0 %v2475, 4
      %v2646 = vpop.permute.xlu0 %2645
      %2647 = vrot.lane.b32.xlu0 %v2477, 4
      %v2648 = vpop.permute.xlu0 %2647
      %2649 = vrot.lane.b32.xlu0 %v2480, 4
      %v2650 = vpop.permute.xlu0 %2649
      %2651 = vrot.lane.b32.xlu0 %v2482, 4
      %v2652 = vpop.permute.xlu0 %2651
      %2685 = vrot.lane.b32.xlu0 %v2485, 8
      %v2686 = vpop.permute.xlu0 %2685
      %2687 = vrot.lane.b32.xlu0 %v2487, 8
      %v2688 = vpop.permute.xlu0 %2687
      %2689 = vrot.lane.b32.xlu0 %v2490, 8
      %v2690 = vpop.permute.xlu0 %2689
      %2691 = vrot.lane.b32.xlu0 %v2492, 8
      %v2692 = vpop.permute.xlu0 %2691
      %2693 = vrot.lane.b32.xlu0 %v2495, 8
      %v2694 = vpop.permute.xlu0 %2693
      %2695 = vrot.lane.b32.xlu0 %v2497, 8
      %v2696 = vpop.permute.xlu0 %2695
      %2697 = vrot.lane.b32.xlu0 %v2500, 8
      %v2698 = vpop.permute.xlu0 %2697
      %2699 = vrot.lane.b32.xlu0 %v2502, 8
      %v2700 = vpop.permute.xlu0 %2699
      %2701 = vrot.lane.b32.xlu0 %v2505, 8
      %v2702 = vpop.permute.xlu0 %2701
      %2703 = vrot.lane.b32.xlu0 %v2507, 8
      %v2704 = vpop.permute.xlu0 %2703
      %2705 = vrot.lane.b32.xlu0 %v2510, 8
      %v2706 = vpop.permute.xlu0 %2705
      %2707 = vrot.lane.b32.xlu0 %v2512, 8
      %v2708 = vpop.permute.xlu0 %2707
      %2709 = vrot.lane.b32.xlu0 %v2515, 8
      %v2710 = vpop.permute.xlu0 %2709
      %2711 = vrot.lane.b32.xlu0 %v2517, 8
      %v2712 = vpop.permute.xlu0 %2711
      %2713 = vrot.lane.b32.xlu0 %v2520, 8
      %v2714 = vpop.permute.xlu0 %2713
      %2715 = vrot.lane.b32.xlu0 %v2522, 8
      %v2716 = vpop.permute.xlu0 %2715
      %2717 = vrot.lane.b32.xlu0 %v2525, 8
      %v2718 = vpop.permute.xlu0 %2717
      %2719 = vrot.lane.b32.xlu0 %v2527, 8
      %v2720 = vpop.permute.xlu0 %2719
      %2721 = vrot.lane.b32.xlu0 %v2530, 8
      %v2722 = vpop.permute.xlu0 %2721
      %2723 = vrot.lane.b32.xlu0 %v2532, 8
      %v2724 = vpop.permute.xlu0 %2723
      %2725 = vrot.lane.b32.xlu0 %v2535, 8
      %v2726 = vpop.permute.xlu0 %2725
      %2727 = vrot.lane.b32.xlu0 %v2537, 8
      %v2728 = vpop.permute.xlu0 %2727
      %2729 = vrot.lane.b32.xlu0 %v2540, 8
      %v2730 = vpop.permute.xlu0 %2729
      %2731 = vrot.lane.b32.xlu0 %v2542, 8
      %v2732 = vpop.permute.xlu0 %2731
      %2733 = vrot.lane.b32.xlu0 %v2545, 8
      %v2734 = vpop.permute.xlu0 %2733
      %2735 = vrot.lane.b32.xlu0 %v2547, 8
      %v2736 = vpop.permute.xlu0 %2735
      %2737 = vrot.lane.b32.xlu0 %v2550, 8
      %v2738 = vpop.permute.xlu0 %2737
      %2739 = vrot.lane.b32.xlu0 %v2552, 8
      %v2740 = vpop.permute.xlu0 %2739
      %2741 = vrot.lane.b32.xlu0 %v2555, 8
      %v2742 = vpop.permute.xlu0 %2741
      %2743 = vrot.lane.b32.xlu0 %v2557, 8
      %v2744 = vpop.permute.xlu0 %2743
      %2745 = vrot.lane.b32.xlu0 %v2560, 8
      %v2746 = vpop.permute.xlu0 %2745
      %2747 = vrot.lane.b32.xlu0 %v2562, 8
      %v2748 = vpop.permute.xlu0 %2747
      %2781 = vrot.lane.b32.xlu0 %v2304, 12
      %v2782 = vpop.permute.xlu0 %2781
      %2783 = vrot.lane.b32.xlu0 %v2305, 12
      %v2784 = vpop.permute.xlu0 %2783
      %2785 = vrot.lane.b32.xlu0 %v2307, 12
      %v2786 = vpop.permute.xlu0 %2785
      %2787 = vrot.lane.b32.xlu0 %v2308, 12
      %v2788 = vpop.permute.xlu0 %2787
      %2789 = vrot.lane.b32.xlu0 %v2310, 12
      %v2790 = vpop.permute.xlu0 %2789
      %2791 = vrot.lane.b32.xlu0 %v2311, 12
      %v2792 = vpop.permute.xlu0 %2791
      %2793 = vrot.lane.b32.xlu0 %v2313, 12
      %v2794 = vpop.permute.xlu0 %2793
      %2795 = vrot.lane.b32.xlu0 %v2314, 12
      %v2796 = vpop.permute.xlu0 %2795
      %2797 = vrot.lane.b32.xlu0 %v2316, 12
      %v2798 = vpop.permute.xlu0 %2797
      %2799 = vrot.lane.b32.xlu0 %v2317, 12
      %v2800 = vpop.permute.xlu0 %2799
      %2801 = vrot.lane.b32.xlu0 %v2319, 12
      %v2802 = vpop.permute.xlu0 %2801
      %2803 = vrot.lane.b32.xlu0 %v2320, 12
      %v2804 = vpop.permute.xlu0 %2803
      %2805 = vrot.lane.b32.xlu0 %v2322, 12
      %v2806 = vpop.permute.xlu0 %2805
      %2807 = vrot.lane.b32.xlu0 %v2323, 12
      %v2808 = vpop.permute.xlu0 %2807
      %2809 = vrot.lane.b32.xlu0 %v2325, 12
      %v2810 = vpop.permute.xlu0 %2809
      %2811 = vrot.lane.b32.xlu0 %v2326, 12
      %v2812 = vpop.permute.xlu0 %2811
      %2813 = vrot.lane.b32.xlu0 %v2328, 12
      %v2814 = vpop.permute.xlu0 %2813
      %2815 = vrot.lane.b32.xlu0 %v2329, 12
      %v2816 = vpop.permute.xlu0 %2815
      %2817 = vrot.lane.b32.xlu0 %v2331, 12
      %v2818 = vpop.permute.xlu0 %2817
      %2819 = vrot.lane.b32.xlu0 %v2332, 12
      %v2820 = vpop.permute.xlu0 %2819
      %2821 = vrot.lane.b32.xlu0 %v2334, 12
      %v2822 = vpop.permute.xlu0 %2821
      %2823 = vrot.lane.b32.xlu0 %v2335, 12
      %v2824 = vpop.permute.xlu0 %2823
      %2825 = vrot.lane.b32.xlu0 %v2337, 12
      %v2826 = vpop.permute.xlu0 %2825
      %2827 = vrot.lane.b32.xlu0 %v2338, 12
      %v2828 = vpop.permute.xlu0 %2827
      %2829 = vrot.lane.b32.xlu0 %v2340, 12
      %v2830 = vpop.permute.xlu0 %2829
      %2831 = vrot.lane.b32.xlu0 %v2341, 12
      %v2832 = vpop.permute.xlu0 %2831
      %2833 = vrot.lane.b32.xlu0 %v2343, 12
      %v2834 = vpop.permute.xlu0 %2833
      %2835 = vrot.lane.b32.xlu0 %v2344, 12
      %v2836 = vpop.permute.xlu0 %2835
      %2837 = vrot.lane.b32.xlu0 %v2346, 12
      %v2838 = vpop.permute.xlu0 %2837
      %2839 = vrot.lane.b32.xlu0 %v2347, 12
      %v2840 = vpop.permute.xlu0 %2839
      %2841 = vrot.lane.b32.xlu0 %v2349, 12
      %v2842 = vpop.permute.xlu0 %2841
      %2843 = vrot.lane.b32.xlu0 %v2350, 12
      %v2844 = vpop.permute.xlu0 %2843
      %2877 = vrot.lane.b32.xlu0 %v2410, 16
      %v2878 = vpop.permute.xlu0 %2877
      %2879 = vrot.lane.b32.xlu0 %v2412, 16
      %v2880 = vpop.permute.xlu0 %2879
      %2881 = vrot.lane.b32.xlu0 %v2415, 16
      %v2882 = vpop.permute.xlu0 %2881
      %2883 = vrot.lane.b32.xlu0 %v2417, 16
      %v2884 = vpop.permute.xlu0 %2883
      %2885 = vrot.lane.b32.xlu0 %v2420, 16
      %v2886 = vpop.permute.xlu0 %2885
      %2887 = vrot.lane.b32.xlu0 %v2422, 16
      %v2888 = vpop.permute.xlu0 %2887
      %2889 = vrot.lane.b32.xlu0 %v2425, 16
      %v2890 = vpop.permute.xlu0 %2889
      %2891 = vrot.lane.b32.xlu0 %v2427, 16
      %v2892 = vpop.permute.xlu0 %2891
      %2893 = vrot.lane.b32.xlu0 %v2430, 16
      %v2894 = vpop.permute.xlu0 %2893
      %2895 = vrot.lane.b32.xlu0 %v2432, 16
      %v2896 = vpop.permute.xlu0 %2895
      %2897 = vrot.lane.b32.xlu0 %v2435, 16
      %v2898 = vpop.permute.xlu0 %2897
      %2899 = vrot.lane.b32.xlu0 %v2437, 16
      %v2900 = vpop.permute.xlu0 %2899
      %2901 = vrot.lane.b32.xlu0 %v2440, 16
      %v2902 = vpop.permute.xlu0 %2901
      %2903 = vrot.lane.b32.xlu0 %v2442, 16
      %v2904 = vpop.permute.xlu0 %2903
      %2905 = vrot.lane.b32.xlu0 %v2445, 16
      %v2906 = vpop.permute.xlu0 %2905
      %2907 = vrot.lane.b32.xlu0 %v2447, 16
      %v2908 = vpop.permute.xlu0 %2907
      %2909 = vrot.lane.b32.xlu0 %v2450, 16
      %v2910 = vpop.permute.xlu0 %2909
      %2911 = vrot.lane.b32.xlu0 %v2452, 16
      %v2912 = vpop.permute.xlu0 %2911
      %2913 = vrot.lane.b32.xlu0 %v2455, 16
      %v2914 = vpop.permute.xlu0 %2913
      %2915 = vrot.lane.b32.xlu0 %v2457, 16
      %v2916 = vpop.permute.xlu0 %2915
      %2917 = vrot.lane.b32.xlu0 %v2460, 16
      %v2918 = vpop.permute.xlu0 %2917
      %2919 = vrot.lane.b32.xlu0 %v2462, 16
      %v2920 = vpop.permute.xlu0 %2919
      %2921 = vrot.lane.b32.xlu0 %v2465, 16
      %v2922 = vpop.permute.xlu0 %2921
      %2923 = vrot.lane.b32.xlu0 %v2467, 16
      %v2924 = vpop.permute.xlu0 %2923
      %2925 = vrot.lane.b32.xlu0 %v2470, 16
      %v2926 = vpop.permute.xlu0 %2925
      %2927 = vrot.lane.b32.xlu0 %v2472, 16
      %v2928 = vpop.permute.xlu0 %2927
      %2929 = vrot.lane.b32.xlu0 %v2475, 16
      %v2930 = vpop.permute.xlu0 %2929
      %2931 = vrot.lane.b32.xlu0 %v2477, 16
      %v2932 = vpop.permute.xlu0 %2931
      %2933 = vrot.lane.b32.xlu0 %v2480, 16
      %v2934 = vpop.permute.xlu0 %2933
      %2935 = vrot.lane.b32.xlu0 %v2482, 16
      %v2936 = vpop.permute.xlu0 %2935
      %2937 = vrot.lane.b32.xlu0 %v2568, 16
      %v2938 = vpop.permute.xlu0 %2937
      %2939 = vrot.lane.b32.xlu0 %v2570, 16
      %v2940 = vpop.permute.xlu0 %2939
      %2973 = vrot.lane.b32.xlu0 %v2490, 20
      %v2974 = vpop.permute.xlu0 %2973
      %2975 = vrot.lane.b32.xlu0 %v2492, 20
      %v2976 = vpop.permute.xlu0 %2975
      %2977 = vrot.lane.b32.xlu0 %v2495, 20
      %v2978 = vpop.permute.xlu0 %2977
      %2979 = vrot.lane.b32.xlu0 %v2497, 20
      %v2980 = vpop.permute.xlu0 %2979
      %2981 = vrot.lane.b32.xlu0 %v2500, 20
      %v2982 = vpop.permute.xlu0 %2981
      %2983 = vrot.lane.b32.xlu0 %v2502, 20
      %v2984 = vpop.permute.xlu0 %2983
      %2985 = vrot.lane.b32.xlu0 %v2505, 20
      %v2986 = vpop.permute.xlu0 %2985
      %2987 = vrot.lane.b32.xlu0 %v2507, 20
      %v2988 = vpop.permute.xlu0 %2987
      %2989 = vrot.lane.b32.xlu0 %v2510, 20
      %v2990 = vpop.permute.xlu0 %2989
      %2991 = vrot.lane.b32.xlu0 %v2512, 20
      %v2992 = vpop.permute.xlu0 %2991
      %2993 = vrot.lane.b32.xlu0 %v2515, 20
      %v2994 = vpop.permute.xlu0 %2993
      %2995 = vrot.lane.b32.xlu0 %v2517, 20
      %v2996 = vpop.permute.xlu0 %2995
      %2997 = vrot.lane.b32.xlu0 %v2520, 20
      %v2998 = vpop.permute.xlu0 %2997
      %2999 = vrot.lane.b32.xlu0 %v2522, 20
      %v3000 = vpop.permute.xlu0 %2999
      %3001 = vrot.lane.b32.xlu0 %v2525, 20
      %v3002 = vpop.permute.xlu0 %3001
      %3003 = vrot.lane.b32.xlu0 %v2527, 20
      %v3004 = vpop.permute.xlu0 %3003
      %3005 = vrot.lane.b32.xlu0 %v2530, 20
      %v3006 = vpop.permute.xlu0 %3005
      %3007 = vrot.lane.b32.xlu0 %v2532, 20
      %v3008 = vpop.permute.xlu0 %3007
      %3009 = vrot.lane.b32.xlu0 %v2535, 20
      %v3010 = vpop.permute.xlu0 %3009
      %3011 = vrot.lane.b32.xlu0 %v2537, 20
      %v3012 = vpop.permute.xlu0 %3011
      %3013 = vrot.lane.b32.xlu0 %v2540, 20
      %v3014 = vpop.permute.xlu0 %3013
      %3015 = vrot.lane.b32.xlu0 %v2542, 20
      %v3016 = vpop.permute.xlu0 %3015
      %3017 = vrot.lane.b32.xlu0 %v2545, 20
      %v3018 = vpop.permute.xlu0 %3017
      %3019 = vrot.lane.b32.xlu0 %v2547, 20
      %v3020 = vpop.permute.xlu0 %3019
      %3021 = vrot.lane.b32.xlu0 %v2550, 20
      %v3022 = vpop.permute.xlu0 %3021
      %3023 = vrot.lane.b32.xlu0 %v2552, 20
      %v3024 = vpop.permute.xlu0 %3023
      %3025 = vrot.lane.b32.xlu0 %v2555, 20
      %v3026 = vpop.permute.xlu0 %3025
      %3027 = vrot.lane.b32.xlu0 %v2557, 20
      %v3028 = vpop.permute.xlu0 %3027
      %3029 = vrot.lane.b32.xlu0 %v2560, 20
      %v3030 = vpop.permute.xlu0 %3029
      %3031 = vrot.lane.b32.xlu0 %v2562, 20
      %v3032 = vpop.permute.xlu0 %3031
      %3033 = vrot.lane.b32.xlu0 %v2573, 20
      %v3034 = vpop.permute.xlu0 %3033
      %3035 = vrot.lane.b32.xlu0 %v2575, 20
      %v3036 = vpop.permute.xlu0 %3035
      %3069 = vrot.lane.b32.xlu0 %v2307, 24
      %v3070 = vpop.permute.xlu0 %3069
      %3071 = vrot.lane.b32.xlu0 %v2308, 24
      %v3072 = vpop.permute.xlu0 %3071
      %3073 = vrot.lane.b32.xlu0 %v2310, 24
      %v3074 = vpop.permute.xlu0 %3073
      %3075 = vrot.lane.b32.xlu0 %v2311, 24
      %v3076 = vpop.permute.xlu0 %3075
      %3077 = vrot.lane.b32.xlu0 %v2313, 24
      %v3078 = vpop.permute.xlu0 %3077
      %3079 = vrot.lane.b32.xlu0 %v2314, 24
      %v3080 = vpop.permute.xlu0 %3079
      %3081 = vrot.lane.b32.xlu0 %v2316, 24
      %v3082 = vpop.permute.xlu0 %3081
      %3083 = vrot.lane.b32.xlu0 %v2317, 24
      %v3084 = vpop.permute.xlu0 %3083
      %3085 = vrot.lane.b32.xlu0 %v2319, 24
      %v3086 = vpop.permute.xlu0 %3085
      %3087 = vrot.lane.b32.xlu0 %v2320, 24
      %v3088 = vpop.permute.xlu0 %3087
      %3089 = vrot.lane.b32.xlu0 %v2322, 24
      %v3090 = vpop.permute.xlu0 %3089
      %3091 = vrot.lane.b32.xlu0 %v2323, 24
      %v3092 = vpop.permute.xlu0 %3091
      %3093 = vrot.lane.b32.xlu0 %v2325, 24
      %v3094 = vpop.permute.xlu0 %3093
      %3095 = vrot.lane.b32.xlu0 %v2326, 24
      %v3096 = vpop.permute.xlu0 %3095
      %3097 = vrot.lane.b32.xlu0 %v2328, 24
      %v3098 = vpop.permute.xlu0 %3097
      %3099 = vrot.lane.b32.xlu0 %v2329, 24
      %v3100 = vpop.permute.xlu0 %3099
      %3101 = vrot.lane.b32.xlu0 %v2331, 24
      %v3102 = vpop.permute.xlu0 %3101
      %3103 = vrot.lane.b32.xlu0 %v2332, 24
      %v3104 = vpop.permute.xlu0 %3103
      %3105 = vrot.lane.b32.xlu0 %v2334, 24
      %v3106 = vpop.permute.xlu0 %3105
      %3107 = vrot.lane.b32.xlu0 %v2335, 24
      %v3108 = vpop.permute.xlu0 %3107
      %3109 = vrot.lane.b32.xlu0 %v2337, 24
      %v3110 = vpop.permute.xlu0 %3109
      %3111 = vrot.lane.b32.xlu0 %v2338, 24
      %v3112 = vpop.permute.xlu0 %3111
      %3113 = vrot.lane.b32.xlu0 %v2340, 24
      %v3114 = vpop.permute.xlu0 %3113
      %3115 = vrot.lane.b32.xlu0 %v2341, 24
      %v3116 = vpop.permute.xlu0 %3115
      %3117 = vrot.lane.b32.xlu0 %v2343, 24
      %v3118 = vpop.permute.xlu0 %3117
      %3119 = vrot.lane.b32.xlu0 %v2344, 24
      %v3120 = vpop.permute.xlu0 %3119
      %3121 = vrot.lane.b32.xlu0 %v2346, 24
      %v3122 = vpop.permute.xlu0 %3121
      %3123 = vrot.lane.b32.xlu0 %v2347, 24
      %v3124 = vpop.permute.xlu0 %3123
      %3125 = vrot.lane.b32.xlu0 %v2349, 24
      %v3126 = vpop.permute.xlu0 %3125
      %3127 = vrot.lane.b32.xlu0 %v2350, 24
      %v3128 = vpop.permute.xlu0 %3127
      %3129 = vrot.lane.b32.xlu0 %v2352, 24
      %v3130 = vpop.permute.xlu0 %3129
      %3131 = vrot.lane.b32.xlu0 %v2353, 24
      %v3132 = vpop.permute.xlu0 %3131
      %3165 = vrot.lane.b32.xlu0 %v2415, 28
      %v3166 = vpop.permute.xlu0 %3165
      %3167 = vrot.lane.b32.xlu0 %v2417, 28
      %v3168 = vpop.permute.xlu0 %3167
      %3169 = vrot.lane.b32.xlu0 %v2420, 28
      %v3170 = vpop.permute.xlu0 %3169
      %3171 = vrot.lane.b32.xlu0 %v2422, 28
      %v3172 = vpop.permute.xlu0 %3171
      %3173 = vrot.lane.b32.xlu0 %v2425, 28
      %v3174 = vpop.permute.xlu0 %3173
      %3175 = vrot.lane.b32.xlu0 %v2427, 28
      %v3176 = vpop.permute.xlu0 %3175
      %3177 = vrot.lane.b32.xlu0 %v2430, 28
      %v3178 = vpop.permute.xlu0 %3177
      %3179 = vrot.lane.b32.xlu0 %v2432, 28
      %v3180 = vpop.permute.xlu0 %3179
      %3181 = vrot.lane.b32.xlu0 %v2435, 28
      %v3182 = vpop.permute.xlu0 %3181
      %3183 = vrot.lane.b32.xlu0 %v2437, 28
      %v3184 = vpop.permute.xlu0 %3183
      %3185 = vrot.lane.b32.xlu0 %v2440, 28
      %v3186 = vpop.permute.xlu0 %3185
      %3187 = vrot.lane.b32.xlu0 %v2442, 28
      %v3188 = vpop.permute.xlu0 %3187
      %3189 = vrot.lane.b32.xlu0 %v2445, 28
      %v3190 = vpop.permute.xlu0 %3189
      %3191 = vrot.lane.b32.xlu0 %v2447, 28
      %v3192 = vpop.permute.xlu0 %3191
      %3193 = vrot.lane.b32.xlu0 %v2450, 28
      %v3194 = vpop.permute.xlu0 %3193
      %3195 = vrot.lane.b32.xlu0 %v2452, 28
      %v3196 = vpop.permute.xlu0 %3195
      %3197 = vrot.lane.b32.xlu0 %v2455, 28
      %v3198 = vpop.permute.xlu0 %3197
      %3199 = vrot.lane.b32.xlu0 %v2457, 28
      %v3200 = vpop.permute.xlu0 %3199
      %3201 = vrot.lane.b32.xlu0 %v2460, 28
      %v3202 = vpop.permute.xlu0 %3201
      %3203 = vrot.lane.b32.xlu0 %v2462, 28
      %v3204 = vpop.permute.xlu0 %3203
      %3205 = vrot.lane.b32.xlu0 %v2465, 28
      %v3206 = vpop.permute.xlu0 %3205
      %3207 = vrot.lane.b32.xlu0 %v2467, 28
      %v3208 = vpop.permute.xlu0 %3207
      %3209 = vrot.lane.b32.xlu0 %v2470, 28
      %v3210 = vpop.permute.xlu0 %3209
      %3211 = vrot.lane.b32.xlu0 %v2472, 28
      %v3212 = vpop.permute.xlu0 %3211
      %3213 = vrot.lane.b32.xlu0 %v2475, 28
      %v3214 = vpop.permute.xlu0 %3213
      %3215 = vrot.lane.b32.xlu0 %v2477, 28
      %v3216 = vpop.permute.xlu0 %3215
      %3217 = vrot.lane.b32.xlu0 %v2480, 28
      %v3218 = vpop.permute.xlu0 %3217
      %3219 = vrot.lane.b32.xlu0 %v2482, 28
      %v3220 = vpop.permute.xlu0 %3219
      %3221 = vrot.lane.b32.xlu0 %v2568, 28
      %v3222 = vpop.permute.xlu0 %3221
      %3223 = vrot.lane.b32.xlu0 %v2570, 28
      %v3224 = vpop.permute.xlu0 %3223
      %3225 = vrot.lane.b32.xlu0 %v2581, 28
      %v3226 = vpop.permute.xlu0 %3225
      %3227 = vrot.lane.b32.xlu0 %v2583, 28
      %v3228 = vpop.permute.xlu0 %3227
      %3261 = vrot.lane.b32.xlu0 %v2495, 32
      %v3262 = vpop.permute.xlu0 %3261
      %3263 = vrot.lane.b32.xlu0 %v2497, 32
      %v3264 = vpop.permute.xlu0 %3263
      %3265 = vrot.lane.b32.xlu0 %v2500, 32
      %v3266 = vpop.permute.xlu0 %3265
      %3267 = vrot.lane.b32.xlu0 %v2502, 32
      %v3268 = vpop.permute.xlu0 %3267
      %3269 = vrot.lane.b32.xlu0 %v2505, 32
      %v3270 = vpop.permute.xlu0 %3269
      %3271 = vrot.lane.b32.xlu0 %v2507, 32
      %v3272 = vpop.permute.xlu0 %3271
      %3273 = vrot.lane.b32.xlu0 %v2510, 32
      %v3274 = vpop.permute.xlu0 %3273
      %3275 = vrot.lane.b32.xlu0 %v2512, 32
      %v3276 = vpop.permute.xlu0 %3275
      %3277 = vrot.lane.b32.xlu0 %v2515, 32
      %v3278 = vpop.permute.xlu0 %3277
      %3279 = vrot.lane.b32.xlu0 %v2517, 32
      %v3280 = vpop.permute.xlu0 %3279
      %3281 = vrot.lane.b32.xlu0 %v2520, 32
      %v3282 = vpop.permute.xlu0 %3281
      %3283 = vrot.lane.b32.xlu0 %v2522, 32
      %v3284 = vpop.permute.xlu0 %3283
      %3285 = vrot.lane.b32.xlu0 %v2525, 32
      %v3286 = vpop.permute.xlu0 %3285
      %3287 = vrot.lane.b32.xlu0 %v2527, 32
      %v3288 = vpop.permute.xlu0 %3287
      %3289 = vrot.lane.b32.xlu0 %v2530, 32
      %v3290 = vpop.permute.xlu0 %3289
      %3291 = vrot.lane.b32.xlu0 %v2532, 32
      %v3292 = vpop.permute.xlu0 %3291
      %3293 = vrot.lane.b32.xlu0 %v2535, 32
      %v3294 = vpop.permute.xlu0 %3293
      %3295 = vrot.lane.b32.xlu0 %v2537, 32
      %v3296 = vpop.permute.xlu0 %3295
      %3297 = vrot.lane.b32.xlu0 %v2540, 32
      %v3298 = vpop.permute.xlu0 %3297
      %3299 = vrot.lane.b32.xlu0 %v2542, 32
      %v3300 = vpop.permute.xlu0 %3299
      %3301 = vrot.lane.b32.xlu0 %v2545, 32
      %v3302 = vpop.permute.xlu0 %3301
      %3303 = vrot.lane.b32.xlu0 %v2547, 32
      %v3304 = vpop.permute.xlu0 %3303
      %3305 = vrot.lane.b32.xlu0 %v2550, 32
      %v3306 = vpop.permute.xlu0 %3305
      %3307 = vrot.lane.b32.xlu0 %v2552, 32
      %v3308 = vpop.permute.xlu0 %3307
      %3309 = vrot.lane.b32.xlu0 %v2555, 32
      %v3310 = vpop.permute.xlu0 %3309
      %3311 = vrot.lane.b32.xlu0 %v2557, 32
      %v3312 = vpop.permute.xlu0 %3311
      %3313 = vrot.lane.b32.xlu0 %v2560, 32
      %v3314 = vpop.permute.xlu0 %3313
      %3315 = vrot.lane.b32.xlu0 %v2562, 32
      %v3316 = vpop.permute.xlu0 %3315
      %3317 = vrot.lane.b32.xlu0 %v2573, 32
      %v3318 = vpop.permute.xlu0 %3317
      %3319 = vrot.lane.b32.xlu0 %v2575, 32
      %v3320 = vpop.permute.xlu0 %3319
      %3321 = vrot.lane.b32.xlu0 %v2586, 32
      %v3322 = vpop.permute.xlu0 %3321
      %3323 = vrot.lane.b32.xlu0 %v2588, 32
      %v3324 = vpop.permute.xlu0 %3323
      %v3357 = vsel %vm1315, %v2301, %v2590
      %v3358 = vsel %vm1315, %v2302, %v2592
      %v3359 = vsel %vm1315, %v2304, %v2594
      %v3360 = vsel %vm1315, %v2305, %v2596
      %v3361 = vsel %vm1315, %v2307, %v2598
      %v3362 = vsel %vm1315, %v2308, %v2600
      %v3363 = vsel %vm1315, %v2310, %v2602
      %v3364 = vsel %vm1315, %v2311, %v2604
      %v3365 = vsel %vm1315, %v2313, %v2606
      %v3366 = vsel %vm1315, %v2314, %v2608
      %v3367 = vsel %vm1315, %v2316, %v2610
      %v3368 = vsel %vm1315, %v2317, %v2612
      %v3369 = vsel %vm1315, %v2319, %v2614
      %v3370 = vsel %vm1315, %v2320, %v2616
      %v3371 = vsel %vm1315, %v2322, %v2618
      %v3372 = vsel %vm1315, %v2323, %v2620
      %v3373 = vsel %vm1315, %v2325, %v2622
      %v3374 = vsel %vm1315, %v2326, %v2624
      %v3375 = vsel %vm1315, %v2328, %v2626
      %v3376 = vsel %vm1315, %v2329, %v2628
      %v3377 = vsel %vm1315, %v2331, %v2630
      %v3378 = vsel %vm1315, %v2332, %v2632
      %v3379 = vsel %vm1315, %v2334, %v2634
      %v3380 = vsel %vm1315, %v2335, %v2636
      %v3381 = vsel %vm1315, %v2337, %v2638
      %v3382 = vsel %vm1315, %v2338, %v2640
      %v3383 = vsel %vm1315, %v2340, %v2642
      %v3384 = vsel %vm1315, %v2341, %v2644
      %v3385 = vsel %vm1315, %v2343, %v2646
      %v3386 = vsel %vm1315, %v2344, %v2648
      %v3387 = vsel %vm1315, %v2346, %v2650
      %v3388 = vsel %vm1315, %v2347, %v2652
      %v3389 = vsel %vm1348, %v3357, %v2686
      %v3390 = vsel %vm1348, %v3358, %v2688
      %v3391 = vsel %vm1348, %v3359, %v2690
      %v3392 = vsel %vm1348, %v3360, %v2692
      %v3393 = vsel %vm1348, %v3361, %v2694
      %v3394 = vsel %vm1348, %v3362, %v2696
      %v3395 = vsel %vm1348, %v3363, %v2698
      %v3396 = vsel %vm1348, %v3364, %v2700
      %v3397 = vsel %vm1348, %v3365, %v2702
      %v3398 = vsel %vm1348, %v3366, %v2704
      %v3399 = vsel %vm1348, %v3367, %v2706
      %v3400 = vsel %vm1348, %v3368, %v2708
      %v3401 = vsel %vm1348, %v3369, %v2710
      %v3402 = vsel %vm1348, %v3370, %v2712
      %v3403 = vsel %vm1348, %v3371, %v2714
      %v3404 = vsel %vm1348, %v3372, %v2716
      %v3405 = vsel %vm1348, %v3373, %v2718
      %v3406 = vsel %vm1348, %v3374, %v2720
      %v3407 = vsel %vm1348, %v3375, %v2722
      %v3408 = vsel %vm1348, %v3376, %v2724
      %v3409 = vsel %vm1348, %v3377, %v2726
      %v3410 = vsel %vm1348, %v3378, %v2728
      %v3411 = vsel %vm1348, %v3379, %v2730
      %v3412 = vsel %vm1348, %v3380, %v2732
      %v3413 = vsel %vm1348, %v3381, %v2734
      %v3414 = vsel %vm1348, %v3382, %v2736
      %v3415 = vsel %vm1348, %v3383, %v2738
      %v3416 = vsel %vm1348, %v3384, %v2740
      %v3417 = vsel %vm1348, %v3385, %v2742
      %v3418 = vsel %vm1348, %v3386, %v2744
      %v3419 = vsel %vm1348, %v3387, %v2746
      %v3420 = vsel %vm1348, %v3388, %v2748
      %v3421 = vsel %vm1381, %v3389, %v2782
      %v3422 = vsel %vm1381, %v3390, %v2784
      %v3423 = vsel %vm1381, %v3391, %v2786
      %v3424 = vsel %vm1381, %v3392, %v2788
      %v3425 = vsel %vm1381, %v3393, %v2790
      %v3426 = vsel %vm1381, %v3394, %v2792
      %v3427 = vsel %vm1381, %v3395, %v2794
      %v3428 = vsel %vm1381, %v3396, %v2796
      %v3429 = vsel %vm1381, %v3397, %v2798
      %v3430 = vsel %vm1381, %v3398, %v2800
      %v3431 = vsel %vm1381, %v3399, %v2802
      %v3432 = vsel %vm1381, %v3400, %v2804
      %v3433 = vsel %vm1381, %v3401, %v2806
      %v3434 = vsel %vm1381, %v3402, %v2808
      %v3435 = vsel %vm1381, %v3403, %v2810
      %v3436 = vsel %vm1381, %v3404, %v2812
      %v3437 = vsel %vm1381, %v3405, %v2814
      %v3438 = vsel %vm1381, %v3406, %v2816
      %v3439 = vsel %vm1381, %v3407, %v2818
      %v3440 = vsel %vm1381, %v3408, %v2820
      %v3441 = vsel %vm1381, %v3409, %v2822
      %v3442 = vsel %vm1381, %v3410, %v2824
      %v3443 = vsel %vm1381, %v3411, %v2826
      %v3444 = vsel %vm1381, %v3412, %v2828
      %v3445 = vsel %vm1381, %v3413, %v2830
      %v3446 = vsel %vm1381, %v3414, %v2832
      %v3447 = vsel %vm1381, %v3415, %v2834
      %v3448 = vsel %vm1381, %v3416, %v2836
      %v3449 = vsel %vm1381, %v3417, %v2838
      %v3450 = vsel %vm1381, %v3418, %v2840
      %v3451 = vsel %vm1381, %v3419, %v2842
      %v3452 = vsel %vm1381, %v3420, %v2844
      %v3453 = vsel %vm1414, %v3421, %v2878
      %v3454 = vsel %vm1414, %v3422, %v2880
      %v3455 = vsel %vm1414, %v3423, %v2882
      %v3456 = vsel %vm1414, %v3424, %v2884
      %v3457 = vsel %vm1414, %v3425, %v2886
      %v3458 = vsel %vm1414, %v3426, %v2888
      %v3459 = vsel %vm1414, %v3427, %v2890
      %v3460 = vsel %vm1414, %v3428, %v2892
      %v3461 = vsel %vm1414, %v3429, %v2894
      %v3462 = vsel %vm1414, %v3430, %v2896
      %v3463 = vsel %vm1414, %v3431, %v2898
      %v3464 = vsel %vm1414, %v3432, %v2900
      %v3465 = vsel %vm1414, %v3433, %v2902
      %v3466 = vsel %vm1414, %v3434, %v2904
      %v3467 = vsel %vm1414, %v3435, %v2906
      %v3468 = vsel %vm1414, %v3436, %v2908
      %v3469 = vsel %vm1414, %v3437, %v2910
      %v3470 = vsel %vm1414, %v3438, %v2912
      %v3471 = vsel %vm1414, %v3439, %v2914
      %v3472 = vsel %vm1414, %v3440, %v2916
      %v3473 = vsel %vm1414, %v3441, %v2918
      %v3474 = vsel %vm1414, %v3442, %v2920
      %v3475 = vsel %vm1414, %v3443, %v2922
      %v3476 = vsel %vm1414, %v3444, %v2924
      %v3477 = vsel %vm1414, %v3445, %v2926
      %v3478 = vsel %vm1414, %v3446, %v2928
      %v3479 = vsel %vm1414, %v3447, %v2930
      %v3480 = vsel %vm1414, %v3448, %v2932
      %v3481 = vsel %vm1414, %v3449, %v2934
      %v3482 = vsel %vm1414, %v3450, %v2936
      %v3483 = vsel %vm1414, %v3451, %v2938
      %v3484 = vsel %vm1414, %v3452, %v2940
      %v3485 = vsel %vm1447, %v3453, %v2974
      %v3486 = vsel %vm1447, %v3454, %v2976
      %v3487 = vsel %vm1447, %v3455, %v2978
      %v3488 = vsel %vm1447, %v3456, %v2980
      %v3489 = vsel %vm1447, %v3457, %v2982
      %v3490 = vsel %vm1447, %v3458, %v2984
      %v3491 = vsel %vm1447, %v3459, %v2986
      %v3492 = vsel %vm1447, %v3460, %v2988
      %v3493 = vsel %vm1447, %v3461, %v2990
      %v3494 = vsel %vm1447, %v3462, %v2992
      %v3495 = vsel %vm1447, %v3463, %v2994
      %v3496 = vsel %vm1447, %v3464, %v2996
      %v3497 = vsel %vm1447, %v3465, %v2998
      %v3498 = vsel %vm1447, %v3466, %v3000
      %v3499 = vsel %vm1447, %v3467, %v3002
      %v3500 = vsel %vm1447, %v3468, %v3004
      %v3501 = vsel %vm1447, %v3469, %v3006
      %v3502 = vsel %vm1447, %v3470, %v3008
      %v3503 = vsel %vm1447, %v3471, %v3010
      %v3504 = vsel %vm1447, %v3472, %v3012
      %v3505 = vsel %vm1447, %v3473, %v3014
      %v3506 = vsel %vm1447, %v3474, %v3016
      %v3507 = vsel %vm1447, %v3475, %v3018
      %v3508 = vsel %vm1447, %v3476, %v3020
      %v3509 = vsel %vm1447, %v3477, %v3022
      %v3510 = vsel %vm1447, %v3478, %v3024
      %v3511 = vsel %vm1447, %v3479, %v3026
      %v3512 = vsel %vm1447, %v3480, %v3028
      %v3513 = vsel %vm1447, %v3481, %v3030
      %v3514 = vsel %vm1447, %v3482, %v3032
      %v3515 = vsel %vm1447, %v3483, %v3034
      %v3516 = vsel %vm1447, %v3484, %v3036
      %v3517 = vsel %vm1480, %v3485, %v3070
      %v3518 = vsel %vm1480, %v3486, %v3072
      %v3519 = vsel %vm1480, %v3487, %v3074
      %v3520 = vsel %vm1480, %v3488, %v3076
      %v3521 = vsel %vm1480, %v3489, %v3078
      %v3522 = vsel %vm1480, %v3490, %v3080
      %v3523 = vsel %vm1480, %v3491, %v3082
      %v3524 = vsel %vm1480, %v3492, %v3084
      %v3525 = vsel %vm1480, %v3493, %v3086
      %v3526 = vsel %vm1480, %v3494, %v3088
      %v3527 = vsel %vm1480, %v3495, %v3090
      %v3528 = vsel %vm1480, %v3496, %v3092
      %v3529 = vsel %vm1480, %v3497, %v3094
      %v3530 = vsel %vm1480, %v3498, %v3096
      %v3531 = vsel %vm1480, %v3499, %v3098
      %v3532 = vsel %vm1480, %v3500, %v3100
      %v3533 = vsel %vm1480, %v3501, %v3102
      %v3534 = vsel %vm1480, %v3502, %v3104
      %v3535 = vsel %vm1480, %v3503, %v3106
      %v3536 = vsel %vm1480, %v3504, %v3108
      %v3537 = vsel %vm1480, %v3505, %v3110
      %v3538 = vsel %vm1480, %v3506, %v3112
      %v3539 = vsel %vm1480, %v3507, %v3114
      %v3540 = vsel %vm1480, %v3508, %v3116
      %v3541 = vsel %vm1480, %v3509, %v3118
      %v3542 = vsel %vm1480, %v3510, %v3120
      %v3543 = vsel %vm1480, %v3511, %v3122
      %v3544 = vsel %vm1480, %v3512, %v3124
      %v3545 = vsel %vm1480, %v3513, %v3126
      %v3546 = vsel %vm1480, %v3514, %v3128
      %v3547 = vsel %vm1480, %v3515, %v3130
      %v3548 = vsel %vm1480, %v3516, %v3132
      %v3549 = vsel %vm1513, %v3517, %v3166
      %v3550 = vsel %vm1513, %v3518, %v3168
      %v3551 = vsel %vm1513, %v3519, %v3170
      %v3552 = vsel %vm1513, %v3520, %v3172
      %v3553 = vsel %vm1513, %v3521, %v3174
      %v3554 = vsel %vm1513, %v3522, %v3176
      %v3555 = vsel %vm1513, %v3523, %v3178
      %v3556 = vsel %vm1513, %v3524, %v3180
      %v3557 = vsel %vm1513, %v3525, %v3182
      %v3558 = vsel %vm1513, %v3526, %v3184
      %v3559 = vsel %vm1513, %v3527, %v3186
      %v3560 = vsel %vm1513, %v3528, %v3188
      %v3561 = vsel %vm1513, %v3529, %v3190
      %v3562 = vsel %vm1513, %v3530, %v3192
      %v3563 = vsel %vm1513, %v3531, %v3194
      %v3564 = vsel %vm1513, %v3532, %v3196
      %v3565 = vsel %vm1513, %v3533, %v3198
      %v3566 = vsel %vm1513, %v3534, %v3200
      %v3567 = vsel %vm1513, %v3535, %v3202
      %v3568 = vsel %vm1513, %v3536, %v3204
      %v3569 = vsel %vm1513, %v3537, %v3206
      %v3570 = vsel %vm1513, %v3538, %v3208
      %v3571 = vsel %vm1513, %v3539, %v3210
      %v3572 = vsel %vm1513, %v3540, %v3212
      %v3573 = vsel %vm1513, %v3541, %v3214
      %v3574 = vsel %vm1513, %v3542, %v3216
      %v3575 = vsel %vm1513, %v3543, %v3218
      %v3576 = vsel %vm1513, %v3544, %v3220
      %v3577 = vsel %vm1513, %v3545, %v3222
      %v3578 = vsel %vm1513, %v3546, %v3224
      %v3579 = vsel %vm1513, %v3547, %v3226
      %v3580 = vsel %vm1513, %v3548, %v3228
      %v3581 = vsel %vm1546, %v3549, %v3262
      %v3582 = vsel %vm1546, %v3550, %v3264
      %v3583 = vsel %vm1546, %v3551, %v3266
      %v3584 = vsel %vm1546, %v3552, %v3268
      %v3585 = vsel %vm1546, %v3553, %v3270
      %v3586 = vsel %vm1546, %v3554, %v3272
      %v3587 = vsel %vm1546, %v3555, %v3274
      %v3588 = vsel %vm1546, %v3556, %v3276
      %v3589 = vsel %vm1546, %v3557, %v3278
      %v3590 = vsel %vm1546, %v3558, %v3280
      %v3591 = vsel %vm1546, %v3559, %v3282
      %v3592 = vsel %vm1546, %v3560, %v3284
      %v3593 = vsel %vm1546, %v3561, %v3286
      %v3594 = vsel %vm1546, %v3562, %v3288
      %v3595 = vsel %vm1546, %v3563, %v3290
      %v3596 = vsel %vm1546, %v3564, %v3292
      %v3597 = vsel %vm1546, %v3565, %v3294
      %v3598 = vsel %vm1546, %v3566, %v3296
      %v3599 = vsel %vm1546, %v3567, %v3298
      %v3600 = vsel %vm1546, %v3568, %v3300
      %v3601 = vsel %vm1546, %v3569, %v3302
      %v3602 = vsel %vm1546, %v3570, %v3304
      %v3603 = vsel %vm1546, %v3571, %v3306
      %v3604 = vsel %vm1546, %v3572, %v3308
      %v3605 = vsel %vm1546, %v3573, %v3310
      %v3606 = vsel %vm1546, %v3574, %v3312
      %v3607 = vsel %vm1546, %v3575, %v3314
      %v3608 = vsel %vm1546, %v3576, %v3316
      %v3609 = vsel %vm1546, %v3577, %v3318
      %v3610 = vsel %vm1546, %v3578, %v3320
      %v3611 = vsel %vm1546, %v3579, %v3322
      %v3612 = vsel %vm1546, %v3580, %v3324
      %v3613 = vld [vmem:[%s3] sm:$0xff]
      %v3614 = vld [vmem:[%s3 + $0x8] sm:$0xff]
      %v3615 = vld [vmem:[%s3 + $0x10] sm:$0xff]
      %v3616 = vld [vmem:[%s3 + $0x18] sm:$0xff]
      %v3617 = vld [vmem:[%s3 + $0x20] sm:$0xf]
      %v3618 = vld [vmem:[%s4] sm:$0x1]
      %v3620 = vlaneseq
      %v3621 = vshrl.u32 %v3620, 7
      %v3622 = vsub.s32 0, %v3621
      %v3623 = vrot.slane %v3618, %v3622
      %v3626 = vsel %vm1591, %v3581, 0
      %v3629 = vsel %vm1591, %v3582, 0
      %v3632 = vsel %vm1591, %v3583, 0
      %v3635 = vsel %vm1591, %v3584, 0
      %v3638 = vsel %vm1591, %v3585, 0
      %v3641 = vsel %vm1591, %v3586, 0
      %v3644 = vsel %vm1591, %v3587, 0
      %v3647 = vsel %vm1591, %v3588, 0
      %v3650 = vsel %vm1591, %v3589, 0
      %v3653 = vsel %vm1591, %v3590, 0
      %v3656 = vsel %vm1591, %v3591, 0
      %v3659 = vsel %vm1591, %v3592, 0
      %v3662 = vsel %vm1591, %v3593, 0
      %v3665 = vsel %vm1591, %v3594, 0
      %v3668 = vsel %vm1591, %v3595, 0
      %v3671 = vsel %vm1591, %v3596, 0
      %v3674 = vsel %vm1591, %v3597, 0
      %v3677 = vsel %vm1591, %v3598, 0
      %v3680 = vsel %vm1591, %v3599, 0
      %v3683 = vsel %vm1591, %v3600, 0
      %v3686 = vsel %vm1591, %v3601, 0
      %v3689 = vsel %vm1591, %v3602, 0
      %v3692 = vsel %vm1591, %v3603, 0
      %v3695 = vsel %vm1591, %v3604, 0
      %v3698 = vsel %vm1591, %v3605, 0
      %v3701 = vsel %vm1591, %v3606, 0
      %v3704 = vsel %vm1591, %v3607, 0
      %v3707 = vsel %vm1591, %v3608, 0
      %v3710 = vsel %vm1591, %v3609, 0
      %v3713 = vsel %vm1591, %v3610, 0
      %v3716 = vsel %vm1591, %v3611, 0
      %v3719 = vsel %vm1591, %v3612, 0
      %v3722 = vsel %vm1688, %v3617, 0
      %3724 = vmatprep.subr.mxu0 0.0
      %3725 = vmatpush1.msra.mxu0 %v3613
      %3726 = vmatprep.subr.mxu0 0.0
      %3727 = vmatpush1.msra.mxu0 %v3614
      %3728 = vmatprep.subr.mxu0 0.0
      %3729 = vmatpush1.msra.mxu0 %v3615
      %3730 = vmatprep.subr.mxu0 0.0
      %3731 = vmatpush1.msra.mxu0 %v3616
      %3732 = vmatprep.subr.mxu0 0.0
      %3733 = vmatpush1.msra.mxu0 %v3722
      %3734 = vmatprep.subr.mxu0 0.0
      %3735 = vmatpush1.msra.mxu0 0.0
      %3736 = vmatprep.subr.mxu0 0.0
      %3737 = vmatpush1.msra.mxu0 0.0
      %3738 = vmatprep.subr.mxu0 0.0
      %3739 = vmatpush1.msra.mxu0 0.0
      %3740 = vmatprep.subr.mxu0 0.0
      %3741 = vmatpush1.msra.mxu0 0.0
      %3742 = vmatprep.subr.mxu0 0.0
      %3743 = vmatpush1.msra.mxu0 0.0
      %3744 = vmatprep.subr.mxu0 0.0
      %3745 = vmatpush1.msra.mxu0 0.0
      %3746 = vmatprep.subr.mxu0 0.0
      %3747 = vmatpush1.msra.mxu0 0.0
      %3748 = vmatprep.subr.mxu0 0.0
      %3749 = vmatpush1.msra.mxu0 0.0
      %3750 = vmatprep.subr.mxu0 0.0
      %3751 = vmatpush1.msra.mxu0 0.0
      %3752 = vmatprep.subr.mxu0 0.0
      %3753 = vmatpush1.msra.mxu0 0.0
      %3754 = vmatprep.subr.mxu0 0.0
      %3755 = vmatpush1.msra.mxu0 0.0
      %3756 = vmatprep.subr.mxu0 0.0
      %3757 = vmatpush1.msra.mxu0 0.0
      %3758 = vmatprep.subr.mxu0 0.0
      %3759 = vmatpush1.msra.mxu0 0.0
      %3760 = vmatprep.subr.mxu0 0.0
      %3761 = vmatpush1.msra.mxu0 0.0
      %3762 = vmatprep.subr.mxu0 0.0
      %3763 = vmatpush1.msra.mxu0 0.0
      %3764 = vmatprep.subr.mxu0 0.0
      %3765 = vmatpush1.msra.mxu0 0.0
      %3766 = vmatprep.subr.mxu0 0.0
      %3767 = vmatpush1.msra.mxu0 0.0
      %3768 = vmatprep.subr.mxu0 0.0
      %3769 = vmatpush1.msra.mxu0 0.0
      %3770 = vmatprep.subr.mxu0 0.0
      %3771 = vmatpush1.msra.mxu0 0.0
      %3772 = vmatprep.subr.mxu0 0.0
      %3773 = vmatpush1.msra.mxu0 0.0
      %3774 = vmatprep.subr.mxu0 0.0
      %3775 = vmatpush1.msra.mxu0 0.0
      %3776 = vmatprep.subr.mxu0 0.0
      %3777 = vmatpush1.msra.mxu0 0.0
      %3778 = vmatprep.subr.mxu0 0.0
      %3779 = vmatpush1.msra.mxu0 0.0
      %3780 = vmatprep.subr.mxu0 0.0
      %3781 = vmatpush1.msra.mxu0 0.0
      %3782 = vmatprep.subr.mxu0 0.0
      %3783 = vmatpush1.msra.mxu0 0.0
      %3784 = vmatprep.subr.mxu0 0.0
      %3785 = vmatpush1.msra.mxu0 0.0
      %3786 = vmatprep.subr.mxu0 0.0
      %3787 = vmatpush1.msra.mxu0 0.0
      %3788 = vmatprep.mubr.f32.mxu0 0.0
      %3789 = vmatmul.mubr.f32.gmra.mrb[0].mxu0 %v3626
      %v3790 = vpop.f32.mrb[0].mxu0
      %v3791 = vadd.f32 %v3623, %v3790
      %v3792 = vpop.f32.mrb[0].mxu0
      %3793 = vmatprep.mubr.f32.mxu0 0.0
      %3794 = vmatmul.mubr.f32.gmra.mrb[0].mxu0 %v3629
      %v3795 = vpop.f32.mrb[0].mxu0
      %v3796 = vadd.f32 %v3623, %v3795
      %v3797 = vpop.f32.mrb[0].mxu0
      %3798 = vmatprep.mubr.f32.mxu0 0.0
      %3799 = vmatmul.mubr.f32.gmra.mrb[0].mxu0 %v3632
      %v3800 = vpop.f32.mrb[0].mxu0
      %v3801 = vadd.f32 %v3623, %v3800
      %v3802 = vpop.f32.mrb[0].mxu0
      %3803 = vmatprep.mubr.f32.mxu0 0.0
      %3804 = vmatmul.mubr.f32.gmra.mrb[0].mxu0 %v3635
      %v3805 = vpop.f32.mrb[0].mxu0
      %v3806 = vadd.f32 %v3623, %v3805
      %v3807 = vpop.f32.mrb[0].mxu0
      %3808 = vmatprep.mubr.f32.mxu0 0.0
      %3809 = vmatmul.mubr.f32.gmra.mrb[0].mxu0 %v3638
      %v3810 = vpop.f32.mrb[0].mxu0
      %v3811 = vadd.f32 %v3623, %v3810
      %v3812 = vpop.f32.mrb[0].mxu0
      %3813 = vmatprep.mubr.f32.mxu0 0.0
      %3814 = vmatmul.mubr.f32.gmra.mrb[0].mxu0 %v3641
      %v3815 = vpop.f32.mrb[0].mxu0
      %v3816 = vadd.f32 %v3623, %v3815
      %v3817 = vpop.f32.mrb[0].mxu0
      %3818 = vmatprep.mubr.f32.mxu0 0.0
      %3819 = vmatmul.mubr.f32.gmra.mrb[0].mxu0 %v3644
      %v3820 = vpop.f32.mrb[0].mxu0
      %v3821 = vadd.f32 %v3623, %v3820
      %v3822 = vpop.f32.mrb[0].mxu0
      %3823 = vmatprep.mubr.f32.mxu0 0.0
      %3824 = vmatmul.mubr.f32.gmra.mrb[0].mxu0 %v3647
      %v3825 = vpop.f32.mrb[0].mxu0
      %v3826 = vadd.f32 %v3623, %v3825
      %v3827 = vpop.f32.mrb[0].mxu0
      %3828 = vmatprep.mubr.f32.mxu0 0.0
      %3829 = vmatmul.mubr.f32.gmra.mrb[0].mxu0 %v3650
      %v3830 = vpop.f32.mrb[0].mxu0
      %v3831 = vadd.f32 %v3623, %v3830
      %v3832 = vpop.f32.mrb[0].mxu0
      %3833 = vmatprep.mubr.f32.mxu0 0.0
      %3834 = vmatmul.mubr.f32.gmra.mrb[0].mxu0 %v3653
      %v3835 = vpop.f32.mrb[0].mxu0
      %v3836 = vadd.f32 %v3623, %v3835
      %v3837 = vpop.f32.mrb[0].mxu0
      %3838 = vmatprep.mubr.f32.mxu0 0.0
      %3839 = vmatmul.mubr.f32.gmra.mrb[0].mxu0 %v3656
      %v3840 = vpop.f32.mrb[0].mxu0
      %v3841 = vadd.f32 %v3623, %v3840
      %v3842 = vpop.f32.mrb[0].mxu0
      %3843 = vmatprep.mubr.f32.mxu0 0.0
      %3844 = vmatmul.mubr.f32.gmra.mrb[0].mxu0 %v3659
      %v3845 = vpop.f32.mrb[0].mxu0
      %v3846 = vadd.f32 %v3623, %v3845
      %v3847 = vpop.f32.mrb[0].mxu0
      %3848 = vmatprep.mubr.f32.mxu0 0.0
      %3849 = vmatmul.mubr.f32.gmra.mrb[0].mxu0 %v3662
      %v3850 = vpop.f32.mrb[0].mxu0
      %v3851 = vadd.f32 %v3623, %v3850
      %v3852 = vpop.f32.mrb[0].mxu0
      %3853 = vmatprep.mubr.f32.mxu0 0.0
      %3854 = vmatmul.mubr.f32.gmra.mrb[0].mxu0 %v3665
      %v3855 = vpop.f32.mrb[0].mxu0
      %v3856 = vadd.f32 %v3623, %v3855
      %v3857 = vpop.f32.mrb[0].mxu0
      %3858 = vmatprep.mubr.f32.mxu0 0.0
      %3859 = vmatmul.mubr.f32.gmra.mrb[0].mxu0 %v3668
      %v3860 = vpop.f32.mrb[0].mxu0
      %v3861 = vadd.f32 %v3623, %v3860
      %v3862 = vpop.f32.mrb[0].mxu0
      %3863 = vmatprep.mubr.f32.mxu0 0.0
      %3864 = vmatmul.mubr.f32.gmra.mrb[0].mxu0 %v3671
      %v3865 = vpop.f32.mrb[0].mxu0
      %v3866 = vadd.f32 %v3623, %v3865
      %v3867 = vpop.f32.mrb[0].mxu0
      %3868 = vmatprep.mubr.f32.mxu0 0.0
      %3869 = vmatmul.mubr.f32.gmra.mrb[0].mxu0 %v3674
      %v3870 = vpop.f32.mrb[0].mxu0
      %v3871 = vadd.f32 %v3623, %v3870
      %v3872 = vpop.f32.mrb[0].mxu0
      %3873 = vmatprep.mubr.f32.mxu0 0.0
      %3874 = vmatmul.mubr.f32.gmra.mrb[0].mxu0 %v3677
      %v3875 = vpop.f32.mrb[0].mxu0
      %v3876 = vadd.f32 %v3623, %v3875
      %v3877 = vpop.f32.mrb[0].mxu0
      %3878 = vmatprep.mubr.f32.mxu0 0.0
      %3879 = vmatmul.mubr.f32.gmra.mrb[0].mxu0 %v3680
      %v3880 = vpop.f32.mrb[0].mxu0
      %v3881 = vadd.f32 %v3623, %v3880
      %v3882 = vpop.f32.mrb[0].mxu0
      %3883 = vmatprep.mubr.f32.mxu0 0.0
      %3884 = vmatmul.mubr.f32.gmra.mrb[0].mxu0 %v3683
      %v3885 = vpop.f32.mrb[0].mxu0
      %v3886 = vadd.f32 %v3623, %v3885
      %v3887 = vpop.f32.mrb[0].mxu0
      %3888 = vmatprep.mubr.f32.mxu0 0.0
      %3889 = vmatmul.mubr.f32.gmra.mrb[0].mxu0 %v3686
      %v3890 = vpop.f32.mrb[0].mxu0
      %v3891 = vadd.f32 %v3623, %v3890
      %v3892 = vpop.f32.mrb[0].mxu0
      %3893 = vmatprep.mubr.f32.mxu0 0.0
      %3894 = vmatmul.mubr.f32.gmra.mrb[0].mxu0 %v3689
      %v3895 = vpop.f32.mrb[0].mxu0
      %v3896 = vadd.f32 %v3623, %v3895
      %v3897 = vpop.f32.mrb[0].mxu0
      %3898 = vmatprep.mubr.f32.mxu0 0.0
      %3899 = vmatmul.mubr.f32.gmra.mrb[0].mxu0 %v3692
      %v3900 = vpop.f32.mrb[0].mxu0
      %v3901 = vadd.f32 %v3623, %v3900
      %v3902 = vpop.f32.mrb[0].mxu0
      %3903 = vmatprep.mubr.f32.mxu0 0.0
      %3904 = vmatmul.mubr.f32.gmra.mrb[0].mxu0 %v3695
      %v3905 = vpop.f32.mrb[0].mxu0
      %v3906 = vadd.f32 %v3623, %v3905
      %v3907 = vpop.f32.mrb[0].mxu0
      %3908 = vmatprep.mubr.f32.mxu0 0.0
      %3909 = vmatmul.mubr.f32.gmra.mrb[0].mxu0 %v3698
      %v3910 = vpop.f32.mrb[0].mxu0
      %v3911 = vadd.f32 %v3623, %v3910
      %v3912 = vpop.f32.mrb[0].mxu0
      %3913 = vmatprep.mubr.f32.mxu0 0.0
      %3914 = vmatmul.mubr.f32.gmra.mrb[0].mxu0 %v3701
      %v3915 = vpop.f32.mrb[0].mxu0
      %v3916 = vadd.f32 %v3623, %v3915
      %v3917 = vpop.f32.mrb[0].mxu0
      %3918 = vmatprep.mubr.f32.mxu0 0.0
      %3919 = vmatmul.mubr.f32.gmra.mrb[0].mxu0 %v3704
      %v3920 = vpop.f32.mrb[0].mxu0
      %v3921 = vadd.f32 %v3623, %v3920
      %v3922 = vpop.f32.mrb[0].mxu0
      %3923 = vmatprep.mubr.f32.mxu0 0.0
      %3924 = vmatmul.mubr.f32.gmra.mrb[0].mxu0 %v3707
      %v3925 = vpop.f32.mrb[0].mxu0
      %v3926 = vadd.f32 %v3623, %v3925
      %v3927 = vpop.f32.mrb[0].mxu0
      %3928 = vmatprep.mubr.f32.mxu0 0.0
      %3929 = vmatmul.mubr.f32.gmra.mrb[0].mxu0 %v3710
      %v3930 = vpop.f32.mrb[0].mxu0
      %v3931 = vadd.f32 %v3623, %v3930
      %v3932 = vpop.f32.mrb[0].mxu0
      %3933 = vmatprep.mubr.f32.mxu0 0.0
      %3934 = vmatmul.mubr.f32.gmra.mrb[0].mxu0 %v3713
      %v3935 = vpop.f32.mrb[0].mxu0
      %v3936 = vadd.f32 %v3623, %v3935
      %v3937 = vpop.f32.mrb[0].mxu0
      %3938 = vmatprep.mubr.f32.mxu0 0.0
      %3939 = vmatmul.mubr.f32.gmra.mrb[0].mxu0 %v3716
      %v3940 = vpop.f32.mrb[0].mxu0
      %v3941 = vadd.f32 %v3623, %v3940
      %v3942 = vpop.f32.mrb[0].mxu0
      %3943 = vmatprep.mubr.f32.mxu0 0.0
      %3944 = vmatmul.mubr.f32.gmra.mrb[0].mxu0 %v3719
      %v3945 = vpop.f32.mrb[0].mxu0
      %v3946 = vadd.f32 %v3623, %v3945
      %v3947 = vpop.f32.mrb[0].mxu0
      %3948 = vdwg.mxu0
      %v3949 = vsel %vm1315, %v3791, 0.0
      %v3950 = vsel %vm1315, %v3796, 0.0
      %v3951 = vadd.f32 %v3949, %v3950
      %v3952 = vsel %vm1315, %v3801, 0.0
      %v3953 = vadd.f32 %v3951, %v3952
      %v3954 = vsel %vm1315, %v3806, 0.0
      %v3955 = vadd.f32 %v3953, %v3954
      %v3956 = vsel %vm1315, %v3811, 0.0
      %v3957 = vadd.f32 %v3955, %v3956
      %v3958 = vsel %vm1315, %v3816, 0.0
      %v3959 = vadd.f32 %v3957, %v3958
      %v3960 = vsel %vm1315, %v3821, 0.0
      %v3961 = vadd.f32 %v3959, %v3960
      %v3962 = vsel %vm1315, %v3826, 0.0
      %v3963 = vadd.f32 %v3961, %v3962
      %v3964 = vsel %vm1315, %v3831, 0.0
      %v3965 = vadd.f32 %v3963, %v3964
      %v3966 = vsel %vm1315, %v3836, 0.0
      %v3967 = vadd.f32 %v3965, %v3966
      %v3968 = vsel %vm1315, %v3841, 0.0
      %v3969 = vadd.f32 %v3967, %v3968
      %v3970 = vsel %vm1315, %v3846, 0.0
      %v3971 = vadd.f32 %v3969, %v3970
      %v3972 = vsel %vm1315, %v3851, 0.0
      %v3973 = vadd.f32 %v3971, %v3972
      %v3974 = vsel %vm1315, %v3856, 0.0
      %v3975 = vadd.f32 %v3973, %v3974
      %v3976 = vsel %vm1315, %v3861, 0.0
      %v3977 = vadd.f32 %v3975, %v3976
      %v3978 = vsel %vm1315, %v3866, 0.0
      %v3979 = vadd.f32 %v3977, %v3978
      %v3980 = vsel %vm1315, %v3871, 0.0
      %v3981 = vadd.f32 %v3979, %v3980
      %v3982 = vsel %vm1315, %v3876, 0.0
      %v3983 = vadd.f32 %v3981, %v3982
      %v3984 = vsel %vm1315, %v3881, 0.0
      %v3985 = vadd.f32 %v3983, %v3984
      %v3986 = vsel %vm1315, %v3886, 0.0
      %v3987 = vadd.f32 %v3985, %v3986
      %v3988 = vsel %vm1315, %v3891, 0.0
      %v3989 = vadd.f32 %v3987, %v3988
      %v3990 = vsel %vm1315, %v3896, 0.0
      %v3991 = vadd.f32 %v3989, %v3990
      %v3992 = vsel %vm1315, %v3901, 0.0
      %v3993 = vadd.f32 %v3991, %v3992
      %v3994 = vsel %vm1315, %v3906, 0.0
      %v3995 = vadd.f32 %v3993, %v3994
      %v3996 = vsel %vm1315, %v3911, 0.0
      %v3997 = vadd.f32 %v3995, %v3996
      %v3998 = vsel %vm1315, %v3916, 0.0
      %v3999 = vadd.f32 %v3997, %v3998
      %v4000 = vsel %vm1315, %v3921, 0.0
      %v4001 = vadd.f32 %v3999, %v4000
      %v4002 = vsel %vm1315, %v3926, 0.0
      %v4003 = vadd.f32 %v4001, %v4002
      %v4004 = vsel %vm1315, %v3931, 0.0
      %v4005 = vadd.f32 %v4003, %v4004
      %v4006 = vsel %vm1315, %v3936, 0.0
      %v4007 = vadd.f32 %v4005, %v4006
      %v4008 = vsel %vm1315, %v3941, 0.0
      %v4009 = vadd.f32 %v4007, %v4008
      %v4010 = vsel %vm1315, %v3946, 0.0
      %v4011 = vadd.f32 %v4009, %v4010
      %v4012 = vrot.slane %v4011, 4
      %v4013 = vadd.f32 %v4011, %v4012
      %v4014 = vrot.slane %v4013, 2
      %v4015 = vadd.f32 %v4013, %v4014
      %v4016 = vrot.slane %v4015, 1
      %v4017 = vadd.f32 %v4015, %v4016
      %v4018 = vmul.f32 %v3791, %v3791
      %v4019 = vmul.f32 %v3796, %v3796
      %v4020 = vmul.f32 %v3801, %v3801
      %v4021 = vmul.f32 %v3806, %v3806
      %v4022 = vmul.f32 %v3811, %v3811
      %v4023 = vmul.f32 %v3816, %v3816
      %v4024 = vmul.f32 %v3821, %v3821
      %v4025 = vmul.f32 %v3826, %v3826
      %v4026 = vmul.f32 %v3831, %v3831
      %v4027 = vmul.f32 %v3836, %v3836
      %v4028 = vmul.f32 %v3841, %v3841
      %v4029 = vmul.f32 %v3846, %v3846
      %v4030 = vmul.f32 %v3851, %v3851
      %v4031 = vmul.f32 %v3856, %v3856
      %v4032 = vmul.f32 %v3861, %v3861
      %v4033 = vmul.f32 %v3866, %v3866
      %v4034 = vmul.f32 %v3871, %v3871
      %v4035 = vmul.f32 %v3876, %v3876
      %v4036 = vmul.f32 %v3881, %v3881
      %v4037 = vmul.f32 %v3886, %v3886
      %v4038 = vmul.f32 %v3891, %v3891
      %v4039 = vmul.f32 %v3896, %v3896
      %v4040 = vmul.f32 %v3901, %v3901
      %v4041 = vmul.f32 %v3906, %v3906
      %v4042 = vmul.f32 %v3911, %v3911
      %v4043 = vmul.f32 %v3916, %v3916
      %v4044 = vmul.f32 %v3921, %v3921
      %v4045 = vmul.f32 %v3926, %v3926
      %v4046 = vmul.f32 %v3931, %v3931
      %v4047 = vmul.f32 %v3936, %v3936
      %v4048 = vmul.f32 %v3941, %v3941
      %v4049 = vmul.f32 %v3946, %v3946
      %v4050 = vsel %vm1315, %v4018, 0.0
      %v4051 = vsel %vm1315, %v4019, 0.0
      %v4052 = vadd.f32 %v4050, %v4051
      %v4053 = vsel %vm1315, %v4020, 0.0
      %v4054 = vadd.f32 %v4052, %v4053
      %v4055 = vsel %vm1315, %v4021, 0.0
      %v4056 = vadd.f32 %v4054, %v4055
      %v4057 = vsel %vm1315, %v4022, 0.0
      %v4058 = vadd.f32 %v4056, %v4057
      %v4059 = vsel %vm1315, %v4023, 0.0
      %v4060 = vadd.f32 %v4058, %v4059
      %v4061 = vsel %vm1315, %v4024, 0.0
      %v4062 = vadd.f32 %v4060, %v4061
      %v4063 = vsel %vm1315, %v4025, 0.0
      %v4064 = vadd.f32 %v4062, %v4063
      %v4065 = vsel %vm1315, %v4026, 0.0
      %v4066 = vadd.f32 %v4064, %v4065
      %v4067 = vsel %vm1315, %v4027, 0.0
      %v4068 = vadd.f32 %v4066, %v4067
      %v4069 = vsel %vm1315, %v4028, 0.0
      %v4070 = vadd.f32 %v4068, %v4069
      %v4071 = vsel %vm1315, %v4029, 0.0
      %v4072 = vadd.f32 %v4070, %v4071
      %v4073 = vsel %vm1315, %v4030, 0.0
      %v4074 = vadd.f32 %v4072, %v4073
      %v4075 = vsel %vm1315, %v4031, 0.0
      %v4076 = vadd.f32 %v4074, %v4075
      %v4077 = vsel %vm1315, %v4032, 0.0
      %v4078 = vadd.f32 %v4076, %v4077
      %v4079 = vsel %vm1315, %v4033, 0.0
      %v4080 = vadd.f32 %v4078, %v4079
      %v4081 = vsel %vm1315, %v4034, 0.0
      %v4082 = vadd.f32 %v4080, %v4081
      %v4083 = vsel %vm1315, %v4035, 0.0
      %v4084 = vadd.f32 %v4082, %v4083
      %v4085 = vsel %vm1315, %v4036, 0.0
      %v4086 = vadd.f32 %v4084, %v4085
      %v4087 = vsel %vm1315, %v4037, 0.0
      %v4088 = vadd.f32 %v4086, %v4087
      %v4089 = vsel %vm1315, %v4038, 0.0
      %v4090 = vadd.f32 %v4088, %v4089
      %v4091 = vsel %vm1315, %v4039, 0.0
      %v4092 = vadd.f32 %v4090, %v4091
      %v4093 = vsel %vm1315, %v4040, 0.0
      %v4094 = vadd.f32 %v4092, %v4093
      %v4095 = vsel %vm1315, %v4041, 0.0
      %v4096 = vadd.f32 %v4094, %v4095
      %v4097 = vsel %vm1315, %v4042, 0.0
      %v4098 = vadd.f32 %v4096, %v4097
      %v4099 = vsel %vm1315, %v4043, 0.0
      %v4100 = vadd.f32 %v4098, %v4099
      %v4101 = vsel %vm1315, %v4044, 0.0
      %v4102 = vadd.f32 %v4100, %v4101
      %v4103 = vsel %vm1315, %v4045, 0.0
      %v4104 = vadd.f32 %v4102, %v4103
      %v4105 = vsel %vm1315, %v4046, 0.0
      %v4106 = vadd.f32 %v4104, %v4105
      %v4107 = vsel %vm1315, %v4047, 0.0
      %v4108 = vadd.f32 %v4106, %v4107
      %v4109 = vsel %vm1315, %v4048, 0.0
      %v4110 = vadd.f32 %v4108, %v4109
      %v4111 = vsel %vm1315, %v4049, 0.0
      %v4112 = vadd.f32 %v4110, %v4111
      %v4113 = vrot.slane %v4112, 4
      %v4114 = vadd.f32 %v4112, %v4113
      %v4115 = vrot.slane %v4114, 2
      %v4116 = vadd.f32 %v4114, %v4115
      %v4117 = vrot.slane %v4116, 1
      %v4118 = vadd.f32 %v4116, %v4117
      %v4119 = vmul.f32 %v4017, 0.00390625
      %v4120 = vmul.f32 %v4118, 0.00390625
      %v4121 = vmul.f32 %v4119, %v4119
      %v4122 = vsub.f32 %v4120, %v4121
      %v4123 = vmax.f32 %v4122, 0.0
      %v4124 = vsub.f32 %v3791, %v4119
      %v4125 = vsub.f32 %v3796, %v4119
      %v4126 = vsub.f32 %v3801, %v4119
      %v4127 = vsub.f32 %v3806, %v4119
      %v4128 = vsub.f32 %v3811, %v4119
      %v4129 = vsub.f32 %v3816, %v4119
      %v4130 = vsub.f32 %v3821, %v4119
      %v4131 = vsub.f32 %v3826, %v4119
      %v4132 = vsub.f32 %v3831, %v4119
      %v4133 = vsub.f32 %v3836, %v4119
      %v4134 = vsub.f32 %v3841, %v4119
      %v4135 = vsub.f32 %v3846, %v4119
      %v4136 = vsub.f32 %v3851, %v4119
      %v4137 = vsub.f32 %v3856, %v4119
      %v4138 = vsub.f32 %v3861, %v4119
      %v4139 = vsub.f32 %v3866, %v4119
      %v4140 = vsub.f32 %v3871, %v4119
      %v4141 = vsub.f32 %v3876, %v4119
      %v4142 = vsub.f32 %v3881, %v4119
      %v4143 = vsub.f32 %v3886, %v4119
      %v4144 = vsub.f32 %v3891, %v4119
      %v4145 = vsub.f32 %v3896, %v4119
      %v4146 = vsub.f32 %v3901, %v4119
      %v4147 = vsub.f32 %v3906, %v4119
      %v4148 = vsub.f32 %v3911, %v4119
      %v4149 = vsub.f32 %v3916, %v4119
      %v4150 = vsub.f32 %v3921, %v4119
      %v4151 = vsub.f32 %v3926, %v4119
      %v4152 = vsub.f32 %v3931, %v4119
      %v4153 = vsub.f32 %v3936, %v4119
      %v4154 = vsub.f32 %v3941, %v4119
      %v4155 = vsub.f32 %v3946, %v4119
      %v4156 = vadd.f32 %v4123, 1e-05
      %v4157 = vrsqrt.pop %v4156
      %v4158 = vmul.f32 %v4124, %v4157
      %v4159 = vmul.f32 %v4125, %v4157
      %v4160 = vmul.f32 %v4126, %v4157
      %v4161 = vmul.f32 %v4127, %v4157
      %v4162 = vmul.f32 %v4128, %v4157
      %v4163 = vmul.f32 %v4129, %v4157
      %v4164 = vmul.f32 %v4130, %v4157
      %v4165 = vmul.f32 %v4131, %v4157
      %v4166 = vmul.f32 %v4132, %v4157
      %v4167 = vmul.f32 %v4133, %v4157
      %v4168 = vmul.f32 %v4134, %v4157
      %v4169 = vmul.f32 %v4135, %v4157
      %v4170 = vmul.f32 %v4136, %v4157
      %v4171 = vmul.f32 %v4137, %v4157
      %v4172 = vmul.f32 %v4138, %v4157
      %v4173 = vmul.f32 %v4139, %v4157
      %v4174 = vmul.f32 %v4140, %v4157
      %v4175 = vmul.f32 %v4141, %v4157
      %v4176 = vmul.f32 %v4142, %v4157
      %v4177 = vmul.f32 %v4143, %v4157
      %v4178 = vmul.f32 %v4144, %v4157
      %v4179 = vmul.f32 %v4145, %v4157
      %v4180 = vmul.f32 %v4146, %v4157
      %v4181 = vmul.f32 %v4147, %v4157
      %v4182 = vmul.f32 %v4148, %v4157
      %v4183 = vmul.f32 %v4149, %v4157
      %v4184 = vmul.f32 %v4150, %v4157
      %v4185 = vmul.f32 %v4151, %v4157
      %v4186 = vmul.f32 %v4152, %v4157
      %v4187 = vmul.f32 %v4153, %v4157
      %v4188 = vmul.f32 %v4154, %v4157
      %v4189 = vmul.f32 %v4155, %v4157
      %v4190 = vadd.f32 %v335, %v4158
      %v4191 = vadd.f32 %v337, %v4159
      %v4192 = vadd.f32 %v340, %v4160
      %v4193 = vadd.f32 %v342, %v4161
      %v4194 = vadd.f32 %v345, %v4162
      %v4195 = vadd.f32 %v347, %v4163
      %v4196 = vadd.f32 %v350, %v4164
      %v4197 = vadd.f32 %v352, %v4165
      %v4198 = vadd.f32 %v355, %v4166
      %v4199 = vadd.f32 %v357, %v4167
      %v4200 = vadd.f32 %v360, %v4168
      %v4201 = vadd.f32 %v362, %v4169
      %v4202 = vadd.f32 %v365, %v4170
      %v4203 = vadd.f32 %v367, %v4171
      %v4204 = vadd.f32 %v370, %v4172
      %v4205 = vadd.f32 %v372, %v4173
      %v4206 = vadd.f32 %v375, %v4174
      %v4207 = vadd.f32 %v377, %v4175
      %v4208 = vadd.f32 %v380, %v4176
      %v4209 = vadd.f32 %v382, %v4177
      %v4210 = vadd.f32 %v385, %v4178
      %v4211 = vadd.f32 %v387, %v4179
      %v4212 = vadd.f32 %v390, %v4180
      %v4213 = vadd.f32 %v392, %v4181
      %v4214 = vadd.f32 %v395, %v4182
      %v4215 = vadd.f32 %v397, %v4183
      %v4216 = vadd.f32 %v400, %v4184
      %v4217 = vadd.f32 %v402, %v4185
      %v4218 = vadd.f32 %v405, %v4186
      %v4219 = vadd.f32 %v407, %v4187
      %v4220 = vadd.f32 %v494, %v4188
      %v4221 = vadd.f32 %v496, %v4189
      %4222 = vst.msk [vmem:[%s224] sm:$0xff] %vm1315, %v4190
      %4223 = vst.msk [vmem:[%s224 + $0x8] sm:$0xff] %vm1315, %v4191
      %4224 = vst.msk [vmem:[%s224 + $0x10] sm:$0xff] %vm1315, %v4192
      %4225 = vst.msk [vmem:[%s224 + $0x18] sm:$0xff] %vm1315, %v4193
      %4226 = vst.msk [vmem:[%s224 + $0x20] sm:$0xff] %vm1315, %v4194
      %4227 = vst.msk [vmem:[%s224 + $0x28] sm:$0xff] %vm1315, %v4195
      %4228 = vst.msk [vmem:[%s224 + $0x30] sm:$0xff] %vm1315, %v4196
      %4229 = vst.msk [vmem:[%s224 + $0x38] sm:$0xff] %vm1315, %v4197
      %4230 = vst.msk [vmem:[%s224 + $0x40] sm:$0xff] %vm1315, %v4198
      %4231 = vst.msk [vmem:[%s224 + $0x48] sm:$0xff] %vm1315, %v4199
      %4232 = vst.msk [vmem:[%s224 + $0x50] sm:$0xff] %vm1315, %v4200
      %4233 = vst.msk [vmem:[%s224 + $0x58] sm:$0xff] %vm1315, %v4201
      %4234 = vst.msk [vmem:[%s224 + $0x60] sm:$0xff] %vm1315, %v4202
      %4235 = vst.msk [vmem:[%s224 + $0x68] sm:$0xff] %vm1315, %v4203
      %4236 = vst.msk [vmem:[%s224 + $0x70] sm:$0xff] %vm1315, %v4204
      %4237 = vst.msk [vmem:[%s224 + $0x78] sm:$0xff] %vm1315, %v4205
      %4238 = vst.msk [vmem:[%s224 + $0x80] sm:$0xff] %vm1315, %v4206
      %4239 = vst.msk [vmem:[%s224 + $0x88] sm:$0xff] %vm1315, %v4207
      %4240 = vst.msk [vmem:[%s224 + $0x90] sm:$0xff] %vm1315, %v4208
      %4241 = vst.msk [vmem:[%s224 + $0x98] sm:$0xff] %vm1315, %v4209
      %4242 = vst.msk [vmem:[%s224 + $0xa0] sm:$0xff] %vm1315, %v4210
      %4243 = vst.msk [vmem:[%s224 + $0xa8] sm:$0xff] %vm1315, %v4211
      %4244 = vst.msk [vmem:[%s224 + $0xb0] sm:$0xff] %vm1315, %v4212
      %4245 = vst.msk [vmem:[%s224 + $0xb8] sm:$0xff] %vm1315, %v4213
      %4246 = vst.msk [vmem:[%s224 + $0xc0] sm:$0xff] %vm1315, %v4214
      %4247 = vst.msk [vmem:[%s224 + $0xc8] sm:$0xff] %vm1315, %v4215
      %4248 = vst.msk [vmem:[%s224 + $0xd0] sm:$0xff] %vm1315, %v4216
      %4249 = vst.msk [vmem:[%s224 + $0xd8] sm:$0xff] %vm1315, %v4217
      %4250 = vst.msk [vmem:[%s224 + $0xe0] sm:$0xff] %vm1315, %v4218
      %4251 = vst.msk [vmem:[%s224 + $0xe8] sm:$0xff] %vm1315, %v4219
      %4252 = vst.msk [vmem:[%s224 + $0xf0] sm:$0xff] %vm1315, %v4220
      %4253 = vst.msk [vmem:[%s224 + $0xf8] sm:$0xff] %vm1315, %v4221
      %p4254 = scmp.lt.s32.totalorder %s16, 1
      %s4255 = scalar_select %p4254, %s16, 1
      %s4256 = smul.addr %s4255, 32
      %s4257 = smul.addr %s4256, 8
      %s4258 = scalar_lea.vmem %s5, %s4257
      // Predicated region
      $region41: #{tpu_custom_call.1} parent=39 // pred_check
        %p4259 = pneg %p144
      $region42: #{tpu_custom_call.1} parent=39 // pred_check_branch
        %4261 = sbr.rel (%p4259) target = $region44
      $region43: #{tpu_custom_call.1} parent=39 // pred_region
        _
      $region44: #{tpu_custom_call.1} parent=39 // pred_fallthru
        _
    $region40: #{tpu_custom_call.1} parent=5 // pred_fallthru
      _
    %p4262 = scmp.le.s32.totalorder 2, %s11
    // Predicated region
    $region45: #{tpu_custom_call.1} parent=5 // pred_check
      %p4263 = pneg %p4262
    $region46: #{tpu_custom_call.1} parent=5 // pred_check_branch
      %4265 = sbr.rel (%p4263) target = $region48
    $region47: #{tpu_custom_call.1} parent=5 // pred_region
      %s4266 = ssub.s32 %s11, 2
      // Predicated region
      $region49: #{tpu_custom_call.1} parent=47 // pred_check
        %p4267 = pneg %p150
      $region50: #{tpu_custom_call.1} parent=47 // pred_check_branch
        %4269 = sbr.rel (%p4267) target = $region52
      $region51: #{tpu_custom_call.1} parent=47 // pred_region
        %p4270 = scmp.lt.s32.totalorder %s17, 1
        %s4271 = scalar_select %p4270, %s17, 1
        %s4272 = smul.addr %s4271, 32
        %s4273 = smul.addr %s4272, 8
        %s4274 = scalar_lea.vmem %s5, %s4273
      $region52: #{tpu_custom_call.1} parent=47 // pred_fallthru
        _
    $region48: #{tpu_custom_call.1} parent=5 // pred_fallthru
      _
  $region6: #{tpu_custom_call.1} parent=0 // loop_footer
    %s15 = sadd.s32 1, %s11
  $region7: #{tpu_custom_call.1} parent=0 // loop_footer_branch
    %10 = sbr.rel target = $region3
  $region8: #{tpu_custom_call.1} parent=0 // loop_exit
    _

</llo_original>
